<compile_context>
chip_gen: v7x
topology: tpu7x:2x2x1
jax: 0.10.0
libtpu: 0.0.40
codegen_flags: <defaults>
</compile_context>

<pallas_src>
import functools

import jax
import jax.numpy as jnp
from jax.experimental import pallas as pl
from jax.experimental.pallas import tpu as pltpu


def _round_up(x, m):
    return ((x + m - 1) // m) * m


def _dot(a, b, dot_dtype):
    # Optional bf16 operands (native MXU path on v5e/v6e/v7x), f32 accumulation.
    if dot_dtype is not None:
        a = a.astype(dot_dtype)
        b = b.astype(dot_dtype)
    return jnp.dot(a, b, preferred_element_type=jnp.float32)


def _vmem_limit(working_bytes):
    # Explicit scoped-VMEM budget: generous for double-buffered blocks +
    # weights + intermediates, but always inside v7x's 64 MiB physical VMEM
    # (the smallest across v5e / v6e / v7x).
    return int(min(48 * 1024 * 1024, max(32 * 1024 * 1024, 2 * working_bytes)))


# ---------------------------------------------------------------------------
# Kernel 1: fused edge apply (edge_fc, edge_fc_lang) + attention heads
# ---------------------------------------------------------------------------
def _edge_fused_kernel(sf_ref, hsrc_e_ref, hdst_e_ref, hsrc_l_ref, hdst_l_ref,
                       w1s_ref, w2e_ref, b2e_ref,
                       w2l_ref, b2l_ref,
                       w1a_ref, b1a_ref, w2a_ref, b2a_ref,
                       w1al_ref, b1al_ref, w2al_ref, b2al_ref,
                       ef_ref, alog_ref, allog_ref, *, K, dot_dtype):
    bd, He = hdst_e_ref.shape
    Hl = hdst_l_ref.shape[1]
    bm = bd * K

    # edge_fc first layer:  e_in @ W1 + b1
    #   = n_f[src] @ W1[:Fn]  +  s_f @ W1[Fn:Fn+Fs]  +  n_f[dst] @ W1[Fn+Fs:] + b1
    # src / dst terms arrive as precomputed per-node tables (bias folded into
    # the dst table); only the spatial segment needs an MXU matmul here.  The
    # complete dst-major ordering makes the tables broadcast over (bd, K, He).
    h_sp = _dot(sf_ref[...], w1s_ref[...], dot_dtype)                  # (bm,He)
    h3 = (h_sp.reshape(bd, K, He)
          + hsrc_e_ref[...][None, :, :]        # src table, same for every dst
          + hdst_e_ref[...][:, None, :])       # dst table (+ b1), one row / dst
    h = jnp.maximum(h3, 0.0).reshape(bm, He)
    e_f = _dot(h, w2e_ref[...], dot_dtype) + b2e_ref[...]
    ef_ref[...] = e_f.astype(ef_ref.dtype)

    # attn_fc head on e_f, kept in VMEM.  Second layer is Hx1: VPU multiply +
    # lane reduce instead of wasting an MXU push.
    ha = jnp.maximum(_dot(e_f, w1a_ref[...], dot_dtype) + b1a_ref[...], 0.0)
    alog = jnp.sum(ha * w2a_ref[...], axis=-1, keepdims=True) + b2a_ref[...]
    alog_ref[...] = alog.astype(alog_ref.dtype)

    # edge_fc_lang -> attn_fc_lang.  The lang first layer has no spatial part,
    # so it is entirely the two precomputed tables; e_f_lang is only consumed
    # by the attention head and never goes to HBM at all.
    hl3 = hsrc_l_ref[...][None, :, :] + hdst_l_ref[...][:, None, :]
    hl = jnp.maximum(hl3, 0.0).reshape(bm, Hl)
    e_fl = _dot(hl, w2l_ref[...], dot_dtype) + b2l_ref[...]
    hal = jnp.maximum(_dot(e_fl, w1al_ref[...], dot_dtype) + b1al_ref[...], 0.0)
    allog = jnp.sum(hal * w2al_ref[...], axis=-1, keepdims=True) + b2al_ref[...]
    allog_ref[...] = allog.astype(allog_ref.dtype)


def edge_forward(spatial_feat, h_src_e, h_dst_e, h_src_l, h_dst_l,
                 w1e_sp, w2e, b2e, w2l, b2l, p_attn, p_attn_lang,
                 *, K, block_dst, dot_dtype=None, ef_dtype=jnp.float32):
    """Fused H_H_EdgeApplyModule + E_AttentionModule1 over dst-node tiles."""
    N = h_dst_e.shape[0]
    Fs = spatial_feat.shape[1]
    He = h_src_e.shape[1]
    Hl = h_src_l.shape[1]
    Fn = w2e.shape[1]
    Fw = w2l.shape[1]
    w1a, b1a, w2a, b2a = p_attn
    w1al, b1al, w2al, b2al = p_attn_lang
    Ha, Hal = w1a.shape[1], w1al.shape[1]

    # dst-node tile: bd nodes == bd*K edge rows per step.
    bd = max(8, _round_up(block_dst, 8))
    bd = min(bd, _round_up(N, 8))
    bm = bd * K
    N_pad = _round_up(N, bd)
    E = N * K
    E_pad = N_pad * K
    if N_pad != N:
        spatial_feat = jnp.pad(spatial_feat, ((0, E_pad - E), (0, 0)))
        h_dst_e = jnp.pad(h_dst_e, ((0, N_pad - N), (0, 0)))
        h_dst_l = jnp.pad(h_dst_l, ((0, N_pad - N), (0, 0)))

    # Hx1 attention output layers as lane rows / (1,1) scalars.
    w2a_row = w2a.reshape(1, Ha)
    w2al_row = w2al.reshape(1, Hal)
    b2a2 = b2a.reshape(1, 1)
    b2al2 = b2al.reshape(1, 1)

    working = (2 * bm * (Fs + Fn + 2) * 4      # streamed blocks (dbl-buffered)
               + 2 * bm * He * 4)              # first-layer intermediate
    full = lambda shape: pl.BlockSpec(shape, lambda i: (0, 0))
    kernel = functools.partial(_edge_fused_kernel, K=K, dot_dtype=dot_dtype)
    e_f, a_log, al_log = pl.pallas_call(
        kernel,
        out_shape=(jax.ShapeDtypeStruct((E_pad, Fn), ef_dtype),
                   jax.ShapeDtypeStruct((E_pad, 1), jnp.float32),
                   jax.ShapeDtypeStruct((E_pad, 1), jnp.float32)),
        grid_spec=pltpu.PrefetchScalarGridSpec(
            num_scalar_prefetch=0,
            grid=(N_pad // bd,),
            in_specs=[
                pl.BlockSpec((bm, Fs), lambda i: (i, 0)),   # spatial features
                full((K, He)),                              # src table (shared)
                pl.BlockSpec((bd, He), lambda i: (i, 0)),   # dst table rows
                full((K, Hl)),                              # lang src table
                pl.BlockSpec((bd, Hl), lambda i: (i, 0)),   # lang dst table
                full((Fs, He)), full((He, Fn)), full((1, Fn)),
                full((Hl, Fw)), full((1, Fw)),
                full((Fn, Ha)), full((1, Ha)), full((1, Ha)), full((1, 1)),
                full((Fw, Hal)), full((1, Hal)), full((1, Hal)), full((1, 1)),
            ],
            out_specs=(
                pl.BlockSpec((bm, Fn), lambda i: (i, 0)),
                pl.BlockSpec((bm, 1), lambda i: (i, 0)),
                pl.BlockSpec((bm, 1), lambda i: (i, 0)),
            ),
        ),
        compiler_params=pltpu.CompilerParams(
            dimension_semantics=("parallel",),
            vmem_limit_bytes=_vmem_limit(working)),
    )(spatial_feat, h_src_e, h_dst_e, h_src_l, h_dst_l,
      w1e_sp, w2e, b2e, w2l, b2l,
      w1a, b1a, w2a_row, b2a2, w1al, b1al, w2al_row, b2al2)
    if E_pad != E:
        e_f, a_log, al_log = e_f[:E], a_log[:E], al_log[:E]
    return e_f, a_log, al_log


# ---------------------------------------------------------------------------
# Kernel 2: softmax-attention reduce + fused H_NodeApplyModule, tiled over dst
# ---------------------------------------------------------------------------
def _reduce_node_kernel(af_ref, alf_ref, ef_ref, nbrf_ref, nbrw_ref,
                        selff_ref, selfw_ref,
                        w1na_ref, w1nb_ref, b1n_ref, w2n_ref, b2n_ref,
                        w1la_ref, w1lb_ref, b1l_ref, w2l_ref, b2l_ref,
                        onf_ref, onl_ref, *, K, dot_dtype):
    bn = selff_ref.shape[0]
    Fn = nbrf_ref.shape[1]

    # Softmax over each dst node's K incoming edges.  Logits stay in the flat
    # dst-major (bn*K, 1) layout: after a cheap sublane-split reshape the group
    # max / sum are cross-sublane (XLU) reduces, and the resulting weights line
    # up with the e_f rows without any lane<->sublane relayout or per-step mask
    # construction.  Normalization is deferred to one EUP reciprocal per node.
    af = af_ref[...].reshape(bn, K, 1)
    p = jnp.exp(af - jnp.max(af, axis=1, keepdims=True))            # (bn,K,1)
    inv_den = pl.reciprocal(jnp.sum(p, axis=1), approx=True)        # (bn,1)

    alf = alf_ref[...].reshape(bn, K, 1)
    pw = jnp.exp(alf - jnp.max(alf, axis=1, keepdims=True))         # (bn,K,1)
    inv_denw = pl.reciprocal(jnp.sum(pw, axis=1), approx=True)      # (bn,1)

    # z_f = sum_k alpha * (nei_n_f + e_f): complete graph => mailbox row k of
    # every dst is n_f[k], so the shared (K, Fn) table broadcasts over dst.
    # Attention weights stay f32 regardless of dot_dtype (post-exp values are
    # precision-sensitive); weighted sum is VPU mul + XLU group-of-K reduce.
    ef3 = ef_ref[...].astype(jnp.float32).reshape(bn, K, Fn)
    z_f = jnp.sum(p * (ef3 + nbrf_ref[...][None, :, :]), axis=1) * inv_den
    z_fl = jnp.sum(pw * nbrw_ref[...][None, :, :], axis=1) * inv_denw

    # H_NodeApplyModule: Linear-ReLU-Linear on concat([n_f, z_f]); the concat is
    # realized as a split matmul  x @ W1 = n_f @ W1[:Fn] + z_f @ W1[Fn:].
    h = jnp.maximum(_dot(selff_ref[...], w1na_ref[...], dot_dtype)
                    + _dot(z_f, w1nb_ref[...], dot_dtype) + b1n_ref[...], 0.0)
    onf_ref[...] = (_dot(h, w2n_ref[...], dot_dtype)
                    + b2n_ref[...]).astype(onf_ref.dtype)

    hl = jnp.maximum(_dot(selfw_ref[...], w1la_ref[...], dot_dtype)
                     + _dot(z_fl, w1lb_ref[...], dot_dtype) + b1l_ref[...], 0.0)
    onl_ref[...] = (_dot(hl, w2l_ref[...], dot_dtype)
                    + b2l_ref[...]).astype(onl_ref.dtype)


def reduce_node_forward(a_flat, al_flat, e_f, n_f, w2v, p_node, p_node_lang,
                        *, N, K, block_nodes=32, dot_dtype=None):
    """update_all (softmax reduce) + H_NodeApplyModule, tiled over dst nodes."""
    if n_f.shape[0] != K:
        raise ValueError("complete-graph convention requires K == num nodes")
    Fn, Fw = n_f.shape[1], w2v.shape[1]
    w1n, b1n, w2n, b2n = p_node
    w1nl, b1nl, w2nl, b2nl = p_node_lang
    Hn, Hl = w1n.shape[1], w1nl.shape[1]

    bn = max(8, _round_up(block_nodes, 8))
    bn = min(bn, _round_up(N, 8))
    # v7x VMEM guard: the (bn*K, Fn) e_f block is the big one (double-buffered);
    # clamp bn so it stays well inside the 64 MiB physical / 32 MiB scoped VMEM.
    itemsize = jnp.dtype(e_f.dtype).itemsize
    budget = 24 * 1024 * 1024
    while bn > 8 and 2 * bn * K * Fn * itemsize > budget:
        bn = max(8, _round_up(bn // 2, 8))

    N_pad = _round_up(N, bn)
    n_f_pad, w2v_pad = n_f, w2v
    if N_pad != N:
        pad_e = (N_pad - N) * K
        a_flat = jnp.pad(a_flat, ((0, pad_e), (0, 0)))
        al_flat = jnp.pad(al_flat, ((0, pad_e), (0, 0)))
        e_f = jnp.pad(e_f, ((0, pad_e), (0, 0)))
        n_f_pad = jnp.pad(n_f, ((0, N_pad - N), (0, 0)))
        w2v_pad = jnp.pad(w2v, ((0, N_pad - N), (0, 0)))

    # Split node W1 rows (avoids any in-kernel concat).
    w1n_a, w1n_b = w1n[:Fn], w1n[Fn:]
    w1l_a, w1l_b = w1nl[:Fw], w1nl[Fw:]

    working = (2 * bn * K * Fn * itemsize       # e_f blocks (double-buffered)
               + 2 * bn * K * 2 * 4             # logit blocks
               + 4 * bn * (Fn + Fw) * 4)        # self blocks + outputs
    full = lambda shape: pl.BlockSpec(shape, lambda i: (0, 0))
    kernel = functools.partial(_reduce_node_kernel, K=K, dot_dtype=dot_dtype)
    new_n_f, new_n_fl = pl.pallas_call(
        kernel,
        out_shape=(jax.ShapeDtypeStruct((N_pad, Fn), jnp.float32),
                   jax.ShapeDtypeStruct((N_pad, Fw), jnp.float32)),
        grid_spec=pltpu.PrefetchScalarGridSpec(
            num_scalar_prefetch=0,
            grid=(N_pad // bn,),
            in_specs=[
                pl.BlockSpec((bn * K, 1), lambda i: (i, 0)),    # a_feat (flat)
                pl.BlockSpec((bn * K, 1), lambda i: (i, 0)),    # a_feat_lang
                pl.BlockSpec((bn * K, Fn), lambda i: (i, 0)),   # dst-major e_f
                full((K, Fn)),                                  # shared n_f table
                full((K, Fw)),                                  # shared w2v table
                pl.BlockSpec((bn, Fn), lambda i: (i, 0)),       # node's own n_f
                pl.BlockSpec((bn, Fw), lambda i: (i, 0)),       # node's own w2v
                full((Fn, Hn)), full((Fn, Hn)), full((1, Hn)),
                full((Hn, Fn)), full((1, Fn)),
                full((Fw, Hl)), full((Fw, Hl)), full((1, Hl)),
                full((Hl, Fw)), full((1, Fw)),
            ],
            out_specs=(
                pl.BlockSpec((bn, Fn), lambda i: (i, 0)),
                pl.BlockSpec((bn, Fw), lambda i: (i, 0)),
            ),
        ),
        compiler_params=pltpu.CompilerParams(
            dimension_semantics=("parallel",),
            vmem_limit_bytes=_vmem_limit(working)),
    )(a_flat, al_flat, e_f, n_f, w2v, n_f_pad, w2v_pad,
      w1n_a, w1n_b, b1n, w2n, b2n, w1l_a, w1l_b, b1nl, w2nl, b2nl)
    if N_pad != N:
        new_n_f, new_n_fl = new_n_f[:N], new_n_fl[:N]
    return new_n_f, new_n_fl


# ---------------------------------------------------------------------------
# GRNN forward (glue: tiny per-node precompute matmuls in plain JAX)
# ---------------------------------------------------------------------------
def grnn_forward(params, feat, word2vec, spatial_feat, src, dst, N, K,
                 *, edge_block_dst=None, reduce_block_nodes=32, dot_dtype=None):
    # Kernels assume the canonical dst-major complete-graph ordering
    # (edge e = dst*K + src, K == N incoming edges per node) -> no gathers.
    del src, dst
    n_f, w2v = feat, word2vec
    Fn, Fw = n_f.shape[1], w2v.shape[1]
    Fs = spatial_feat.shape[1]

    w1e, b1e, w2e, b2e = params["edge_fc"]
    w1l, b1l, w2l, b2l = params["edge_fc_lang"]

    # Hoisted first-layer products: e_in @ W1e only needs per-node tables for
    # the src / dst segments (2N rows instead of E = N*K), so the edge kernel
    # streams just spatial features.  First-layer biases folded into dst table.
    h_src_e = n_f @ w1e[:Fn]
    h_dst_e = n_f @ w1e[Fn + Fs:] + b1e
    w1e_sp = w1e[Fn:Fn + Fs]
    h_src_l = w2v @ w1l[:Fw]
    h_dst_l = w2v @ w1l[Fw:] + b1l

    # bf16 MXU operands => also store the e_f intermediate (dominant HBM store
    # of kernel 1 / load of kernel 2) in bf16.
    ef_dtype = dot_dtype if dot_dtype is not None else jnp.float32
    if edge_block_dst is None:
        edge_block_dst = max(1, 512 // max(K, 1))   # ~512 edge rows per step

    # --- H_H_EdgeApplyModule + E_AttentionModule1 (single fused edge kernel) ---
    e_f, a_log, al_log = edge_forward(
        spatial_feat, h_src_e, h_dst_e, h_src_l, h_dst_l,
        w1e_sp, w2e, b2e, w2l, b2l,
        params["attn_fc"], params["attn_fc_lang"],
        K=K, block_dst=edge_block_dst, dot_dtype=dot_dtype, ef_dtype=ef_dtype)

    # --- update_all reduce + H_NodeApplyModule (single fused node kernel) ---
    new_n_f, new_n_f_lang = reduce_node_forward(
        a_log, al_log, e_f, n_f, w2v,
        params["node_fc"], params["node_fc_lang"],
        N=N, K=K, block_nodes=reduce_block_nodes, dot_dtype=dot_dtype)
    return new_n_f, new_n_f_lang


# ---------------------------------------------------------------------------
# Pure-JAX reference (correctness check)
# ---------------------------------------------------------------------------
def _mlp2_ref(x, p):
    w1, b1, w2, b2 = p
    return jnp.maximum(x @ w1 + b1, 0.0) @ w2 + b2


def grnn_ref(params, feat, word2vec, spatial_feat, src, dst, N, K):
    n_f, w2v = feat, word2vec
    e_in = jnp.concatenate([n_f[src], spatial_feat, n_f[dst]], axis=1)
    e_in_lang = jnp.concatenate([w2v[src], w2v[dst]], axis=1)
    e_f = _mlp2_ref(e_in, params["edge_fc"])
    e_f_lang = _mlp2_ref(e_in_lang, params["edge_fc_lang"])
    a_feat = _mlp2_ref(e_f, params["attn_fc"])
    a_feat_lang = _mlp2_ref(e_f_lang, params["attn_fc_lang"])
    Fn, Fw = n_f.shape[1], w2v.shape[1]
    alpha = jax.nn.softmax(a_feat.reshape(N, K, 1), axis=1)
    alpha_l = jax.nn.softmax(a_feat_lang.reshape(N, K, 1), axis=1)
    z_raw = n_f[src].reshape(N, K, Fn) + e_f.reshape(N, K, Fn)
    z_f = jnp.sum(alpha * z_raw, axis=1)
    z_f_lang = jnp.sum(alpha_l * w2v[src].reshape(N, K, Fw), axis=1)
    new_n_f = _mlp2_ref(jnp.concatenate([n_f, z_f], axis=1), params["node_fc"])
    new_n_f_lang = _mlp2_ref(jnp.concatenate([w2v, z_f_lang], axis=1),
                             params["node_fc_lang"])
    return new_n_f, new_n_f_lang


# ---------------------------------------------------------------------------
# Deterministic parameter init (PyTorch nn.Linear style uniform)
# ---------------------------------------------------------------------------
def _init_linear(key, din, dout):
    kw, kb = jax.random.split(key)
    bound = 1.0 / (din ** 0.5)
    w = jax.random.uniform(kw, (din, dout), jnp.float32, -bound, bound)
    b = jax.random.uniform(kb, (1, dout), jnp.float32, -bound, bound)
    return w, b


def _init_mlp2(key, dims):
    k1, k2 = jax.random.split(key)
    w1, b1 = _init_linear(k1, dims[0], dims[1])
    w2, b2 = _init_linear(k2, dims[1], dims[2])
    return (w1, b1, w2, b2)


if __name__ == "__main__":
    key = jax.random.PRNGKey(0)

    # Small synthetic graph: N nodes, complete digraph with self-loops.
    N = 16                     # nodes
    K = N                      # incoming edges per node
    E = N * K                  # edges
    F_N = 64                   # node feature dim (n_f) == edge_fc output dim
    F_W = 32                   # word2vec dim
    F_S = 16                   # spatial feature dim (s_f)

    # dst-major edge ordering: edge e = dst*N + src
    dst = jnp.repeat(jnp.arange(N), N)
    src = jnp.tile(jnp.arange(N), N)

    k_feat, k_w2v, k_sp, k_p = jax.random.split(key, 4)
    feat = jax.random.normal(k_feat, (N, F_N), jnp.float32)
    word2vec = jax.random.normal(k_w2v, (N, F_W), jnp.float32)
    spatial_feat = jax.random.normal(k_sp, (E, F_S), jnp.float32)

    pk = jax.random.split(k_p, 6)
    params = {
        # CONFIG.G_E_L_S  : [2*F_N + F_S, 128, F_N]
        "edge_fc":      _init_mlp2(pk[0], (2 * F_N + F_S, 128, F_N)),
        # CONFIG.G_E_L_S2 : [2*F_W, 64, F_W]
        "edge_fc_lang": _init_mlp2(pk[1], (2 * F_W, 64, F_W)),
        # CONFIG.G_A_L_S  : [F_N, 32, 1]
        "attn_fc":      _init_mlp2(pk[2], (F_N, 32, 1)),
        # CONFIG.G_A_L_S2 : [F_W, 32, 1]
        "attn_fc_lang": _init_mlp2(pk[3], (F_W, 32, 1)),
        # CONFIG.G_N_L_S  : [2*F_N, 128, F_N]
        "node_fc":      _init_mlp2(pk[4], (2 * F_N, 128, F_N)),
        # CONFIG.G_N_L_S2 : [2*F_W, 64, F_W]
        "node_fc_lang": _init_mlp2(pk[5], (2 * F_W, 64, F_W)),
    }

    # edge_block_dst=8 / reduce_block_nodes=8 keep both grids at 2 blocks for
    # this tiny N=16 demo so both v7x TensorCores get work; real graphs should
    # use the larger defaults (~512 edge rows per step, 32 dst nodes per step).
    common = dict(N=N, K=K, edge_block_dst=8, reduce_block_nodes=8)

    # Exact-path check (f32 MXU operands).
    fwd_f32 = jax.jit(functools.partial(grnn_forward, dot_dtype=None, **common))
    new_n_f, new_n_f_lang = fwd_f32(params, feat, word2vec, spatial_feat, src, dst)
    jax.block_until_ready((new_n_f, new_n_f_lang))

    ref_n_f, ref_n_f_lang = grnn_ref(params, feat, word2vec, spatial_feat,
                                     src, dst, N, K)
    assert new_n_f.shape == (N, F_N) and new_n_f_lang.shape == (N, F_W)
    assert jnp.allclose(new_n_f, ref_n_f, rtol=2e-2, atol=2e-2)
    assert jnp.allclose(new_n_f_lang, ref_n_f_lang, rtol=2e-2, atol=2e-2)

    # Fast path: bf16 MXU operands (native on v5e/v6e/v7x), f32 accumulation,
    # bf16 e_f intermediate, attention softmax weights kept f32 in-kernel.
    fwd_bf16 = jax.jit(functools.partial(grnn_forward, dot_dtype=jnp.bfloat16,
                                         **common))
    bf_n_f, bf_n_f_lang = fwd_bf16(params, feat, word2vec, spatial_feat, src, dst)
    jax.block_until_ready((bf_n_f, bf_n_f_lang))

    def _rel_err(a, b):
        return float(jnp.linalg.norm(a.astype(jnp.float32) - b)
                     / (jnp.linalg.norm(b) + 1e-12))

    assert _rel_err(bf_n_f, ref_n_f) < 3e-2
    assert _rel_err(bf_n_f_lang, ref_n_f_lang) < 3e-2

    print("KERNEL_OK")
</pallas_src>

<mosaic_0001>
module attributes {stable_mosaic.version = 11 : i64} {
  func.func @_reduce_node_kernel(%arg0: i32, %arg1: memref<128x1xf32, #tpu.memory_space<vmem>>, %arg2: memref<128x1xf32, #tpu.memory_space<vmem>>, %arg3: memref<128x64xf32, #tpu.memory_space<vmem>>, %arg4: memref<16x64xf32, #tpu.memory_space<vmem>>, %arg5: memref<16x32xf32, #tpu.memory_space<vmem>>, %arg6: memref<8x64xf32, #tpu.memory_space<vmem>>, %arg7: memref<8x32xf32, #tpu.memory_space<vmem>>, %arg8: memref<64x128xf32, #tpu.memory_space<vmem>>, %arg9: memref<64x128xf32, #tpu.memory_space<vmem>>, %arg10: memref<1x128xf32, #tpu.memory_space<vmem>>, %arg11: memref<128x64xf32, #tpu.memory_space<vmem>>, %arg12: memref<1x64xf32, #tpu.memory_space<vmem>>, %arg13: memref<32x64xf32, #tpu.memory_space<vmem>>, %arg14: memref<32x64xf32, #tpu.memory_space<vmem>>, %arg15: memref<1x64xf32, #tpu.memory_space<vmem>>, %arg16: memref<64x32xf32, #tpu.memory_space<vmem>>, %arg17: memref<1x32xf32, #tpu.memory_space<vmem>>, %arg18: memref<8x64xf32, #tpu.memory_space<vmem>>, %arg19: memref<8x32xf32, #tpu.memory_space<vmem>>) attributes {dimension_semantics = [#tpu.dimension_semantics<parallel>], iteration_bounds = array<i64: 2>, scalar_prefetch = 0 : i64, scratch_operands = 0 : i64, tpu.core_type = #tpu.core_type<tc>, window_params = [{transform_indices = @transform_0, window_bounds = array<i64: 128, 1>}, {transform_indices = @transform_1, window_bounds = array<i64: 128, 1>}, {transform_indices = @transform_2, window_bounds = array<i64: 128, 64>}, {pipeline_mode = #tpu.pipeline_mode<synchronous>, transform_indices = @transform_3, window_bounds = array<i64: 16, 64>}, {pipeline_mode = #tpu.pipeline_mode<synchronous>, transform_indices = @transform_4, window_bounds = array<i64: 16, 32>}, {transform_indices = @transform_5, window_bounds = array<i64: 8, 64>}, {transform_indices = @transform_6, window_bounds = array<i64: 8, 32>}, {pipeline_mode = #tpu.pipeline_mode<synchronous>, transform_indices = @transform_7, window_bounds = array<i64: 64, 128>}, {pipeline_mode = #tpu.pipeline_mode<synchronous>, transform_indices = @transform_8, window_bounds = array<i64: 64, 128>}, {pipeline_mode = #tpu.pipeline_mode<synchronous>, transform_indices = @transform_9, window_bounds = array<i64: 1, 128>}, {pipeline_mode = #tpu.pipeline_mode<synchronous>, transform_indices = @transform_10, window_bounds = array<i64: 128, 64>}, {pipeline_mode = #tpu.pipeline_mode<synchronous>, transform_indices = @transform_11, window_bounds = array<i64: 1, 64>}, {pipeline_mode = #tpu.pipeline_mode<synchronous>, transform_indices = @transform_12, window_bounds = array<i64: 32, 64>}, {pipeline_mode = #tpu.pipeline_mode<synchronous>, transform_indices = @transform_13, window_bounds = array<i64: 32, 64>}, {pipeline_mode = #tpu.pipeline_mode<synchronous>, transform_indices = @transform_14, window_bounds = array<i64: 1, 64>}, {pipeline_mode = #tpu.pipeline_mode<synchronous>, transform_indices = @transform_15, window_bounds = array<i64: 64, 32>}, {pipeline_mode = #tpu.pipeline_mode<synchronous>, transform_indices = @transform_16, window_bounds = array<i64: 1, 32>}, {transform_indices = @transform_17, window_bounds = array<i64: 8, 64>}, {transform_indices = @transform_18, window_bounds = array<i64: 8, 32>}]} {
    %c0 = arith.constant 0 : index
    %c0_0 = arith.constant 0 : index
    %0 = vector.load %arg1[%c0, %c0_0] : memref<128x1xf32, #tpu.memory_space<vmem>>, vector<128x1xf32>
    %1 = vector.shape_cast %0 : vector<128x1xf32> to vector<8x16x1xf32>
    %cst = arith.constant dense<0xFF800000> : vector<8x1xf32>
    %2 = vector.multi_reduction <maximumf>, %1, %cst [1] : vector<8x16x1xf32> to vector<8x1xf32>
    %3 = vector.shape_cast %2 : vector<8x1xf32> to vector<8x1x1xf32>
    %4 = vector.broadcast %3 : vector<8x1x1xf32> to vector<8x16x1xf32>
    %5 = arith.subf %1, %4 : vector<8x16x1xf32>
    %6 = math.exp %5 : vector<8x16x1xf32>
    %cst_1 = arith.constant dense<0.000000e+00> : vector<8x1xf32>
    %7 = vector.multi_reduction <add>, %6, %cst_1 [1] : vector<8x16x1xf32> to vector<8x1xf32>
    %8 = tpu.reciprocal %7 {approx = true} : vector<8x1xf32> -> vector<8x1xf32>
    %c0_2 = arith.constant 0 : index
    %c0_3 = arith.constant 0 : index
    %9 = vector.load %arg2[%c0_2, %c0_3] : memref<128x1xf32, #tpu.memory_space<vmem>>, vector<128x1xf32>
    %10 = vector.shape_cast %9 : vector<128x1xf32> to vector<8x16x1xf32>
    %cst_4 = arith.constant dense<0xFF800000> : vector<8x1xf32>
    %11 = vector.multi_reduction <maximumf>, %10, %cst_4 [1] : vector<8x16x1xf32> to vector<8x1xf32>
    %12 = vector.shape_cast %11 : vector<8x1xf32> to vector<8x1x1xf32>
    %13 = vector.broadcast %12 : vector<8x1x1xf32> to vector<8x16x1xf32>
    %14 = arith.subf %10, %13 : vector<8x16x1xf32>
    %15 = math.exp %14 : vector<8x16x1xf32>
    %cst_5 = arith.constant dense<0.000000e+00> : vector<8x1xf32>
    %16 = vector.multi_reduction <add>, %15, %cst_5 [1] : vector<8x16x1xf32> to vector<8x1xf32>
    %17 = tpu.reciprocal %16 {approx = true} : vector<8x1xf32> -> vector<8x1xf32>
    %c0_6 = arith.constant 0 : index
    %c0_7 = arith.constant 0 : index
    %18 = vector.load %arg3[%c0_6, %c0_7] : memref<128x64xf32, #tpu.memory_space<vmem>>, vector<128x64xf32>
    %19 = vector.shape_cast %18 : vector<128x64xf32> to vector<8x16x64xf32>
    %c0_8 = arith.constant 0 : index
    %c0_9 = arith.constant 0 : index
    %20 = vector.load %arg4[%c0_8, %c0_9] : memref<16x64xf32, #tpu.memory_space<vmem>>, vector<16x64xf32>
    %21 = vector.shape_cast %20 : vector<16x64xf32> to vector<1x16x64xf32>
    %22 = vector.broadcast %21 : vector<1x16x64xf32> to vector<8x16x64xf32>
    %23 = arith.addf %19, %22 : vector<8x16x64xf32>
    %24 = vector.broadcast %6 : vector<8x16x1xf32> to vector<8x16x64xf32>
    %25 = arith.mulf %24, %23 : vector<8x16x64xf32>
    %cst_10 = arith.constant dense<0.000000e+00> : vector<8x64xf32>
    %26 = vector.multi_reduction <add>, %25, %cst_10 [1] : vector<8x16x64xf32> to vector<8x64xf32>
    %27 = vector.broadcast %8 : vector<8x1xf32> to vector<8x64xf32>
    %28 = arith.mulf %26, %27 : vector<8x64xf32>
    %c0_11 = arith.constant 0 : index
    %c0_12 = arith.constant 0 : index
    %29 = vector.load %arg5[%c0_11, %c0_12] : memref<16x32xf32, #tpu.memory_space<vmem>>, vector<16x32xf32>
    %30 = vector.shape_cast %29 : vector<16x32xf32> to vector<1x16x32xf32>
    %31 = vector.broadcast %15 : vector<8x16x1xf32> to vector<8x16x32xf32>
    %32 = vector.broadcast %30 : vector<1x16x32xf32> to vector<8x16x32xf32>
    %33 = arith.mulf %31, %32 : vector<8x16x32xf32>
    %cst_13 = arith.constant dense<0.000000e+00> : vector<8x32xf32>
    %34 = vector.multi_reduction <add>, %33, %cst_13 [1] : vector<8x16x32xf32> to vector<8x32xf32>
    %35 = vector.broadcast %17 : vector<8x1xf32> to vector<8x32xf32>
    %36 = arith.mulf %34, %35 : vector<8x32xf32>
    %c0_14 = arith.constant 0 : index
    %c0_15 = arith.constant 0 : index
    %37 = vector.load %arg6[%c0_14, %c0_15] : memref<8x64xf32, #tpu.memory_space<vmem>>, vector<8x64xf32>
    %c0_16 = arith.constant 0 : index
    %c0_17 = arith.constant 0 : index
    %38 = vector.load %arg8[%c0_16, %c0_17] : memref<64x128xf32, #tpu.memory_space<vmem>>, vector<64x128xf32>
    %cst_18 = arith.constant dense<0.000000e+00> : vector<8x128xf32>
    %39 = tpu.matmul %37, %38, %cst_18 {dimension_numbers = #tpu.dot_dimension_numbers<[1], [0], [0], [1], [0, 0, 1, 1], [], []>} : vector<8x64xf32>, vector<64x128xf32>, vector<8x128xf32> -> vector<8x128xf32>
    %c0_19 = arith.constant 0 : index
    %c0_20 = arith.constant 0 : index
    %40 = vector.load %arg9[%c0_19, %c0_20] : memref<64x128xf32, #tpu.memory_space<vmem>>, vector<64x128xf32>
    %cst_21 = arith.constant dense<0.000000e+00> : vector<8x128xf32>
    %41 = tpu.matmul %28, %40, %cst_21 {dimension_numbers = #tpu.dot_dimension_numbers<[1], [0], [0], [1], [0, 0, 1, 1], [], []>} : vector<8x64xf32>, vector<64x128xf32>, vector<8x128xf32> -> vector<8x128xf32>
    %42 = arith.addf %39, %41 : vector<8x128xf32>
    %c0_22 = arith.constant 0 : index
    %c0_23 = arith.constant 0 : index
    %43 = vector.load %arg10[%c0_22, %c0_23] : memref<1x128xf32, #tpu.memory_space<vmem>>, vector<1x128xf32>
    %44 = vector.broadcast %43 : vector<1x128xf32> to vector<8x128xf32>
    %45 = arith.addf %42, %44 : vector<8x128xf32>
    %cst_24 = arith.constant 0.000000e+00 : f32
    %46 = vector.broadcast %cst_24 : f32 to vector<8x128xf32>
    %47 = arith.maximumf %45, %46 : vector<8x128xf32>
    %c0_25 = arith.constant 0 : index
    %c0_26 = arith.constant 0 : index
    %48 = vector.load %arg11[%c0_25, %c0_26] : memref<128x64xf32, #tpu.memory_space<vmem>>, vector<128x64xf32>
    %cst_27 = arith.constant dense<0.000000e+00> : vector<8x64xf32>
    %49 = tpu.matmul %47, %48, %cst_27 {dimension_numbers = #tpu.dot_dimension_numbers<[1], [0], [0], [1], [0, 0, 1, 1], [], []>} : vector<8x128xf32>, vector<128x64xf32>, vector<8x64xf32> -> vector<8x64xf32>
    %c0_28 = arith.constant 0 : index
    %c0_29 = arith.constant 0 : index
    %50 = vector.load %arg12[%c0_28, %c0_29] : memref<1x64xf32, #tpu.memory_space<vmem>>, vector<1x64xf32>
    %51 = vector.broadcast %50 : vector<1x64xf32> to vector<8x64xf32>
    %52 = arith.addf %49, %51 : vector<8x64xf32>
    %c0_30 = arith.constant 0 : index
    %c0_31 = arith.constant 0 : index
    %53 = vector.load %arg18[%c0_30, %c0_31] : memref<8x64xf32, #tpu.memory_space<vmem>>, vector<8x64xf32>
    tpu.vector_store %arg18[%c0_30, %c0_31], %52 {strides = array<i32>} : memref<8x64xf32, #tpu.memory_space<vmem>>, vector<8x64xf32>,
    %c0_32 = arith.constant 0 : index
    %c0_33 = arith.constant 0 : index
    %54 = vector.load %arg7[%c0_32, %c0_33] : memref<8x32xf32, #tpu.memory_space<vmem>>, vector<8x32xf32>
    %c0_34 = arith.constant 0 : index
    %c0_35 = arith.constant 0 : index
    %55 = vector.load %arg13[%c0_34, %c0_35] : memref<32x64xf32, #tpu.memory_space<vmem>>, vector<32x64xf32>
    %cst_36 = arith.constant dense<0.000000e+00> : vector<8x64xf32>
    %56 = tpu.matmul %54, %55, %cst_36 {dimension_numbers = #tpu.dot_dimension_numbers<[1], [0], [0], [1], [0, 0, 1, 1], [], []>} : vector<8x32xf32>, vector<32x64xf32>, vector<8x64xf32> -> vector<8x64xf32>
    %c0_37 = arith.constant 0 : index
    %c0_38 = arith.constant 0 : index
    %57 = vector.load %arg14[%c0_37, %c0_38] : memref<32x64xf32, #tpu.memory_space<vmem>>, vector<32x64xf32>
    %cst_39 = arith.constant dense<0.000000e+00> : vector<8x64xf32>
    %58 = tpu.matmul %36, %57, %cst_39 {dimension_numbers = #tpu.dot_dimension_numbers<[1], [0], [0], [1], [0, 0, 1, 1], [], []>} : vector<8x32xf32>, vector<32x64xf32>, vector<8x64xf32> -> vector<8x64xf32>
    %59 = arith.addf %56, %58 : vector<8x64xf32>
    %c0_40 = arith.constant 0 : index
    %c0_41 = arith.constant 0 : index
    %60 = vector.load %arg15[%c0_40, %c0_41] : memref<1x64xf32, #tpu.memory_space<vmem>>, vector<1x64xf32>
    %61 = vector.broadcast %60 : vector<1x64xf32> to vector<8x64xf32>
    %62 = arith.addf %59, %61 : vector<8x64xf32>
    %cst_42 = arith.constant 0.000000e+00 : f32
    %63 = vector.broadcast %cst_42 : f32 to vector<8x64xf32>
    %64 = arith.maximumf %62, %63 : vector<8x64xf32>
    %c0_43 = arith.constant 0 : index
    %c0_44 = arith.constant 0 : index
    %65 = vector.load %arg16[%c0_43, %c0_44] : memref<64x32xf32, #tpu.memory_space<vmem>>, vector<64x32xf32>
    %cst_45 = arith.constant dense<0.000000e+00> : vector<8x32xf32>
    %66 = tpu.matmul %64, %65, %cst_45 {dimension_numbers = #tpu.dot_dimension_numbers<[1], [0], [0], [1], [0, 0, 1, 1], [], []>} : vector<8x64xf32>, vector<64x32xf32>, vector<8x32xf32> -> vector<8x32xf32>
    %c0_46 = arith.constant 0 : index
    %c0_47 = arith.constant 0 : index
    %67 = vector.load %arg17[%c0_46, %c0_47] : memref<1x32xf32, #tpu.memory_space<vmem>>, vector<1x32xf32>
    %68 = vector.broadcast %67 : vector<1x32xf32> to vector<8x32xf32>
    %69 = arith.addf %66, %68 : vector<8x32xf32>
    %c0_48 = arith.constant 0 : index
    %c0_49 = arith.constant 0 : index
    %70 = vector.load %arg19[%c0_48, %c0_49] : memref<8x32xf32, #tpu.memory_space<vmem>>, vector<8x32xf32>
    tpu.vector_store %arg19[%c0_48, %c0_49], %69 {strides = array<i32>} : memref<8x32xf32, #tpu.memory_space<vmem>>, vector<8x32xf32>,
    return
  }
  func.func @transform_0(%arg0: i32) -> (i32, i32) {
    %c0_i32 = arith.constant 0 : i32
    %c0_i32_0 = arith.constant 0 : i32
    return %arg0, %c0_i32 : i32, i32
  }
  func.func @transform_1(%arg0: i32) -> (i32, i32) {
    %c0_i32 = arith.constant 0 : i32
    %c0_i32_0 = arith.constant 0 : i32
    return %arg0, %c0_i32 : i32, i32
  }
  func.func @transform_2(%arg0: i32) -> (i32, i32) {
    %c0_i32 = arith.constant 0 : i32
    %c0_i32_0 = arith.constant 0 : i32
    return %arg0, %c0_i32 : i32, i32
  }
  func.func @transform_3(%arg0: i32) -> (i32, i32) {
    %c0_i32 = arith.constant 0 : i32
    %c0_i32_0 = arith.constant 0 : i32
    %c0_i32_1 = arith.constant 0 : i32
    return %c0_i32, %c0_i32_0 : i32, i32
  }
  func.func @transform_4(%arg0: i32) -> (i32, i32) {
    %c0_i32 = arith.constant 0 : i32
    %c0_i32_0 = arith.constant 0 : i32
    %c0_i32_1 = arith.constant 0 : i32
    return %c0_i32, %c0_i32_0 : i32, i32
  }
  func.func @transform_5(%arg0: i32) -> (i32, i32) {
    %c0_i32 = arith.constant 0 : i32
    %c0_i32_0 = arith.constant 0 : i32
    return %arg0, %c0_i32 : i32, i32
  }
  func.func @transform_6(%arg0: i32) -> (i32, i32) {
    %c0_i32 = arith.constant 0 : i32
    %c0_i32_0 = arith.constant 0 : i32
    return %arg0, %c0_i32 : i32, i32
  }
  func.func @transform_7(%arg0: i32) -> (i32, i32) {
    %c0_i32 = arith.constant 0 : i32
    %c0_i32_0 = arith.constant 0 : i32
    %c0_i32_1 = arith.constant 0 : i32
    return %c0_i32, %c0_i32_0 : i32, i32
  }
  func.func @transform_8(%arg0: i32) -> (i32, i32) {
    %c0_i32 = arith.constant 0 : i32
    %c0_i32_0 = arith.constant 0 : i32
    %c0_i32_1 = arith.constant 0 : i32
    return %c0_i32, %c0_i32_0 : i32, i32
  }
  func.func @transform_9(%arg0: i32) -> (i32, i32) {
    %c0_i32 = arith.constant 0 : i32
    %c0_i32_0 = arith.constant 0 : i32
    %c0_i32_1 = arith.constant 0 : i32
    return %c0_i32, %c0_i32_0 : i32, i32
  }
  func.func @transform_10(%arg0: i32) -> (i32, i32) {
    %c0_i32 = arith.constant 0 : i32
    %c0_i32_0 = arith.constant 0 : i32
    %c0_i32_1 = arith.constant 0 : i32
    return %c0_i32, %c0_i32_0 : i32, i32
  }
  func.func @transform_11(%arg0: i32) -> (i32, i32) {
    %c0_i32 = arith.constant 0 : i32
    %c0_i32_0 = arith.constant 0 : i32
    %c0_i32_1 = arith.constant 0 : i32
    return %c0_i32, %c0_i32_0 : i32, i32
  }
  func.func @transform_12(%arg0: i32) -> (i32, i32) {
    %c0_i32 = arith.constant 0 : i32
    %c0_i32_0 = arith.constant 0 : i32
    %c0_i32_1 = arith.constant 0 : i32
    return %c0_i32, %c0_i32_0 : i32, i32
  }
  func.func @transform_13(%arg0: i32) -> (i32, i32) {
    %c0_i32 = arith.constant 0 : i32
    %c0_i32_0 = arith.constant 0 : i32
    %c0_i32_1 = arith.constant 0 : i32
    return %c0_i32, %c0_i32_0 : i32, i32
  }
  func.func @transform_14(%arg0: i32) -> (i32, i32) {
    %c0_i32 = arith.constant 0 : i32
    %c0_i32_0 = arith.constant 0 : i32
    %c0_i32_1 = arith.constant 0 : i32
    return %c0_i32, %c0_i32_0 : i32, i32
  }
  func.func @transform_15(%arg0: i32) -> (i32, i32) {
    %c0_i32 = arith.constant 0 : i32
    %c0_i32_0 = arith.constant 0 : i32
    %c0_i32_1 = arith.constant 0 : i32
    return %c0_i32, %c0_i32_0 : i32, i32
  }
  func.func @transform_16(%arg0: i32) -> (i32, i32) {
    %c0_i32 = arith.constant 0 : i32
    %c0_i32_0 = arith.constant 0 : i32
    %c0_i32_1 = arith.constant 0 : i32
    return %c0_i32, %c0_i32_0 : i32, i32
  }
  func.func @transform_17(%arg0: i32) -> (i32, i32) {
    %c0_i32 = arith.constant 0 : i32
    %c0_i32_0 = arith.constant 0 : i32
    return %arg0, %c0_i32 : i32, i32
  }
  func.func @transform_18(%arg0: i32) -> (i32, i32) {
    %c0_i32 = arith.constant 0 : i32
    %c0_i32_0 = arith.constant 0 : i32
    return %arg0, %c0_i32 : i32, i32
  }
}

module attributes {stable_mosaic.version = 11 : i64} {
  func.func @_edge_fused_kernel(%arg0: i32, %arg1: memref<128x16xf32, #tpu.memory_space<vmem>>, %arg2: memref<16x128xf32, #tpu.memory_space<vmem>>, %arg3: memref<8x128xf32, #tpu.memory_space<vmem>>, %arg4: memref<16x64xf32, #tpu.memory_space<vmem>>, %arg5: memref<8x64xf32, #tpu.memory_space<vmem>>, %arg6: memref<16x128xf32, #tpu.memory_space<vmem>>, %arg7: memref<128x64xf32, #tpu.memory_space<vmem>>, %arg8: memref<1x64xf32, #tpu.memory_space<vmem>>, %arg9: memref<64x32xf32, #tpu.memory_space<vmem>>, %arg10: memref<1x32xf32, #tpu.memory_space<vmem>>, %arg11: memref<64x32xf32, #tpu.memory_space<vmem>>, %arg12: memref<1x32xf32, #tpu.memory_space<vmem>>, %arg13: memref<1x32xf32, #tpu.memory_space<vmem>>, %arg14: memref<1x1xf32, #tpu.memory_space<vmem>>, %arg15: memref<32x32xf32, #tpu.memory_space<vmem>>, %arg16: memref<1x32xf32, #tpu.memory_space<vmem>>, %arg17: memref<1x32xf32, #tpu.memory_space<vmem>>, %arg18: memref<1x1xf32, #tpu.memory_space<vmem>>, %arg19: memref<128x64xf32, #tpu.memory_space<vmem>>, %arg20: memref<128x1xf32, #tpu.memory_space<vmem>>, %arg21: memref<128x1xf32, #tpu.memory_space<vmem>>) attributes {dimension_semantics = [#tpu.dimension_semantics<parallel>], iteration_bounds = array<i64: 2>, scalar_prefetch = 0 : i64, scratch_operands = 0 : i64, tpu.core_type = #tpu.core_type<tc>, window_params = [{transform_indices = @transform_0, window_bounds = array<i64: 128, 16>}, {pipeline_mode = #tpu.pipeline_mode<synchronous>, transform_indices = @transform_1, window_bounds = array<i64: 16, 128>}, {transform_indices = @transform_2, window_bounds = array<i64: 8, 128>}, {pipeline_mode = #tpu.pipeline_mode<synchronous>, transform_indices = @transform_3, window_bounds = array<i64: 16, 64>}, {transform_indices = @transform_4, window_bounds = array<i64: 8, 64>}, {pipeline_mode = #tpu.pipeline_mode<synchronous>, transform_indices = @transform_5, window_bounds = array<i64: 16, 128>}, {pipeline_mode = #tpu.pipeline_mode<synchronous>, transform_indices = @transform_6, window_bounds = array<i64: 128, 64>}, {pipeline_mode = #tpu.pipeline_mode<synchronous>, transform_indices = @transform_7, window_bounds = array<i64: 1, 64>}, {pipeline_mode = #tpu.pipeline_mode<synchronous>, transform_indices = @transform_8, window_bounds = array<i64: 64, 32>}, {pipeline_mode = #tpu.pipeline_mode<synchronous>, transform_indices = @transform_9, window_bounds = array<i64: 1, 32>}, {pipeline_mode = #tpu.pipeline_mode<synchronous>, transform_indices = @transform_10, window_bounds = array<i64: 64, 32>}, {pipeline_mode = #tpu.pipeline_mode<synchronous>, transform_indices = @transform_11, window_bounds = array<i64: 1, 32>}, {pipeline_mode = #tpu.pipeline_mode<synchronous>, transform_indices = @transform_12, window_bounds = array<i64: 1, 32>}, {pipeline_mode = #tpu.pipeline_mode<synchronous>, transform_indices = @transform_13, window_bounds = array<i64: 1, 1>}, {pipeline_mode = #tpu.pipeline_mode<synchronous>, transform_indices = @transform_14, window_bounds = array<i64: 32, 32>}, {pipeline_mode = #tpu.pipeline_mode<synchronous>, transform_indices = @transform_15, window_bounds = array<i64: 1, 32>}, {pipeline_mode = #tpu.pipeline_mode<synchronous>, transform_indices = @transform_16, window_bounds = array<i64: 1, 32>}, {pipeline_mode = #tpu.pipeline_mode<synchronous>, transform_indices = @transform_17, window_bounds = array<i64: 1, 1>}, {transform_indices = @transform_18, window_bounds = array<i64: 128, 64>}, {transform_indices = @transform_19, window_bounds = array<i64: 128, 1>}, {transform_indices = @transform_20, window_bounds = array<i64: 128, 1>}]} {
    %c0 = arith.constant 0 : index
    %c0_0 = arith.constant 0 : index
    %0 = vector.load %arg1[%c0, %c0_0] : memref<128x16xf32, #tpu.memory_space<vmem>>, vector<128x16xf32>
    %c0_1 = arith.constant 0 : index
    %c0_2 = arith.constant 0 : index
    %1 = vector.load %arg6[%c0_1, %c0_2] : memref<16x128xf32, #tpu.memory_space<vmem>>, vector<16x128xf32>
    %cst = arith.constant dense<0.000000e+00> : vector<128x128xf32>
    %2 = tpu.matmul %0, %1, %cst {dimension_numbers = #tpu.dot_dimension_numbers<[1], [0], [0], [1], [0, 0, 1, 1], [], []>} : vector<128x16xf32>, vector<16x128xf32>, vector<128x128xf32> -> vector<128x128xf32>
    %3 = vector.shape_cast %2 : vector<128x128xf32> to vector<8x16x128xf32>
    %c0_3 = arith.constant 0 : index
    %c0_4 = arith.constant 0 : index
    %4 = vector.load %arg2[%c0_3, %c0_4] : memref<16x128xf32, #tpu.memory_space<vmem>>, vector<16x128xf32>
    %5 = vector.shape_cast %4 : vector<16x128xf32> to vector<1x16x128xf32>
    %6 = vector.broadcast %5 : vector<1x16x128xf32> to vector<8x16x128xf32>
    %7 = arith.addf %3, %6 : vector<8x16x128xf32>
    %c0_5 = arith.constant 0 : index
    %c0_6 = arith.constant 0 : index
    %8 = vector.load %arg3[%c0_5, %c0_6] : memref<8x128xf32, #tpu.memory_space<vmem>>, vector<8x128xf32>
    %9 = vector.shape_cast %8 : vector<8x128xf32> to vector<8x1x128xf32>
    %10 = vector.broadcast %9 : vector<8x1x128xf32> to vector<8x16x128xf32>
    %11 = arith.addf %7, %10 : vector<8x16x128xf32>
    %cst_7 = arith.constant 0.000000e+00 : f32
    %12 = vector.broadcast %cst_7 : f32 to vector<8x16x128xf32>
    %13 = arith.maximumf %11, %12 : vector<8x16x128xf32>
    %14 = vector.shape_cast %13 : vector<8x16x128xf32> to vector<128x128xf32>
    %c0_8 = arith.constant 0 : index
    %c0_9 = arith.constant 0 : index
    %15 = vector.load %arg7[%c0_8, %c0_9] : memref<128x64xf32, #tpu.memory_space<vmem>>, vector<128x64xf32>
    %cst_10 = arith.constant dense<0.000000e+00> : vector<128x64xf32>
    %16 = tpu.matmul %14, %15, %cst_10 {dimension_numbers = #tpu.dot_dimension_numbers<[1], [0], [0], [1], [0, 0, 1, 1], [], []>} : vector<128x128xf32>, vector<128x64xf32>, vector<128x64xf32> -> vector<128x64xf32>
    %c0_11 = arith.constant 0 : index
    %c0_12 = arith.constant 0 : index
    %17 = vector.load %arg8[%c0_11, %c0_12] : memref<1x64xf32, #tpu.memory_space<vmem>>, vector<1x64xf32>
    %18 = vector.broadcast %17 : vector<1x64xf32> to vector<128x64xf32>
    %19 = arith.addf %16, %18 : vector<128x64xf32>
    %c0_13 = arith.constant 0 : index
    %c0_14 = arith.constant 0 : index
    %20 = vector.load %arg19[%c0_13, %c0_14] : memref<128x64xf32, #tpu.memory_space<vmem>>, vector<128x64xf32>
    tpu.vector_store %arg19[%c0_13, %c0_14], %19 {strides = array<i32>} : memref<128x64xf32, #tpu.memory_space<vmem>>, vector<128x64xf32>,
    %c0_15 = arith.constant 0 : index
    %c0_16 = arith.constant 0 : index
    %21 = vector.load %arg11[%c0_15, %c0_16] : memref<64x32xf32, #tpu.memory_space<vmem>>, vector<64x32xf32>
    %cst_17 = arith.constant dense<0.000000e+00> : vector<128x32xf32>
    %22 = tpu.matmul %19, %21, %cst_17 {dimension_numbers = #tpu.dot_dimension_numbers<[1], [0], [0], [1], [0, 0, 1, 1], [], []>} : vector<128x64xf32>, vector<64x32xf32>, vector<128x32xf32> -> vector<128x32xf32>
    %c0_18 = arith.constant 0 : index
    %c0_19 = arith.constant 0 : index
    %23 = vector.load %arg12[%c0_18, %c0_19] : memref<1x32xf32, #tpu.memory_space<vmem>>, vector<1x32xf32>
    %24 = vector.broadcast %23 : vector<1x32xf32> to vector<128x32xf32>
    %25 = arith.addf %22, %24 : vector<128x32xf32>
    %cst_20 = arith.constant 0.000000e+00 : f32
    %26 = vector.broadcast %cst_20 : f32 to vector<128x32xf32>
    %27 = arith.maximumf %25, %26 : vector<128x32xf32>
    %c0_21 = arith.constant 0 : index
    %c0_22 = arith.constant 0 : index
    %28 = vector.load %arg13[%c0_21, %c0_22] : memref<1x32xf32, #tpu.memory_space<vmem>>, vector<1x32xf32>
    %29 = vector.broadcast %28 : vector<1x32xf32> to vector<128x32xf32>
    %30 = arith.mulf %27, %29 : vector<128x32xf32>
    %cst_23 = arith.constant dense<0.000000e+00> : vector<128xf32>
    %31 = vector.multi_reduction <add>, %30, %cst_23 [1] : vector<128x32xf32> to vector<128xf32>
    %32 = vector.shape_cast %31 : vector<128xf32> to vector<128x1xf32>
    %c0_24 = arith.constant 0 : index
    %c0_25 = arith.constant 0 : index
    %33 = vector.load %arg14[%c0_24, %c0_25] : memref<1x1xf32, #tpu.memory_space<vmem>>, vector<1x1xf32>
    %34 = vector.broadcast %33 : vector<1x1xf32> to vector<128x1xf32>
    %35 = arith.addf %32, %34 : vector<128x1xf32>
    %c0_26 = arith.constant 0 : index
    %c0_27 = arith.constant 0 : index
    %36 = vector.load %arg20[%c0_26, %c0_27] : memref<128x1xf32, #tpu.memory_space<vmem>>, vector<128x1xf32>
    tpu.vector_store %arg20[%c0_26, %c0_27], %35 {strides = array<i32>} : memref<128x1xf32, #tpu.memory_space<vmem>>, vector<128x1xf32>,
    %c0_28 = arith.constant 0 : index
    %c0_29 = arith.constant 0 : index
    %37 = vector.load %arg4[%c0_28, %c0_29] : memref<16x64xf32, #tpu.memory_space<vmem>>, vector<16x64xf32>
    %38 = vector.shape_cast %37 : vector<16x64xf32> to vector<1x16x64xf32>
    %c0_30 = arith.constant 0 : index
    %c0_31 = arith.constant 0 : index
    %39 = vector.load %arg5[%c0_30, %c0_31] : memref<8x64xf32, #tpu.memory_space<vmem>>, vector<8x64xf32>
    %40 = vector.shape_cast %39 : vector<8x64xf32> to vector<8x1x64xf32>
    %41 = vector.broadcast %38 : vector<1x16x64xf32> to vector<8x16x64xf32>
    %42 = vector.broadcast %40 : vector<8x1x64xf32> to vector<8x16x64xf32>
    %43 = arith.addf %41, %42 : vector<8x16x64xf32>
    %cst_32 = arith.constant 0.000000e+00 : f32
    %44 = vector.broadcast %cst_32 : f32 to vector<8x16x64xf32>
    %45 = arith.maximumf %43, %44 : vector<8x16x64xf32>
    %46 = vector.shape_cast %45 : vector<8x16x64xf32> to vector<128x64xf32>
    %c0_33 = arith.constant 0 : index
    %c0_34 = arith.constant 0 : index
    %47 = vector.load %arg9[%c0_33, %c0_34] : memref<64x32xf32, #tpu.memory_space<vmem>>, vector<64x32xf32>
    %cst_35 = arith.constant dense<0.000000e+00> : vector<128x32xf32>
    %48 = tpu.matmul %46, %47, %cst_35 {dimension_numbers = #tpu.dot_dimension_numbers<[1], [0], [0], [1], [0, 0, 1, 1], [], []>} : vector<128x64xf32>, vector<64x32xf32>, vector<128x32xf32> -> vector<128x32xf32>
    %c0_36 = arith.constant 0 : index
    %c0_37 = arith.constant 0 : index
    %49 = vector.load %arg10[%c0_36, %c0_37] : memref<1x32xf32, #tpu.memory_space<vmem>>, vector<1x32xf32>
    %50 = vector.broadcast %49 : vector<1x32xf32> to vector<128x32xf32>
    %51 = arith.addf %48, %50 : vector<128x32xf32>
    %c0_38 = arith.constant 0 : index
    %c0_39 = arith.constant 0 : index
    %52 = vector.load %arg15[%c0_38, %c0_39] : memref<32x32xf32, #tpu.memory_space<vmem>>, vector<32x32xf32>
    %cst_40 = arith.constant dense<0.000000e+00> : vector<128x32xf32>
    %53 = tpu.matmul %51, %52, %cst_40 {dimension_numbers = #tpu.dot_dimension_numbers<[1], [0], [0], [1], [0, 0, 1, 1], [], []>} : vector<128x32xf32>, vector<32x32xf32>, vector<128x32xf32> -> vector<128x32xf32>
    %c0_41 = arith.constant 0 : index
    %c0_42 = arith.constant 0 : index
    %54 = vector.load %arg16[%c0_41, %c0_42] : memref<1x32xf32, #tpu.memory_space<vmem>>, vector<1x32xf32>
    %55 = vector.broadcast %54 : vector<1x32xf32> to vector<128x32xf32>
    %56 = arith.addf %53, %55 : vector<128x32xf32>
    %cst_43 = arith.constant 0.000000e+00 : f32
    %57 = vector.broadcast %cst_43 : f32 to vector<128x32xf32>
    %58 = arith.maximumf %56, %57 : vector<128x32xf32>
    %c0_44 = arith.constant 0 : index
    %c0_45 = arith.constant 0 : index
    %59 = vector.load %arg17[%c0_44, %c0_45] : memref<1x32xf32, #tpu.memory_space<vmem>>, vector<1x32xf32>
    %60 = vector.broadcast %59 : vector<1x32xf32> to vector<128x32xf32>
    %61 = arith.mulf %58, %60 : vector<128x32xf32>
    %cst_46 = arith.constant dense<0.000000e+00> : vector<128xf32>
    %62 = vector.multi_reduction <add>, %61, %cst_46 [1] : vector<128x32xf32> to vector<128xf32>
    %63 = vector.shape_cast %62 : vector<128xf32> to vector<128x1xf32>
    %c0_47 = arith.constant 0 : index
    %c0_48 = arith.constant 0 : index
    %64 = vector.load %arg18[%c0_47, %c0_48] : memref<1x1xf32, #tpu.memory_space<vmem>>, vector<1x1xf32>
    %65 = vector.broadcast %64 : vector<1x1xf32> to vector<128x1xf32>
    %66 = arith.addf %63, %65 : vector<128x1xf32>
    %c0_49 = arith.constant 0 : index
    %c0_50 = arith.constant 0 : index
    %67 = vector.load %arg21[%c0_49, %c0_50] : memref<128x1xf32, #tpu.memory_space<vmem>>, vector<128x1xf32>
    tpu.vector_store %arg21[%c0_49, %c0_50], %66 {strides = array<i32>} : memref<128x1xf32, #tpu.memory_space<vmem>>, vector<128x1xf32>,
    return
  }
  func.func @transform_0(%arg0: i32) -> (i32, i32) {
    %c0_i32 = arith.constant 0 : i32
    %c0_i32_0 = arith.constant 0 : i32
    return %arg0, %c0_i32 : i32, i32
  }
  func.func @transform_1(%arg0: i32) -> (i32, i32) {
    %c0_i32 = arith.constant 0 : i32
    %c0_i32_0 = arith.constant 0 : i32
    %c0_i32_1 = arith.constant 0 : i32
    return %c0_i32, %c0_i32_0 : i32, i32
  }
  func.func @transform_2(%arg0: i32) -> (i32, i32) {
    %c0_i32 = arith.constant 0 : i32
    %c0_i32_0 = arith.constant 0 : i32
    return %arg0, %c0_i32 : i32, i32
  }
  func.func @transform_3(%arg0: i32) -> (i32, i32) {
    %c0_i32 = arith.constant 0 : i32
    %c0_i32_0 = arith.constant 0 : i32
    %c0_i32_1 = arith.constant 0 : i32
    return %c0_i32, %c0_i32_0 : i32, i32
  }
  func.func @transform_4(%arg0: i32) -> (i32, i32) {
    %c0_i32 = arith.constant 0 : i32
    %c0_i32_0 = arith.constant 0 : i32
    return %arg0, %c0_i32 : i32, i32
  }
  func.func @transform_5(%arg0: i32) -> (i32, i32) {
    %c0_i32 = arith.constant 0 : i32
    %c0_i32_0 = arith.constant 0 : i32
    %c0_i32_1 = arith.constant 0 : i32
    return %c0_i32, %c0_i32_0 : i32, i32
  }
  func.func @transform_6(%arg0: i32) -> (i32, i32) {
    %c0_i32 = arith.constant 0 : i32
    %c0_i32_0 = arith.constant 0 : i32
    %c0_i32_1 = arith.constant 0 : i32
    return %c0_i32, %c0_i32_0 : i32, i32
  }
  func.func @transform_7(%arg0: i32) -> (i32, i32) {
    %c0_i32 = arith.constant 0 : i32
    %c0_i32_0 = arith.constant 0 : i32
    %c0_i32_1 = arith.constant 0 : i32
    return %c0_i32, %c0_i32_0 : i32, i32
  }
  func.func @transform_8(%arg0: i32) -> (i32, i32) {
    %c0_i32 = arith.constant 0 : i32
    %c0_i32_0 = arith.constant 0 : i32
    %c0_i32_1 = arith.constant 0 : i32
    return %c0_i32, %c0_i32_0 : i32, i32
  }
  func.func @transform_9(%arg0: i32) -> (i32, i32) {
    %c0_i32 = arith.constant 0 : i32
    %c0_i32_0 = arith.constant 0 : i32
    %c0_i32_1 = arith.constant 0 : i32
    return %c0_i32, %c0_i32_0 : i32, i32
  }
  func.func @transform_10(%arg0: i32) -> (i32, i32) {
    %c0_i32 = arith.constant 0 : i32
    %c0_i32_0 = arith.constant 0 : i32
    %c0_i32_1 = arith.constant 0 : i32
    return %c0_i32, %c0_i32_0 : i32, i32
  }
  func.func @transform_11(%arg0: i32) -> (i32, i32) {
    %c0_i32 = arith.constant 0 : i32
    %c0_i32_0 = arith.constant 0 : i32
    %c0_i32_1 = arith.constant 0 : i32
    return %c0_i32, %c0_i32_0 : i32, i32
  }
  func.func @transform_12(%arg0: i32) -> (i32, i32) {
    %c0_i32 = arith.constant 0 : i32
    %c0_i32_0 = arith.constant 0 : i32
    %c0_i32_1 = arith.constant 0 : i32
    return %c0_i32, %c0_i32_0 : i32, i32
  }
  func.func @transform_13(%arg0: i32) -> (i32, i32) {
    %c0_i32 = arith.constant 0 : i32
    %c0_i32_0 = arith.constant 0 : i32
    %c0_i32_1 = arith.constant 0 : i32
    return %c0_i32, %c0_i32_0 : i32, i32
  }
  func.func @transform_14(%arg0: i32) -> (i32, i32) {
    %c0_i32 = arith.constant 0 : i32
    %c0_i32_0 = arith.constant 0 : i32
    %c0_i32_1 = arith.constant 0 : i32
    return %c0_i32, %c0_i32_0 : i32, i32
  }
  func.func @transform_15(%arg0: i32) -> (i32, i32) {
    %c0_i32 = arith.constant 0 : i32
    %c0_i32_0 = arith.constant 0 : i32
    %c0_i32_1 = arith.constant 0 : i32
    return %c0_i32, %c0_i32_0 : i32, i32
  }
  func.func @transform_16(%arg0: i32) -> (i32, i32) {
    %c0_i32 = arith.constant 0 : i32
    %c0_i32_0 = arith.constant 0 : i32
    %c0_i32_1 = arith.constant 0 : i32
    return %c0_i32, %c0_i32_0 : i32, i32
  }
  func.func @transform_17(%arg0: i32) -> (i32, i32) {
    %c0_i32 = arith.constant 0 : i32
    %c0_i32_0 = arith.constant 0 : i32
    %c0_i32_1 = arith.constant 0 : i32
    return %c0_i32, %c0_i32_0 : i32, i32
  }
  func.func @transform_18(%arg0: i32) -> (i32, i32) {
    %c0_i32 = arith.constant 0 : i32
    %c0_i32_0 = arith.constant 0 : i32
    return %arg0, %c0_i32 : i32, i32
  }
  func.func @transform_19(%arg0: i32) -> (i32, i32) {
    %c0_i32 = arith.constant 0 : i32
    %c0_i32_0 = arith.constant 0 : i32
    return %arg0, %c0_i32 : i32, i32
  }
  func.func @transform_20(%arg0: i32) -> (i32, i32) {
    %c0_i32 = arith.constant 0 : i32
    %c0_i32_0 = arith.constant 0 : i32
    return %arg0, %c0_i32 : i32, i32
  }
}

</mosaic_0001>

<llo_original>
// kernel: grnn_forward.3
$region0: #{grnn_forward.3}
  #allocation0 [shape = 'u32[]', space=smem, size = 0x4, offset = 0x4, fixed_abs, tag = 'smem constant byte address 0x4 - core index']
  #allocation1 [shape = 'u32[144,128]{1,0:T(1,128)}', space=vmem, size = 0x12000, scoped, tag = 'internal scratch']
  %s0 = inlined_call_operand.vmem [shape: f32[256,1], index: 0, kind: input, shape index: {}]
  %s1 = inlined_call_operand.vmem [shape: f32[256,1], index: 1, kind: input, shape index: {}]
  %s2 = inlined_call_operand.vmem [shape: f32[256,64], index: 2, kind: input, shape index: {}]
  %s3 = inlined_call_operand.vmem [shape: f32[16,64], index: 3, kind: input, shape index: {}, may-alias: {3,5}]
  %s4 = inlined_call_operand.vmem [shape: f32[16,32], index: 4, kind: input, shape index: {}, may-alias: {4,6}]
  %s5 = inlined_call_operand.vmem [shape: f32[16,64], index: 5, kind: input, shape index: {}, may-alias: {3,5}]
  %s6 = inlined_call_operand.vmem [shape: f32[16,32], index: 6, kind: input, shape index: {}, may-alias: {4,6}]
  %s7 = inlined_call_operand.vmem [shape: f32[64,128], index: 7, kind: input, shape index: {}]
  %s8 = inlined_call_operand.vmem [shape: f32[64,128], index: 8, kind: input, shape index: {}]
  %s9 = inlined_call_operand.vmem [shape: f32[1,128], index: 9, kind: input, shape index: {}]
  %s10 = inlined_call_operand.vmem [shape: f32[128,64], index: 10, kind: input, shape index: {}]
  %s11 = inlined_call_operand.vmem [shape: f32[1,64], index: 11, kind: input, shape index: {}]
  %s12 = inlined_call_operand.vmem [shape: f32[32,64], index: 12, kind: input, shape index: {}]
  %s13 = inlined_call_operand.vmem [shape: f32[32,64], index: 13, kind: input, shape index: {}]
  %s14 = inlined_call_operand.vmem [shape: f32[1,64], index: 14, kind: input, shape index: {}]
  %s15 = inlined_call_operand.vmem [shape: f32[64,32], index: 15, kind: input, shape index: {}]
  %s16 = inlined_call_operand.vmem [shape: f32[1,32], index: 16, kind: input, shape index: {}]
  %s17 = inlined_call_operand.hbm [shape: f32[16,64], index: 17, kind: output, shape index: {0}]
  %s18 = inlined_call_operand.hbm [shape: f32[16,32], index: 18, kind: output, shape index: {1}]
  %19 = xla_tuple %s17, %s18
  %s20 = sld [smem:[#allocation0]]
  $region109: #{grnn_forward.3} parent=0
    _
  %s22 = ssub.s32 1, %s20
  %s23 = scalar_select 0, %s22, %s20
  $region1: #{grnn_forward.3} parent=0
    #allocation2 [shape = 'u8[8192]{0}', space=vmem, size = 0x2000, scoped, tag = 'output window, operand 0']
    #allocation3 [shape = 's32[2]{0}', space=sflag, size = 0x8, scoped, tag = 'scoped memory for grnn_forward.3']
    #allocation4 [shape = 'u8[8192]{0}', space=vmem, size = 0x2000, scoped, tag = 'output window, operand 1']
    #allocation5 [shape = 's32[2]{0}', space=sflag, size = 0x8, scoped, tag = 'scoped memory for grnn_forward.3']
    %24 = vsyncpa [#allocation3], 0
    %s25 = scalar_lea.sflag [#allocation3], 1
    %26 = vsyncpa %s25, 0
    %27 = vsyncpa [#allocation5], 0
    %s28 = scalar_lea.sflag [#allocation5], 1
    %29 = vsyncpa %s28, 0
    loop: start=0, step=1, limit=4
    $region2: #{grnn_forward.3} parent=1 // loop_pre_header
      _
    $region3: #{grnn_forward.3} parent=1 // loop_header
      %s31 = sphi 0, %s35
      %p32 = scmp.ge.s32.totalorder %s31, 4
      %s41 = sphi 0, %s43
      %s44 = sphi 0, %s41
      %s45 = sphi 0, %s44
      %s61 = sphi 0, %s45
      %s67 = sphi 0, %s69
      %s70 = sphi 0, %s67
      %s71 = sphi 0, %s70
      %s87 = sphi 0, %s71
      %s93 = sphi 0, %s95
      %s96 = sphi 0, %s93
      %s97 = sphi 0, %s96
      %s113 = sphi 0, %s97
      %s117 = sphi 0, %s117
      %s119 = sphi 0, %s117
      %s120 = sphi 0, %s119
      %s134 = sphi 0, %s120
      %s138 = sphi 0, %s138
      %s140 = sphi 0, %s138
      %s141 = sphi 0, %s140
      %s155 = sphi 0, %s141
      %s161 = sphi 0, %s163
      %s164 = sphi 0, %s161
      %s165 = sphi 0, %s164
      %s181 = sphi 0, %s165
      %s187 = sphi 0, %s189
      %s190 = sphi 0, %s187
      %s191 = sphi 0, %s190
      %s207 = sphi 0, %s191
      %s211 = sphi 0, %s211
      %s213 = sphi 0, %s211
      %s214 = sphi 0, %s213
      %s228 = sphi 0, %s214
      %s232 = sphi 0, %s232
      %s234 = sphi 0, %s232
      %s235 = sphi 0, %s234
      %s249 = sphi 0, %s235
      %s253 = sphi 0, %s253
      %s255 = sphi 0, %s253
      %s256 = sphi 0, %s255
      %s270 = sphi 0, %s256
      %s274 = sphi 0, %s274
      %s276 = sphi 0, %s274
      %s277 = sphi 0, %s276
      %s291 = sphi 0, %s277
      %s295 = sphi 0, %s295
      %s297 = sphi 0, %s295
      %s298 = sphi 0, %s297
      %s312 = sphi 0, %s298
      %s316 = sphi 0, %s316
      %s318 = sphi 0, %s316
      %s319 = sphi 0, %s318
      %s333 = sphi 0, %s319
      %s337 = sphi 0, %s337
      %s339 = sphi 0, %s337
      %s340 = sphi 0, %s339
      %s354 = sphi 0, %s340
      %s358 = sphi 0, %s358
      %s360 = sphi 0, %s358
      %s361 = sphi 0, %s360
      %s375 = sphi 0, %s361
      %s379 = sphi 0, %s379
      %s381 = sphi 0, %s379
      %s382 = sphi 0, %s381
      %s396 = sphi 0, %s382
      %s400 = sphi 0, %s400
      %s402 = sphi 0, %s400
      %s403 = sphi 0, %s402
      %s417 = sphi 0, %s403
      %s423 = sphi 0, %s425
      %s426 = sphi 0, %s423
      %s427 = sphi 0, %s426
      %s443 = sphi 0, %s427
      %s449 = sphi 0, %s451
      %s452 = sphi 0, %s449
      %s453 = sphi 0, %s452
      %s469 = sphi 0, %s453
    $region4: #{grnn_forward.3} parent=1 // loop_header_branch
      %34 = sbr.rel (%p32) target = $region8
    $region5: #{grnn_forward.3} parent=1 // loop_body
      %s36 = ssub.s32 %s31, 1
      %s37 = ssub.s32 %s31, 2
      %s38 = sadd.s32 %s31, 1
      %s39 = ssub.s32 %s31, %s38
      %p40 = scmp.eq.s32.totalorder %s39, 0
      %s42 = sadd.s32 %s41, 1
      %s43 = scalar_select %p40, %s41, %s42
      %p46 = pneg %p40
      %p47 = scmp.eq.s32.totalorder %s31, 1
      %p48 = por %p46, %p47
      %p49 = scmp.ne.s32.totalorder %s41, %s44
      %p50 = scmp.eq.s32.totalorder %s31, 0
      %p51 = por %p49, %p50
      %p52 = scmp.ne.s32.totalorder %s41, %s44
      %p53 = scmp.eq.s32.totalorder %s36, 1
      %p54 = por %p52, %p53
      %p55 = scmp.ne.s32.totalorder %s44, %s45
      %p56 = scmp.eq.s32.totalorder %s36, 0
      %p57 = por %p55, %p56
      %p58 = scmp.ne.s32.totalorder %s44, %s45
      %p59 = scmp.eq.s32.totalorder %s37, 1
      %p60 = por %p58, %p59
      %p62 = scmp.ne.s32.totalorder %s45, %s61
      %p63 = scmp.eq.s32.totalorder %s37, 0
      %p64 = por %p62, %p63
      %s65 = ssub.s32 %s31, %s38
      %p66 = scmp.eq.s32.totalorder %s65, 0
      %s68 = sadd.s32 %s67, 1
      %s69 = scalar_select %p66, %s67, %s68
      %p72 = pneg %p66
      %p73 = scmp.eq.s32.totalorder %s31, 1
      %p74 = por %p72, %p73
      %p75 = scmp.ne.s32.totalorder %s67, %s70
      %p76 = scmp.eq.s32.totalorder %s31, 0
      %p77 = por %p75, %p76
      %p78 = scmp.ne.s32.totalorder %s67, %s70
      %p79 = scmp.eq.s32.totalorder %s36, 1
      %p80 = por %p78, %p79
      %p81 = scmp.ne.s32.totalorder %s70, %s71
      %p82 = scmp.eq.s32.totalorder %s36, 0
      %p83 = por %p81, %p82
      %p84 = scmp.ne.s32.totalorder %s70, %s71
      %p85 = scmp.eq.s32.totalorder %s37, 1
      %p86 = por %p84, %p85
      %p88 = scmp.ne.s32.totalorder %s71, %s87
      %p89 = scmp.eq.s32.totalorder %s37, 0
      %p90 = por %p88, %p89
      %s91 = ssub.s32 %s31, %s38
      %p92 = scmp.eq.s32.totalorder %s91, 0
      %s94 = sadd.s32 %s93, 1
      %s95 = scalar_select %p92, %s93, %s94
      %p98 = pneg %p92
      %p99 = scmp.eq.s32.totalorder %s31, 1
      %p100 = por %p98, %p99
      %p101 = scmp.ne.s32.totalorder %s93, %s96
      %p102 = scmp.eq.s32.totalorder %s31, 0
      %p103 = por %p101, %p102
      %p104 = scmp.ne.s32.totalorder %s93, %s96
      %p105 = scmp.eq.s32.totalorder %s36, 1
      %p106 = por %p104, %p105
      %p107 = scmp.ne.s32.totalorder %s96, %s97
      %p108 = scmp.eq.s32.totalorder %s36, 0
      %p109 = por %p107, %p108
      %p110 = scmp.ne.s32.totalorder %s96, %s97
      %p111 = scmp.eq.s32.totalorder %s37, 1
      %p112 = por %p110, %p111
      %p114 = scmp.ne.s32.totalorder %s97, %s113
      %p115 = scmp.eq.s32.totalorder %s37, 0
      %p116 = por %p114, %p115
      %s118 = sadd.s32 %s117, 1
      %p121 = scmp.eq.s32.totalorder %s31, 1
      %p122 = scmp.ne.s32.totalorder %s117, %s119
      %p123 = scmp.eq.s32.totalorder %s31, 0
      %p124 = por %p122, %p123
      %p125 = scmp.ne.s32.totalorder %s117, %s119
      %p126 = scmp.eq.s32.totalorder %s36, 1
      %p127 = por %p125, %p126
      %p128 = scmp.ne.s32.totalorder %s119, %s120
      %p129 = scmp.eq.s32.totalorder %s36, 0
      %p130 = por %p128, %p129
      %p131 = scmp.ne.s32.totalorder %s119, %s120
      %p132 = scmp.eq.s32.totalorder %s37, 1
      %p133 = por %p131, %p132
      %p135 = scmp.ne.s32.totalorder %s120, %s134
      %p136 = scmp.eq.s32.totalorder %s37, 0
      %p137 = por %p135, %p136
      %s139 = sadd.s32 %s138, 1
      %p142 = scmp.eq.s32.totalorder %s31, 1
      %p143 = scmp.ne.s32.totalorder %s138, %s140
      %p144 = scmp.eq.s32.totalorder %s31, 0
      %p145 = por %p143, %p144
      %p146 = scmp.ne.s32.totalorder %s138, %s140
      %p147 = scmp.eq.s32.totalorder %s36, 1
      %p148 = por %p146, %p147
      %p149 = scmp.ne.s32.totalorder %s140, %s141
      %p150 = scmp.eq.s32.totalorder %s36, 0
      %p151 = por %p149, %p150
      %p152 = scmp.ne.s32.totalorder %s140, %s141
      %p153 = scmp.eq.s32.totalorder %s37, 1
      %p154 = por %p152, %p153
      %p156 = scmp.ne.s32.totalorder %s141, %s155
      %p157 = scmp.eq.s32.totalorder %s37, 0
      %p158 = por %p156, %p157
      %s159 = ssub.s32 %s31, %s38
      %p160 = scmp.eq.s32.totalorder %s159, 0
      %s162 = sadd.s32 %s161, 1
      %s163 = scalar_select %p160, %s161, %s162
      %p166 = pneg %p160
      %p167 = scmp.eq.s32.totalorder %s31, 1
      %p168 = por %p166, %p167
      %p169 = scmp.ne.s32.totalorder %s161, %s164
      %p170 = scmp.eq.s32.totalorder %s31, 0
      %p171 = por %p169, %p170
      %p172 = scmp.ne.s32.totalorder %s161, %s164
      %p173 = scmp.eq.s32.totalorder %s36, 1
      %p174 = por %p172, %p173
      %p175 = scmp.ne.s32.totalorder %s164, %s165
      %p176 = scmp.eq.s32.totalorder %s36, 0
      %p177 = por %p175, %p176
      %p178 = scmp.ne.s32.totalorder %s164, %s165
      %p179 = scmp.eq.s32.totalorder %s37, 1
      %p180 = por %p178, %p179
      %p182 = scmp.ne.s32.totalorder %s165, %s181
      %p183 = scmp.eq.s32.totalorder %s37, 0
      %p184 = por %p182, %p183
      %s185 = ssub.s32 %s31, %s38
      %p186 = scmp.eq.s32.totalorder %s185, 0
      %s188 = sadd.s32 %s187, 1
      %s189 = scalar_select %p186, %s187, %s188
      %p192 = pneg %p186
      %p193 = scmp.eq.s32.totalorder %s31, 1
      %p194 = por %p192, %p193
      %p195 = scmp.ne.s32.totalorder %s187, %s190
      %p196 = scmp.eq.s32.totalorder %s31, 0
      %p197 = por %p195, %p196
      %p198 = scmp.ne.s32.totalorder %s187, %s190
      %p199 = scmp.eq.s32.totalorder %s36, 1
      %p200 = por %p198, %p199
      %p201 = scmp.ne.s32.totalorder %s190, %s191
      %p202 = scmp.eq.s32.totalorder %s36, 0
      %p203 = por %p201, %p202
      %p204 = scmp.ne.s32.totalorder %s190, %s191
      %p205 = scmp.eq.s32.totalorder %s37, 1
      %p206 = por %p204, %p205
      %p208 = scmp.ne.s32.totalorder %s191, %s207
      %p209 = scmp.eq.s32.totalorder %s37, 0
      %p210 = por %p208, %p209
      %s212 = sadd.s32 %s211, 1
      %p215 = scmp.eq.s32.totalorder %s31, 1
      %p216 = scmp.ne.s32.totalorder %s211, %s213
      %p217 = scmp.eq.s32.totalorder %s31, 0
      %p218 = por %p216, %p217
      %p219 = scmp.ne.s32.totalorder %s211, %s213
      %p220 = scmp.eq.s32.totalorder %s36, 1
      %p221 = por %p219, %p220
      %p222 = scmp.ne.s32.totalorder %s213, %s214
      %p223 = scmp.eq.s32.totalorder %s36, 0
      %p224 = por %p222, %p223
      %p225 = scmp.ne.s32.totalorder %s213, %s214
      %p226 = scmp.eq.s32.totalorder %s37, 1
      %p227 = por %p225, %p226
      %p229 = scmp.ne.s32.totalorder %s214, %s228
      %p230 = scmp.eq.s32.totalorder %s37, 0
      %p231 = por %p229, %p230
      %s233 = sadd.s32 %s232, 1
      %p236 = scmp.eq.s32.totalorder %s31, 1
      %p237 = scmp.ne.s32.totalorder %s232, %s234
      %p238 = scmp.eq.s32.totalorder %s31, 0
      %p239 = por %p237, %p238
      %p240 = scmp.ne.s32.totalorder %s232, %s234
      %p241 = scmp.eq.s32.totalorder %s36, 1
      %p242 = por %p240, %p241
      %p243 = scmp.ne.s32.totalorder %s234, %s235
      %p244 = scmp.eq.s32.totalorder %s36, 0
      %p245 = por %p243, %p244
      %p246 = scmp.ne.s32.totalorder %s234, %s235
      %p247 = scmp.eq.s32.totalorder %s37, 1
      %p248 = por %p246, %p247
      %p250 = scmp.ne.s32.totalorder %s235, %s249
      %p251 = scmp.eq.s32.totalorder %s37, 0
      %p252 = por %p250, %p251
      %s254 = sadd.s32 %s253, 1
      %p257 = scmp.eq.s32.totalorder %s31, 1
      %p258 = scmp.ne.s32.totalorder %s253, %s255
      %p259 = scmp.eq.s32.totalorder %s31, 0
      %p260 = por %p258, %p259
      %p261 = scmp.ne.s32.totalorder %s253, %s255
      %p262 = scmp.eq.s32.totalorder %s36, 1
      %p263 = por %p261, %p262
      %p264 = scmp.ne.s32.totalorder %s255, %s256
      %p265 = scmp.eq.s32.totalorder %s36, 0
      %p266 = por %p264, %p265
      %p267 = scmp.ne.s32.totalorder %s255, %s256
      %p268 = scmp.eq.s32.totalorder %s37, 1
      %p269 = por %p267, %p268
      %p271 = scmp.ne.s32.totalorder %s256, %s270
      %p272 = scmp.eq.s32.totalorder %s37, 0
      %p273 = por %p271, %p272
      %s275 = sadd.s32 %s274, 1
      %p278 = scmp.eq.s32.totalorder %s31, 1
      %p279 = scmp.ne.s32.totalorder %s274, %s276
      %p280 = scmp.eq.s32.totalorder %s31, 0
      %p281 = por %p279, %p280
      %p282 = scmp.ne.s32.totalorder %s274, %s276
      %p283 = scmp.eq.s32.totalorder %s36, 1
      %p284 = por %p282, %p283
      %p285 = scmp.ne.s32.totalorder %s276, %s277
      %p286 = scmp.eq.s32.totalorder %s36, 0
      %p287 = por %p285, %p286
      %p288 = scmp.ne.s32.totalorder %s276, %s277
      %p289 = scmp.eq.s32.totalorder %s37, 1
      %p290 = por %p288, %p289
      %p292 = scmp.ne.s32.totalorder %s277, %s291
      %p293 = scmp.eq.s32.totalorder %s37, 0
      %p294 = por %p292, %p293
      %s296 = sadd.s32 %s295, 1
      %p299 = scmp.eq.s32.totalorder %s31, 1
      %p300 = scmp.ne.s32.totalorder %s295, %s297
      %p301 = scmp.eq.s32.totalorder %s31, 0
      %p302 = por %p300, %p301
      %p303 = scmp.ne.s32.totalorder %s295, %s297
      %p304 = scmp.eq.s32.totalorder %s36, 1
      %p305 = por %p303, %p304
      %p306 = scmp.ne.s32.totalorder %s297, %s298
      %p307 = scmp.eq.s32.totalorder %s36, 0
      %p308 = por %p306, %p307
      %p309 = scmp.ne.s32.totalorder %s297, %s298
      %p310 = scmp.eq.s32.totalorder %s37, 1
      %p311 = por %p309, %p310
      %p313 = scmp.ne.s32.totalorder %s298, %s312
      %p314 = scmp.eq.s32.totalorder %s37, 0
      %p315 = por %p313, %p314
      %s317 = sadd.s32 %s316, 1
      %p320 = scmp.eq.s32.totalorder %s31, 1
      %p321 = scmp.ne.s32.totalorder %s316, %s318
      %p322 = scmp.eq.s32.totalorder %s31, 0
      %p323 = por %p321, %p322
      %p324 = scmp.ne.s32.totalorder %s316, %s318
      %p325 = scmp.eq.s32.totalorder %s36, 1
      %p326 = por %p324, %p325
      %p327 = scmp.ne.s32.totalorder %s318, %s319
      %p328 = scmp.eq.s32.totalorder %s36, 0
      %p329 = por %p327, %p328
      %p330 = scmp.ne.s32.totalorder %s318, %s319
      %p331 = scmp.eq.s32.totalorder %s37, 1
      %p332 = por %p330, %p331
      %p334 = scmp.ne.s32.totalorder %s319, %s333
      %p335 = scmp.eq.s32.totalorder %s37, 0
      %p336 = por %p334, %p335
      %s338 = sadd.s32 %s337, 1
      %p341 = scmp.eq.s32.totalorder %s31, 1
      %p342 = scmp.ne.s32.totalorder %s337, %s339
      %p343 = scmp.eq.s32.totalorder %s31, 0
      %p344 = por %p342, %p343
      %p345 = scmp.ne.s32.totalorder %s337, %s339
      %p346 = scmp.eq.s32.totalorder %s36, 1
      %p347 = por %p345, %p346
      %p348 = scmp.ne.s32.totalorder %s339, %s340
      %p349 = scmp.eq.s32.totalorder %s36, 0
      %p350 = por %p348, %p349
      %p351 = scmp.ne.s32.totalorder %s339, %s340
      %p352 = scmp.eq.s32.totalorder %s37, 1
      %p353 = por %p351, %p352
      %p355 = scmp.ne.s32.totalorder %s340, %s354
      %p356 = scmp.eq.s32.totalorder %s37, 0
      %p357 = por %p355, %p356
      %s359 = sadd.s32 %s358, 1
      %p362 = scmp.eq.s32.totalorder %s31, 1
      %p363 = scmp.ne.s32.totalorder %s358, %s360
      %p364 = scmp.eq.s32.totalorder %s31, 0
      %p365 = por %p363, %p364
      %p366 = scmp.ne.s32.totalorder %s358, %s360
      %p367 = scmp.eq.s32.totalorder %s36, 1
      %p368 = por %p366, %p367
      %p369 = scmp.ne.s32.totalorder %s360, %s361
      %p370 = scmp.eq.s32.totalorder %s36, 0
      %p371 = por %p369, %p370
      %p372 = scmp.ne.s32.totalorder %s360, %s361
      %p373 = scmp.eq.s32.totalorder %s37, 1
      %p374 = por %p372, %p373
      %p376 = scmp.ne.s32.totalorder %s361, %s375
      %p377 = scmp.eq.s32.totalorder %s37, 0
      %p378 = por %p376, %p377
      %s380 = sadd.s32 %s379, 1
      %p383 = scmp.eq.s32.totalorder %s31, 1
      %p384 = scmp.ne.s32.totalorder %s379, %s381
      %p385 = scmp.eq.s32.totalorder %s31, 0
      %p386 = por %p384, %p385
      %p387 = scmp.ne.s32.totalorder %s379, %s381
      %p388 = scmp.eq.s32.totalorder %s36, 1
      %p389 = por %p387, %p388
      %p390 = scmp.ne.s32.totalorder %s381, %s382
      %p391 = scmp.eq.s32.totalorder %s36, 0
      %p392 = por %p390, %p391
      %p393 = scmp.ne.s32.totalorder %s381, %s382
      %p394 = scmp.eq.s32.totalorder %s37, 1
      %p395 = por %p393, %p394
      %p397 = scmp.ne.s32.totalorder %s382, %s396
      %p398 = scmp.eq.s32.totalorder %s37, 0
      %p399 = por %p397, %p398
      %s401 = sadd.s32 %s400, 1
      %p404 = scmp.eq.s32.totalorder %s31, 1
      %p405 = scmp.ne.s32.totalorder %s400, %s402
      %p406 = scmp.eq.s32.totalorder %s31, 0
      %p407 = por %p405, %p406
      %p408 = scmp.ne.s32.totalorder %s400, %s402
      %p409 = scmp.eq.s32.totalorder %s36, 1
      %p410 = por %p408, %p409
      %p411 = scmp.ne.s32.totalorder %s402, %s403
      %p412 = scmp.eq.s32.totalorder %s36, 0
      %p413 = por %p411, %p412
      %p414 = scmp.ne.s32.totalorder %s402, %s403
      %p415 = scmp.eq.s32.totalorder %s37, 1
      %p416 = por %p414, %p415
      %p418 = scmp.ne.s32.totalorder %s403, %s417
      %p419 = scmp.eq.s32.totalorder %s37, 0
      %p420 = por %p418, %p419
      %s421 = ssub.s32 %s31, %s38
      %p422 = scmp.eq.s32.totalorder %s421, 0
      %s424 = sadd.s32 %s423, 1
      %s425 = scalar_select %p422, %s423, %s424
      %p428 = pneg %p422
      %p429 = scmp.eq.s32.totalorder %s31, 1
      %p430 = por %p428, %p429
      %p431 = scmp.ne.s32.totalorder %s423, %s426
      %p432 = scmp.eq.s32.totalorder %s31, 0
      %p433 = por %p431, %p432
      %p434 = scmp.ne.s32.totalorder %s423, %s426
      %p435 = scmp.eq.s32.totalorder %s36, 1
      %p436 = por %p434, %p435
      %p437 = scmp.ne.s32.totalorder %s426, %s427
      %p438 = scmp.eq.s32.totalorder %s36, 0
      %p439 = por %p437, %p438
      %p440 = scmp.ne.s32.totalorder %s426, %s427
      %p441 = scmp.eq.s32.totalorder %s37, 1
      %p442 = por %p440, %p441
      %p444 = scmp.ne.s32.totalorder %s427, %s443
      %p445 = scmp.eq.s32.totalorder %s37, 0
      %p446 = por %p444, %p445
      %s447 = ssub.s32 %s31, %s38
      %p448 = scmp.eq.s32.totalorder %s447, 0
      %s450 = sadd.s32 %s449, 1
      %s451 = scalar_select %p448, %s449, %s450
      %p454 = pneg %p448
      %p455 = scmp.eq.s32.totalorder %s31, 1
      %p456 = por %p454, %p455
      %p457 = scmp.ne.s32.totalorder %s449, %s452
      %p458 = scmp.eq.s32.totalorder %s31, 0
      %p459 = por %p457, %p458
      %p460 = scmp.ne.s32.totalorder %s449, %s452
      %p461 = scmp.eq.s32.totalorder %s36, 1
      %p462 = por %p460, %p461
      %p463 = scmp.ne.s32.totalorder %s452, %s453
      %p464 = scmp.eq.s32.totalorder %s36, 0
      %p465 = por %p463, %p464
      %p466 = scmp.ne.s32.totalorder %s452, %s453
      %p467 = scmp.eq.s32.totalorder %s37, 1
      %p468 = por %p466, %p467
      %p470 = scmp.ne.s32.totalorder %s453, %s469
      %p471 = scmp.eq.s32.totalorder %s37, 0
      %p472 = por %p470, %p471
      %p473 = scmp.le.s32.totalorder 1, %s31
      %p474 = scmp.lt.s32.totalorder %s31, 3
      %p475 = pnand %p473, %p474
      %p476 = pneg %p475
      // Predicated region
      $region9: #{grnn_forward.3} parent=5 // pred_check
        _
      $region10: #{grnn_forward.3} parent=5 // pred_check_branch
        %478 = sbr.rel (%p475) target = $region12
      $region11: #{grnn_forward.3} parent=5 // pred_region
        %s479 = ssub.s32 %s31, 1
        // Predicated region
        $region13: #{grnn_forward.3} parent=11 // pred_check
          %p480 = pneg %p130
        $region14: #{grnn_forward.3} parent=11 // pred_check_branch
          %482 = sbr.rel (%p480) target = $region16
        $region15: #{grnn_forward.3} parent=11 // pred_region
          _
        $region16: #{grnn_forward.3} parent=11 // pred_fallthru
          _
        // Predicated region
        $region17: #{grnn_forward.3} parent=11 // pred_check
          %p483 = pneg %p151
        $region18: #{grnn_forward.3} parent=11 // pred_check_branch
          %485 = sbr.rel (%p483) target = $region20
        $region19: #{grnn_forward.3} parent=11 // pred_region
          _
        $region20: #{grnn_forward.3} parent=11 // pred_fallthru
          _
        // Predicated region
        $region21: #{grnn_forward.3} parent=11 // pred_check
          %p486 = pneg %p224
        $region22: #{grnn_forward.3} parent=11 // pred_check_branch
          %488 = sbr.rel (%p486) target = $region24
        $region23: #{grnn_forward.3} parent=11 // pred_region
          _
        $region24: #{grnn_forward.3} parent=11 // pred_fallthru
          _
        // Predicated region
        $region25: #{grnn_forward.3} parent=11 // pred_check
          %p489 = pneg %p245
        $region26: #{grnn_forward.3} parent=11 // pred_check_branch
          %491 = sbr.rel (%p489) target = $region28
        $region27: #{grnn_forward.3} parent=11 // pred_region
          _
        $region28: #{grnn_forward.3} parent=11 // pred_fallthru
          _
        // Predicated region
        $region29: #{grnn_forward.3} parent=11 // pred_check
          %p492 = pneg %p266
        $region30: #{grnn_forward.3} parent=11 // pred_check_branch
          %494 = sbr.rel (%p492) target = $region32
        $region31: #{grnn_forward.3} parent=11 // pred_region
          _
        $region32: #{grnn_forward.3} parent=11 // pred_fallthru
          _
        // Predicated region
        $region33: #{grnn_forward.3} parent=11 // pred_check
          %p495 = pneg %p287
        $region34: #{grnn_forward.3} parent=11 // pred_check_branch
          %497 = sbr.rel (%p495) target = $region36
        $region35: #{grnn_forward.3} parent=11 // pred_region
          _
        $region36: #{grnn_forward.3} parent=11 // pred_fallthru
          _
        // Predicated region
        $region37: #{grnn_forward.3} parent=11 // pred_check
          %p498 = pneg %p308
        $region38: #{grnn_forward.3} parent=11 // pred_check_branch
          %500 = sbr.rel (%p498) target = $region40
        $region39: #{grnn_forward.3} parent=11 // pred_region
          _
        $region40: #{grnn_forward.3} parent=11 // pred_fallthru
          _
        // Predicated region
        $region41: #{grnn_forward.3} parent=11 // pred_check
          %p501 = pneg %p329
        $region42: #{grnn_forward.3} parent=11 // pred_check_branch
          %503 = sbr.rel (%p501) target = $region44
        $region43: #{grnn_forward.3} parent=11 // pred_region
          _
        $region44: #{grnn_forward.3} parent=11 // pred_fallthru
          _
        // Predicated region
        $region45: #{grnn_forward.3} parent=11 // pred_check
          %p504 = pneg %p350
        $region46: #{grnn_forward.3} parent=11 // pred_check_branch
          %506 = sbr.rel (%p504) target = $region48
        $region47: #{grnn_forward.3} parent=11 // pred_region
          _
        $region48: #{grnn_forward.3} parent=11 // pred_fallthru
          _
        // Predicated region
        $region49: #{grnn_forward.3} parent=11 // pred_check
          %p507 = pneg %p371
        $region50: #{grnn_forward.3} parent=11 // pred_check_branch
          %509 = sbr.rel (%p507) target = $region52
        $region51: #{grnn_forward.3} parent=11 // pred_region
          _
        $region52: #{grnn_forward.3} parent=11 // pred_fallthru
          _
        // Predicated region
        $region53: #{grnn_forward.3} parent=11 // pred_check
          %p510 = pneg %p392
        $region54: #{grnn_forward.3} parent=11 // pred_check_branch
          %512 = sbr.rel (%p510) target = $region56
        $region55: #{grnn_forward.3} parent=11 // pred_region
          _
        $region56: #{grnn_forward.3} parent=11 // pred_fallthru
          _
        // Predicated region
        $region57: #{grnn_forward.3} parent=11 // pred_check
          %p513 = pneg %p413
        $region58: #{grnn_forward.3} parent=11 // pred_check_branch
          %515 = sbr.rel (%p513) target = $region60
        $region59: #{grnn_forward.3} parent=11 // pred_region
          _
        $region60: #{grnn_forward.3} parent=11 // pred_fallthru
          _
      $region12: #{grnn_forward.3} parent=5 // pred_fallthru
        _
      %p516 = scmp.lt.s32.totalorder %s31, 2
      // Predicated region
      $region61: #{grnn_forward.3} parent=5 // pred_check
        %p517 = pneg %p516
      $region62: #{grnn_forward.3} parent=5 // pred_check_branch
        %519 = sbr.rel (%p517) target = $region64
      $region63: #{grnn_forward.3} parent=5 // pred_region
        // Predicated region
        $region65: #{grnn_forward.3} parent=63 // pred_check
          %p520 = pneg %p51
        $region66: #{grnn_forward.3} parent=63 // pred_check_branch
          %522 = sbr.rel (%p520) target = $region68
        $region67: #{grnn_forward.3} parent=63 // pred_region
          %s523 = smul.u32 16, %s31
          %p524 = scmp.lt.s32.totalorder %s523, 31
          %s525 = scalar_select %p524, %s523, 31
          %s526 = smul.addr %s525, 8
          %s527 = scalar_lea.vmem %s0, %s526
          %s528 = smul.u32 16, %s31
        $region68: #{grnn_forward.3} parent=63 // pred_fallthru
          _
        // Predicated region
        $region69: #{grnn_forward.3} parent=63 // pred_check
          %p529 = pneg %p77
        $region70: #{grnn_forward.3} parent=63 // pred_check_branch
          %531 = sbr.rel (%p529) target = $region72
        $region71: #{grnn_forward.3} parent=63 // pred_region
          %s532 = smul.u32 16, %s31
          %p533 = scmp.lt.s32.totalorder %s532, 31
          %s534 = scalar_select %p533, %s532, 31
          %s535 = smul.addr %s534, 8
          %s536 = scalar_lea.vmem %s1, %s535
          %s537 = smul.u32 16, %s31
        $region72: #{grnn_forward.3} parent=63 // pred_fallthru
          _
        // Predicated region
        $region73: #{grnn_forward.3} parent=63 // pred_check
          %p538 = pneg %p103
        $region74: #{grnn_forward.3} parent=63 // pred_check_branch
          %540 = sbr.rel (%p538) target = $region76
        $region75: #{grnn_forward.3} parent=63 // pred_region
          %s541 = smul.u32 16, %s31
          %p542 = scmp.lt.s32.totalorder %s541, 31
          %s543 = scalar_select %p542, %s541, 31
          %s544 = smul.addr %s543, 8
          %s545 = scalar_lea.vmem %s2, %s544
          %s546 = smul.u32 16, %s31
        $region76: #{grnn_forward.3} parent=63 // pred_fallthru
          _
        // Predicated region
        $region77: #{grnn_forward.3} parent=63 // pred_check
          %p547 = pneg %p171
        $region78: #{grnn_forward.3} parent=63 // pred_check_branch
          %549 = sbr.rel (%p547) target = $region80
        $region79: #{grnn_forward.3} parent=63 // pred_region
          %p550 = scmp.lt.s32.totalorder %s31, 1
          %s551 = scalar_select %p550, %s31, 1
          %s552 = smul.addr %s551, 8
          %s553 = scalar_lea.vmem %s5, %s552
        $region80: #{grnn_forward.3} parent=63 // pred_fallthru
          _
        // Predicated region
        $region81: #{grnn_forward.3} parent=63 // pred_check
          %p554 = pneg %p197
        $region82: #{grnn_forward.3} parent=63 // pred_check_branch
          %556 = sbr.rel (%p554) target = $region84
        $region83: #{grnn_forward.3} parent=63 // pred_region
          %p557 = scmp.lt.s32.totalorder %s31, 1
          %s558 = scalar_select %p557, %s31, 1
          %s559 = smul.addr %s558, 8
          %s560 = scalar_lea.vmem %s6, %s559
        $region84: #{grnn_forward.3} parent=63 // pred_fallthru
          _
      $region64: #{grnn_forward.3} parent=5 // pred_fallthru
        _
      %p561 = scmp.le.s32.totalorder 1, %s31
      %p562 = scmp.lt.s32.totalorder %s31, 3
      %p563 = pnand %p561, %p562
      %p564 = pneg %p563
      // Predicated region
      $region85: #{grnn_forward.3} parent=5 // pred_check
        _
      $region86: #{grnn_forward.3} parent=5 // pred_check_branch
        %566 = sbr.rel (%p563) target = $region88
      $region87: #{grnn_forward.3} parent=5 // pred_region
        %s567 = ssub.s32 %s31, 1
        %s568 = smul.u32 16, %s36
        %p569 = scmp.lt.s32.totalorder %s568, 31
        %s570 = scalar_select %p569, %s568, 31
        %s571 = smul.addr %s570, 8
        %s572 = scalar_lea.vmem %s0, %s571
        %p573 = pneg %p57
        %p574 = pneg %p54
        %s575 = smul.u32 16, %s36
        %p576 = scmp.lt.s32.totalorder %s575, 31
        %s577 = scalar_select %p576, %s575, 31
        %s578 = smul.addr %s577, 8
        %s579 = scalar_lea.vmem %s1, %s578
        %p580 = pneg %p83
        %p581 = pneg %p80
        %s582 = smul.u32 16, %s36
        %p583 = scmp.lt.s32.totalorder %s582, 31
        %s584 = scalar_select %p583, %s582, 31
        %s585 = smul.addr %s584, 8
        %s586 = scalar_lea.vmem %s2, %s585
        %p587 = pneg %p109
        %p588 = pneg %p106
        %p589 = pneg %p130
        %p590 = pneg %p127
        %p591 = pneg %p151
        %p592 = pneg %p148
        %p593 = scmp.lt.s32.totalorder %s36, 1
        %s594 = scalar_select %p593, %s36, 1
        %s595 = smul.addr %s594, 8
        %s596 = scalar_lea.vmem %s5, %s595
        %p597 = pneg %p177
        %p598 = pneg %p174
        %p599 = scmp.lt.s32.totalorder %s36, 1
        %s600 = scalar_select %p599, %s36, 1
        %s601 = smul.addr %s600, 8
        %s602 = scalar_lea.vmem %s6, %s601
        %p603 = pneg %p203
        %p604 = pneg %p200
        %p605 = pneg %p224
        %p606 = pneg %p221
        %p607 = pneg %p245
        %p608 = pneg %p242
        %p609 = pneg %p266
        %p610 = pneg %p263
        %p611 = pneg %p287
        %p612 = pneg %p284
        %p613 = pneg %p308
        %p614 = pneg %p305
        %p615 = pneg %p329
        %p616 = pneg %p326
        %p617 = pneg %p350
        %p618 = pneg %p347
        %p619 = pneg %p371
        %p620 = pneg %p368
        %p621 = pneg %p392
        %p622 = pneg %p389
        %p623 = pneg %p413
        %p624 = pneg %p410
        %p625 = pneg %p439
        %p626 = pneg %p436
        %s627 = sand.u32 %s426, 1
        %s628 = scalar_lea.sflag [#allocation3], %s627
        %s629 = sand.u32 %s426, 1
        %s630 = smul.addr %s629, 8
        %s631 = scalar_lea.vmem [#allocation2], %s630
        %p632 = pneg %p465
        %p633 = pneg %p462
        %s634 = sand.u32 %s452, 1
        %s635 = scalar_lea.sflag [#allocation5], %s634
        %s636 = sand.u32 %s452, 1
        %s637 = smul.addr %s636, 8
        %s638 = scalar_lea.vmem [#allocation4], %s637
        %s639 = smul.u32 16, %s36
        %p640 = scmp.lt.s32.totalorder %s639, 31
        %s641 = scalar_select %p640, %s639, 31
        %s642 = smul.addr %s641, 8
        %s643 = scalar_lea.vmem %s0, %s642
        %s644 = smul.u32 16, %s36
        %s645 = smul.u32 16, %s36
        %p646 = scmp.lt.s32.totalorder %s645, 31
        %s647 = scalar_select %p646, %s645, 31
        %s648 = smul.addr %s647, 8
        %s649 = scalar_lea.vmem %s1, %s648
        %s650 = smul.u32 16, %s36
        %s651 = smul.u32 16, %s36
        %p652 = scmp.lt.s32.totalorder %s651, 31
        %s653 = scalar_select %p652, %s651, 31
        %s654 = smul.addr %s653, 8
        %s655 = scalar_lea.vmem %s2, %s654
        %s656 = smul.u32 16, %s36
        %p657 = scmp.lt.s32.totalorder %s36, 1
        %s658 = scalar_select %p657, %s36, 1
        %s659 = smul.addr %s658, 8
        %s660 = scalar_lea.vmem %s5, %s659
        %p661 = scmp.lt.s32.totalorder %s36, 1
        %s662 = scalar_select %p661, %s36, 1
        %s663 = smul.addr %s662, 8
        %s664 = scalar_lea.vmem %s6, %s663
        %v665 = vld [vmem:[%s643] sm:$0xff]
        %v666 = vld [vmem:[%s643 + $0x8] sm:$0xff]
        %v667 = vld [vmem:[%s643 + $0x10] sm:$0xff]
        %v668 = vld [vmem:[%s643 + $0x18] sm:$0xff]
        %v669 = vld [vmem:[%s643 + $0x20] sm:$0xff]
        %v670 = vld [vmem:[%s643 + $0x28] sm:$0xff]
        %v671 = vld [vmem:[%s643 + $0x30] sm:$0xff]
        %v672 = vld [vmem:[%s643 + $0x38] sm:$0xff]
        %v673 = vld [vmem:[%s643 + $0x40] sm:$0xff]
        %v674 = vld [vmem:[%s643 + $0x48] sm:$0xff]
        %v675 = vld [vmem:[%s643 + $0x50] sm:$0xff]
        %v676 = vld [vmem:[%s643 + $0x58] sm:$0xff]
        %v677 = vld [vmem:[%s643 + $0x60] sm:$0xff]
        %v678 = vld [vmem:[%s643 + $0x68] sm:$0xff]
        %v679 = vld [vmem:[%s643 + $0x70] sm:$0xff]
        %v680 = vld [vmem:[%s643 + $0x78] sm:$0xff]
        %vm681 = vcmask 7168
        %v682 = vsel %vm681, %v665, -inf
        %v683 = vsel %vm681, %v666, -inf
        %v684 = vmax.f32 %v682, %v683
        %v685 = vrot.slane %v684, 4
        %v686 = vmax.f32 %v684, %v685
        %v687 = vrot.slane %v686, 2
        %v688 = vmax.f32 %v686, %v687
        %v689 = vrot.slane %v688, 1
        %v690 = vmax.f32 %v688, %v689
        %v691 = vsel %vm681, %v667, -inf
        %v692 = vsel %vm681, %v668, -inf
        %v693 = vmax.f32 %v691, %v692
        %v694 = vrot.slane %v693, 4
        %v695 = vmax.f32 %v693, %v694
        %v696 = vrot.slane %v695, 2
        %v697 = vmax.f32 %v695, %v696
        %v698 = vrot.slane %v697, 1
        %v699 = vmax.f32 %v697, %v698
        %v700 = vsel %vm681, %v669, -inf
        %v701 = vsel %vm681, %v670, -inf
        %v702 = vmax.f32 %v700, %v701
        %v703 = vrot.slane %v702, 4
        %v704 = vmax.f32 %v702, %v703
        %v705 = vrot.slane %v704, 2
        %v706 = vmax.f32 %v704, %v705
        %v707 = vrot.slane %v706, 1
        %v708 = vmax.f32 %v706, %v707
        %v709 = vsel %vm681, %v671, -inf
        %v710 = vsel %vm681, %v672, -inf
        %v711 = vmax.f32 %v709, %v710
        %v712 = vrot.slane %v711, 4
        %v713 = vmax.f32 %v711, %v712
        %v714 = vrot.slane %v713, 2
        %v715 = vmax.f32 %v713, %v714
        %v716 = vrot.slane %v715, 1
        %v717 = vmax.f32 %v715, %v716
        %v718 = vsel %vm681, %v673, -inf
        %v719 = vsel %vm681, %v674, -inf
        %v720 = vmax.f32 %v718, %v719
        %v721 = vrot.slane %v720, 4
        %v722 = vmax.f32 %v720, %v721
        %v723 = vrot.slane %v722, 2
        %v724 = vmax.f32 %v722, %v723
        %v725 = vrot.slane %v724, 1
        %v726 = vmax.f32 %v724, %v725
        %v727 = vsel %vm681, %v675, -inf
        %v728 = vsel %vm681, %v676, -inf
        %v729 = vmax.f32 %v727, %v728
        %v730 = vrot.slane %v729, 4
        %v731 = vmax.f32 %v729, %v730
        %v732 = vrot.slane %v731, 2
        %v733 = vmax.f32 %v731, %v732
        %v734 = vrot.slane %v733, 1
        %v735 = vmax.f32 %v733, %v734
        %v736 = vsel %vm681, %v677, -inf
        %v737 = vsel %vm681, %v678, -inf
        %v738 = vmax.f32 %v736, %v737
        %v739 = vrot.slane %v738, 4
        %v740 = vmax.f32 %v738, %v739
        %v741 = vrot.slane %v740, 2
        %v742 = vmax.f32 %v740, %v741
        %v743 = vrot.slane %v742, 1
        %v744 = vmax.f32 %v742, %v743
        %v745 = vsel %vm681, %v679, -inf
        %v746 = vsel %vm681, %v680, -inf
        %v747 = vmax.f32 %v745, %v746
        %v748 = vrot.slane %v747, 4
        %v749 = vmax.f32 %v747, %v748
        %v750 = vrot.slane %v749, 2
        %v751 = vmax.f32 %v749, %v750
        %v752 = vrot.slane %v751, 1
        %v753 = vmax.f32 %v751, %v752
        %v754 = vsub.f32 %v665, %v690
        %v755 = vsub.f32 %v666, %v690
        %v756 = vsub.f32 %v667, %v699
        %v757 = vsub.f32 %v668, %v699
        %v758 = vsub.f32 %v669, %v708
        %v759 = vsub.f32 %v670, %v708
        %v760 = vsub.f32 %v671, %v717
        %v761 = vsub.f32 %v672, %v717
        %v762 = vsub.f32 %v673, %v726
        %v763 = vsub.f32 %v674, %v726
        %v764 = vsub.f32 %v675, %v735
        %v765 = vsub.f32 %v676, %v735
        %v766 = vsub.f32 %v677, %v744
        %v767 = vsub.f32 %v678, %v744
        %v768 = vsub.f32 %v679, %v753
        %v769 = vsub.f32 %v680, %v753
        %v770 = vmul.f32 %v754, 1.442695
        %v771 = vpow.pop %v770
        %v772 = vmul.f32 %v755, 1.442695
        %v773 = vpow.pop %v772
        %v774 = vmul.f32 %v756, 1.442695
        %v775 = vpow.pop %v774
        %v776 = vmul.f32 %v757, 1.442695
        %v777 = vpow.pop %v776
        %v778 = vmul.f32 %v758, 1.442695
        %v779 = vpow.pop %v778
        %v780 = vmul.f32 %v759, 1.442695
        %v781 = vpow.pop %v780
        %v782 = vmul.f32 %v760, 1.442695
        %v783 = vpow.pop %v782
        %v784 = vmul.f32 %v761, 1.442695
        %v785 = vpow.pop %v784
        %v786 = vmul.f32 %v762, 1.442695
        %v787 = vpow.pop %v786
        %v788 = vmul.f32 %v763, 1.442695
        %v789 = vpow.pop %v788
        %v790 = vmul.f32 %v764, 1.442695
        %v791 = vpow.pop %v790
        %v792 = vmul.f32 %v765, 1.442695
        %v793 = vpow.pop %v792
        %v794 = vmul.f32 %v766, 1.442695
        %v795 = vpow.pop %v794
        %v796 = vmul.f32 %v767, 1.442695
        %v797 = vpow.pop %v796
        %v798 = vmul.f32 %v768, 1.442695
        %v799 = vpow.pop %v798
        %v800 = vmul.f32 %v769, 1.442695
        %v801 = vpow.pop %v800
        %v802 = vsel %vm681, %v771, 0.0
        %v803 = vsel %vm681, %v773, 0.0
        %v804 = vadd.f32 %v802, %v803
        %v805 = vrot.slane %v804, 4
        %v806 = vadd.f32 %v804, %v805
        %v807 = vrot.slane %v806, 2
        %v808 = vadd.f32 %v806, %v807
        %v809 = vrot.slane %v808, 1
        %v810 = vadd.f32 %v808, %v809
        %v811 = vsel %vm681, %v775, 0.0
        %v812 = vsel %vm681, %v777, 0.0
        %v813 = vadd.f32 %v811, %v812
        %v814 = vrot.slane %v813, 4
        %v815 = vadd.f32 %v813, %v814
        %v816 = vrot.slane %v815, 2
        %v817 = vadd.f32 %v815, %v816
        %v818 = vrot.slane %v817, 1
        %v819 = vadd.f32 %v817, %v818
        %v820 = vsel %vm681, %v779, 0.0
        %v821 = vsel %vm681, %v781, 0.0
        %v822 = vadd.f32 %v820, %v821
        %v823 = vrot.slane %v822, 4
        %v824 = vadd.f32 %v822, %v823
        %v825 = vrot.slane %v824, 2
        %v826 = vadd.f32 %v824, %v825
        %v827 = vrot.slane %v826, 1
        %v828 = vadd.f32 %v826, %v827
        %v829 = vsel %vm681, %v783, 0.0
        %v830 = vsel %vm681, %v785, 0.0
        %v831 = vadd.f32 %v829, %v830
        %v832 = vrot.slane %v831, 4
        %v833 = vadd.f32 %v831, %v832
        %v834 = vrot.slane %v833, 2
        %v835 = vadd.f32 %v833, %v834
        %v836 = vrot.slane %v835, 1
        %v837 = vadd.f32 %v835, %v836
        %v838 = vsel %vm681, %v787, 0.0
        %v839 = vsel %vm681, %v789, 0.0
        %v840 = vadd.f32 %v838, %v839
        %v841 = vrot.slane %v840, 4
        %v842 = vadd.f32 %v840, %v841
        %v843 = vrot.slane %v842, 2
        %v844 = vadd.f32 %v842, %v843
        %v845 = vrot.slane %v844, 1
        %v846 = vadd.f32 %v844, %v845
        %v847 = vsel %vm681, %v791, 0.0
        %v848 = vsel %vm681, %v793, 0.0
        %v849 = vadd.f32 %v847, %v848
        %v850 = vrot.slane %v849, 4
        %v851 = vadd.f32 %v849, %v850
        %v852 = vrot.slane %v851, 2
        %v853 = vadd.f32 %v851, %v852
        %v854 = vrot.slane %v853, 1
        %v855 = vadd.f32 %v853, %v854
        %v856 = vsel %vm681, %v795, 0.0
        %v857 = vsel %vm681, %v797, 0.0
        %v858 = vadd.f32 %v856, %v857
        %v859 = vrot.slane %v858, 4
        %v860 = vadd.f32 %v858, %v859
        %v861 = vrot.slane %v860, 2
        %v862 = vadd.f32 %v860, %v861
        %v863 = vrot.slane %v862, 1
        %v864 = vadd.f32 %v862, %v863
        %v865 = vsel %vm681, %v799, 0.0
        %v866 = vsel %vm681, %v801, 0.0
        %v867 = vadd.f32 %v865, %v866
        %v868 = vrot.slane %v867, 4
        %v869 = vadd.f32 %v867, %v868
        %v870 = vrot.slane %v869, 2
        %v871 = vadd.f32 %v869, %v870
        %v872 = vrot.slane %v871, 1
        %v873 = vadd.f32 %v871, %v872
        %v874 = vrcp.pop %v810
        %v875 = vrcp.pop %v819
        %v876 = vrcp.pop %v828
        %v877 = vrcp.pop %v837
        %v878 = vrcp.pop %v846
        %v879 = vrcp.pop %v855
        %v880 = vrcp.pop %v864
        %v881 = vrcp.pop %v873
        %v882 = vld [vmem:[%s649] sm:$0xff]
        %v883 = vld [vmem:[%s649 + $0x8] sm:$0xff]
        %v884 = vld [vmem:[%s649 + $0x10] sm:$0xff]
        %v885 = vld [vmem:[%s649 + $0x18] sm:$0xff]
        %v886 = vld [vmem:[%s649 + $0x20] sm:$0xff]
        %v887 = vld [vmem:[%s649 + $0x28] sm:$0xff]
        %v888 = vld [vmem:[%s649 + $0x30] sm:$0xff]
        %v889 = vld [vmem:[%s649 + $0x38] sm:$0xff]
        %v890 = vld [vmem:[%s649 + $0x40] sm:$0xff]
        %v891 = vld [vmem:[%s649 + $0x48] sm:$0xff]
        %v892 = vld [vmem:[%s649 + $0x50] sm:$0xff]
        %v893 = vld [vmem:[%s649 + $0x58] sm:$0xff]
        %v894 = vld [vmem:[%s649 + $0x60] sm:$0xff]
        %v895 = vld [vmem:[%s649 + $0x68] sm:$0xff]
        %v896 = vld [vmem:[%s649 + $0x70] sm:$0xff]
        %v897 = vld [vmem:[%s649 + $0x78] sm:$0xff]
        %v898 = vsel %vm681, %v882, -inf
        %v899 = vsel %vm681, %v883, -inf
        %v900 = vmax.f32 %v898, %v899
        %v901 = vrot.slane %v900, 4
        %v902 = vmax.f32 %v900, %v901
        %v903 = vrot.slane %v902, 2
        %v904 = vmax.f32 %v902, %v903
        %v905 = vrot.slane %v904, 1
        %v906 = vmax.f32 %v904, %v905
        %v907 = vsel %vm681, %v884, -inf
        %v908 = vsel %vm681, %v885, -inf
        %v909 = vmax.f32 %v907, %v908
        %v910 = vrot.slane %v909, 4
        %v911 = vmax.f32 %v909, %v910
        %v912 = vrot.slane %v911, 2
        %v913 = vmax.f32 %v911, %v912
        %v914 = vrot.slane %v913, 1
        %v915 = vmax.f32 %v913, %v914
        %v916 = vsel %vm681, %v886, -inf
        %v917 = vsel %vm681, %v887, -inf
        %v918 = vmax.f32 %v916, %v917
        %v919 = vrot.slane %v918, 4
        %v920 = vmax.f32 %v918, %v919
        %v921 = vrot.slane %v920, 2
        %v922 = vmax.f32 %v920, %v921
        %v923 = vrot.slane %v922, 1
        %v924 = vmax.f32 %v922, %v923
        %v925 = vsel %vm681, %v888, -inf
        %v926 = vsel %vm681, %v889, -inf
        %v927 = vmax.f32 %v925, %v926
        %v928 = vrot.slane %v927, 4
        %v929 = vmax.f32 %v927, %v928
        %v930 = vrot.slane %v929, 2
        %v931 = vmax.f32 %v929, %v930
        %v932 = vrot.slane %v931, 1
        %v933 = vmax.f32 %v931, %v932
        %v934 = vsel %vm681, %v890, -inf
        %v935 = vsel %vm681, %v891, -inf
        %v936 = vmax.f32 %v934, %v935
        %v937 = vrot.slane %v936, 4
        %v938 = vmax.f32 %v936, %v937
        %v939 = vrot.slane %v938, 2
        %v940 = vmax.f32 %v938, %v939
        %v941 = vrot.slane %v940, 1
        %v942 = vmax.f32 %v940, %v941
        %v943 = vsel %vm681, %v892, -inf
        %v944 = vsel %vm681, %v893, -inf
        %v945 = vmax.f32 %v943, %v944
        %v946 = vrot.slane %v945, 4
        %v947 = vmax.f32 %v945, %v946
        %v948 = vrot.slane %v947, 2
        %v949 = vmax.f32 %v947, %v948
        %v950 = vrot.slane %v949, 1
        %v951 = vmax.f32 %v949, %v950
        %v952 = vsel %vm681, %v894, -inf
        %v953 = vsel %vm681, %v895, -inf
        %v954 = vmax.f32 %v952, %v953
        %v955 = vrot.slane %v954, 4
        %v956 = vmax.f32 %v954, %v955
        %v957 = vrot.slane %v956, 2
        %v958 = vmax.f32 %v956, %v957
        %v959 = vrot.slane %v958, 1
        %v960 = vmax.f32 %v958, %v959
        %v961 = vsel %vm681, %v896, -inf
        %v962 = vsel %vm681, %v897, -inf
        %v963 = vmax.f32 %v961, %v962
        %v964 = vrot.slane %v963, 4
        %v965 = vmax.f32 %v963, %v964
        %v966 = vrot.slane %v965, 2
        %v967 = vmax.f32 %v965, %v966
        %v968 = vrot.slane %v967, 1
        %v969 = vmax.f32 %v967, %v968
        %v970 = vsub.f32 %v882, %v906
        %v971 = vsub.f32 %v883, %v906
        %v972 = vsub.f32 %v884, %v915
        %v973 = vsub.f32 %v885, %v915
        %v974 = vsub.f32 %v886, %v924
        %v975 = vsub.f32 %v887, %v924
        %v976 = vsub.f32 %v888, %v933
        %v977 = vsub.f32 %v889, %v933
        %v978 = vsub.f32 %v890, %v942
        %v979 = vsub.f32 %v891, %v942
        %v980 = vsub.f32 %v892, %v951
        %v981 = vsub.f32 %v893, %v951
        %v982 = vsub.f32 %v894, %v960
        %v983 = vsub.f32 %v895, %v960
        %v984 = vsub.f32 %v896, %v969
        %v985 = vsub.f32 %v897, %v969
        %v986 = vmul.f32 %v970, 1.442695
        %v987 = vpow.pop %v986
        %v988 = vmul.f32 %v971, 1.442695
        %v989 = vpow.pop %v988
        %v990 = vmul.f32 %v972, 1.442695
        %v991 = vpow.pop %v990
        %v992 = vmul.f32 %v973, 1.442695
        %v993 = vpow.pop %v992
        %v994 = vmul.f32 %v974, 1.442695
        %v995 = vpow.pop %v994
        %v996 = vmul.f32 %v975, 1.442695
        %v997 = vpow.pop %v996
        %v998 = vmul.f32 %v976, 1.442695
        %v999 = vpow.pop %v998
        %v1000 = vmul.f32 %v977, 1.442695
        %v1001 = vpow.pop %v1000
        %v1002 = vmul.f32 %v978, 1.442695
        %v1003 = vpow.pop %v1002
        %v1004 = vmul.f32 %v979, 1.442695
        %v1005 = vpow.pop %v1004
        %v1006 = vmul.f32 %v980, 1.442695
        %v1007 = vpow.pop %v1006
        %v1008 = vmul.f32 %v981, 1.442695
        %v1009 = vpow.pop %v1008
        %v1010 = vmul.f32 %v982, 1.442695
        %v1011 = vpow.pop %v1010
        %v1012 = vmul.f32 %v983, 1.442695
        %v1013 = vpow.pop %v1012
        %v1014 = vmul.f32 %v984, 1.442695
        %v1015 = vpow.pop %v1014
        %v1016 = vmul.f32 %v985, 1.442695
        %v1017 = vpow.pop %v1016
        %v1018 = vsel %vm681, %v987, 0.0
        %v1019 = vsel %vm681, %v989, 0.0
        %v1020 = vadd.f32 %v1018, %v1019
        %v1021 = vrot.slane %v1020, 4
        %v1022 = vadd.f32 %v1020, %v1021
        %v1023 = vrot.slane %v1022, 2
        %v1024 = vadd.f32 %v1022, %v1023
        %v1025 = vrot.slane %v1024, 1
        %v1026 = vadd.f32 %v1024, %v1025
        %v1027 = vsel %vm681, %v991, 0.0
        %v1028 = vsel %vm681, %v993, 0.0
        %v1029 = vadd.f32 %v1027, %v1028
        %v1030 = vrot.slane %v1029, 4
        %v1031 = vadd.f32 %v1029, %v1030
        %v1032 = vrot.slane %v1031, 2
        %v1033 = vadd.f32 %v1031, %v1032
        %v1034 = vrot.slane %v1033, 1
        %v1035 = vadd.f32 %v1033, %v1034
        %v1036 = vsel %vm681, %v995, 0.0
        %v1037 = vsel %vm681, %v997, 0.0
        %v1038 = vadd.f32 %v1036, %v1037
        %v1039 = vrot.slane %v1038, 4
        %v1040 = vadd.f32 %v1038, %v1039
        %v1041 = vrot.slane %v1040, 2
        %v1042 = vadd.f32 %v1040, %v1041
        %v1043 = vrot.slane %v1042, 1
        %v1044 = vadd.f32 %v1042, %v1043
        %v1045 = vsel %vm681, %v999, 0.0
        %v1046 = vsel %vm681, %v1001, 0.0
        %v1047 = vadd.f32 %v1045, %v1046
        %v1048 = vrot.slane %v1047, 4
        %v1049 = vadd.f32 %v1047, %v1048
        %v1050 = vrot.slane %v1049, 2
        %v1051 = vadd.f32 %v1049, %v1050
        %v1052 = vrot.slane %v1051, 1
        %v1053 = vadd.f32 %v1051, %v1052
        %v1054 = vsel %vm681, %v1003, 0.0
        %v1055 = vsel %vm681, %v1005, 0.0
        %v1056 = vadd.f32 %v1054, %v1055
        %v1057 = vrot.slane %v1056, 4
        %v1058 = vadd.f32 %v1056, %v1057
        %v1059 = vrot.slane %v1058, 2
        %v1060 = vadd.f32 %v1058, %v1059
        %v1061 = vrot.slane %v1060, 1
        %v1062 = vadd.f32 %v1060, %v1061
        %v1063 = vsel %vm681, %v1007, 0.0
        %v1064 = vsel %vm681, %v1009, 0.0
        %v1065 = vadd.f32 %v1063, %v1064
        %v1066 = vrot.slane %v1065, 4
        %v1067 = vadd.f32 %v1065, %v1066
        %v1068 = vrot.slane %v1067, 2
        %v1069 = vadd.f32 %v1067, %v1068
        %v1070 = vrot.slane %v1069, 1
        %v1071 = vadd.f32 %v1069, %v1070
        %v1072 = vsel %vm681, %v1011, 0.0
        %v1073 = vsel %vm681, %v1013, 0.0
        %v1074 = vadd.f32 %v1072, %v1073
        %v1075 = vrot.slane %v1074, 4
        %v1076 = vadd.f32 %v1074, %v1075
        %v1077 = vrot.slane %v1076, 2
        %v1078 = vadd.f32 %v1076, %v1077
        %v1079 = vrot.slane %v1078, 1
        %v1080 = vadd.f32 %v1078, %v1079
        %v1081 = vsel %vm681, %v1015, 0.0
        %v1082 = vsel %vm681, %v1017, 0.0
        %v1083 = vadd.f32 %v1081, %v1082
        %v1084 = vrot.slane %v1083, 4
        %v1085 = vadd.f32 %v1083, %v1084
        %v1086 = vrot.slane %v1085, 2
        %v1087 = vadd.f32 %v1085, %v1086
        %v1088 = vrot.slane %v1087, 1
        %v1089 = vadd.f32 %v1087, %v1088
        %v1090 = vrcp.pop %v1026
        %v1091 = vrcp.pop %v1035
        %v1092 = vrcp.pop %v1044
        %v1093 = vrcp.pop %v1053
        %v1094 = vrcp.pop %v1062
        %v1095 = vrcp.pop %v1071
        %v1096 = vrcp.pop %v1080
        %v1097 = vrcp.pop %v1089
        %v1098 = vld [vmem:[%s655] sm:$0xff]
        %v1099 = vld [vmem:[%s655 + $0x8] sm:$0xff]
        %v1100 = vld [vmem:[%s655 + $0x10] sm:$0xff]
        %v1101 = vld [vmem:[%s655 + $0x18] sm:$0xff]
        %v1102 = vld [vmem:[%s655 + $0x20] sm:$0xff]
        %v1103 = vld [vmem:[%s655 + $0x28] sm:$0xff]
        %v1104 = vld [vmem:[%s655 + $0x30] sm:$0xff]
        %v1105 = vld [vmem:[%s655 + $0x38] sm:$0xff]
        %v1106 = vld [vmem:[%s655 + $0x40] sm:$0xff]
        %v1107 = vld [vmem:[%s655 + $0x48] sm:$0xff]
        %v1108 = vld [vmem:[%s655 + $0x50] sm:$0xff]
        %v1109 = vld [vmem:[%s655 + $0x58] sm:$0xff]
        %v1110 = vld [vmem:[%s655 + $0x60] sm:$0xff]
        %v1111 = vld [vmem:[%s655 + $0x68] sm:$0xff]
        %v1112 = vld [vmem:[%s655 + $0x70] sm:$0xff]
        %v1113 = vld [vmem:[%s655 + $0x78] sm:$0xff]
        %v1114 = vld [vmem:[%s3] sm:$0xff]
        %v1115 = vld [vmem:[%s3 + $0x8] sm:$0xff]
        %v1116 = vadd.f32 %v1098, %v1114
        %v1117 = vadd.f32 %v1099, %v1115
        %v1118 = vadd.f32 %v1100, %v1114
        %v1119 = vadd.f32 %v1101, %v1115
        %v1120 = vadd.f32 %v1102, %v1114
        %v1121 = vadd.f32 %v1103, %v1115
        %v1122 = vadd.f32 %v1104, %v1114
        %v1123 = vadd.f32 %v1105, %v1115
        %v1124 = vadd.f32 %v1106, %v1114
        %v1125 = vadd.f32 %v1107, %v1115
        %v1126 = vadd.f32 %v1108, %v1114
        %v1127 = vadd.f32 %v1109, %v1115
        %v1128 = vadd.f32 %v1110, %v1114
        %v1129 = vadd.f32 %v1111, %v1115
        %v1130 = vadd.f32 %v1112, %v1114
        %v1131 = vadd.f32 %v1113, %v1115
        %1133 = vset.pattern.permute.xlu0 0
        %1134 = vperm.xlu0 %1133, %v771
        %v1135 = vpop.permute.xlu0 %1134
        %1138 = vset.pattern.permute.xlu0 0
        %1139 = vperm.xlu0 %1138, %v773
        %v1140 = vpop.permute.xlu0 %1139
        %1143 = vset.pattern.permute.xlu0 0
        %1144 = vperm.xlu0 %1143, %v775
        %v1145 = vpop.permute.xlu0 %1144
        %1148 = vset.pattern.permute.xlu0 0
        %1149 = vperm.xlu0 %1148, %v777
        %v1150 = vpop.permute.xlu0 %1149
        %1153 = vset.pattern.permute.xlu0 0
        %1154 = vperm.xlu0 %1153, %v779
        %v1155 = vpop.permute.xlu0 %1154
        %1158 = vset.pattern.permute.xlu0 0
        %1159 = vperm.xlu0 %1158, %v781
        %v1160 = vpop.permute.xlu0 %1159
        %1163 = vset.pattern.permute.xlu0 0
        %1164 = vperm.xlu0 %1163, %v783
        %v1165 = vpop.permute.xlu0 %1164
        %1168 = vset.pattern.permute.xlu0 0
        %1169 = vperm.xlu0 %1168, %v785
        %v1170 = vpop.permute.xlu0 %1169
        %1173 = vset.pattern.permute.xlu0 0
        %1174 = vperm.xlu0 %1173, %v787
        %v1175 = vpop.permute.xlu0 %1174
        %1178 = vset.pattern.permute.xlu0 0
        %1179 = vperm.xlu0 %1178, %v789
        %v1180 = vpop.permute.xlu0 %1179
        %1183 = vset.pattern.permute.xlu0 0
        %1184 = vperm.xlu0 %1183, %v791
        %v1185 = vpop.permute.xlu0 %1184
        %1188 = vset.pattern.permute.xlu0 0
        %1189 = vperm.xlu0 %1188, %v793
        %v1190 = vpop.permute.xlu0 %1189
        %1193 = vset.pattern.permute.xlu0 0
        %1194 = vperm.xlu0 %1193, %v795
        %v1195 = vpop.permute.xlu0 %1194
        %1198 = vset.pattern.permute.xlu0 0
        %1199 = vperm.xlu0 %1198, %v797
        %v1200 = vpop.permute.xlu0 %1199
        %1203 = vset.pattern.permute.xlu0 0
        %1204 = vperm.xlu0 %1203, %v799
        %v1205 = vpop.permute.xlu0 %1204
        %1208 = vset.pattern.permute.xlu0 0
        %1209 = vperm.xlu0 %1208, %v801
        %v1210 = vpop.permute.xlu0 %1209
        %v1212 = vmul.f32 %v1135, %v1116
        %v1213 = vmul.f32 %v1140, %v1117
        %v1214 = vmul.f32 %v1145, %v1118
        %v1215 = vmul.f32 %v1150, %v1119
        %v1216 = vmul.f32 %v1155, %v1120
        %v1217 = vmul.f32 %v1160, %v1121
        %v1218 = vmul.f32 %v1165, %v1122
        %v1219 = vmul.f32 %v1170, %v1123
        %v1220 = vmul.f32 %v1175, %v1124
        %v1221 = vmul.f32 %v1180, %v1125
        %v1222 = vmul.f32 %v1185, %v1126
        %v1223 = vmul.f32 %v1190, %v1127
        %v1224 = vmul.f32 %v1195, %v1128
        %v1225 = vmul.f32 %v1200, %v1129
        %v1226 = vmul.f32 %v1205, %v1130
        %v1227 = vmul.f32 %v1210, %v1131
        %vm1228 = vcmask 523264
        %v1229 = vsel %vm1228, %v1212, 0.0
        %v1230 = vsel %vm1228, %v1213, 0.0
        %v1231 = vadd.f32 %v1229, %v1230
        %v1232 = vrot.slane %v1231, 4
        %v1233 = vadd.f32 %v1231, %v1232
        %v1234 = vrot.slane %v1233, 2
        %v1235 = vadd.f32 %v1233, %v1234
        %v1236 = vrot.slane %v1235, 1
        %v1237 = vadd.f32 %v1235, %v1236
        %v1238 = vsel %vm1228, %v1214, 0.0
        %v1239 = vsel %vm1228, %v1215, 0.0
        %v1240 = vadd.f32 %v1238, %v1239
        %v1241 = vrot.slane %v1240, 4
        %v1242 = vadd.f32 %v1240, %v1241
        %v1243 = vrot.slane %v1242, 2
        %v1244 = vadd.f32 %v1242, %v1243
        %v1245 = vrot.slane %v1244, 1
        %v1246 = vadd.f32 %v1244, %v1245
        %v1247 = vsel %vm1228, %v1216, 0.0
        %v1248 = vsel %vm1228, %v1217, 0.0
        %v1249 = vadd.f32 %v1247, %v1248
        %v1250 = vrot.slane %v1249, 4
        %v1251 = vadd.f32 %v1249, %v1250
        %v1252 = vrot.slane %v1251, 2
        %v1253 = vadd.f32 %v1251, %v1252
        %v1254 = vrot.slane %v1253, 1
        %v1255 = vadd.f32 %v1253, %v1254
        %v1256 = vsel %vm1228, %v1218, 0.0
        %v1257 = vsel %vm1228, %v1219, 0.0
        %v1258 = vadd.f32 %v1256, %v1257
        %v1259 = vrot.slane %v1258, 4
        %v1260 = vadd.f32 %v1258, %v1259
        %v1261 = vrot.slane %v1260, 2
        %v1262 = vadd.f32 %v1260, %v1261
        %v1263 = vrot.slane %v1262, 1
        %v1264 = vadd.f32 %v1262, %v1263
        %v1265 = vsel %vm1228, %v1220, 0.0
        %v1266 = vsel %vm1228, %v1221, 0.0
        %v1267 = vadd.f32 %v1265, %v1266
        %v1268 = vrot.slane %v1267, 4
        %v1269 = vadd.f32 %v1267, %v1268
        %v1270 = vrot.slane %v1269, 2
        %v1271 = vadd.f32 %v1269, %v1270
        %v1272 = vrot.slane %v1271, 1
        %v1273 = vadd.f32 %v1271, %v1272
        %v1274 = vsel %vm1228, %v1222, 0.0
        %v1275 = vsel %vm1228, %v1223, 0.0
        %v1276 = vadd.f32 %v1274, %v1275
        %v1277 = vrot.slane %v1276, 4
        %v1278 = vadd.f32 %v1276, %v1277
        %v1279 = vrot.slane %v1278, 2
        %v1280 = vadd.f32 %v1278, %v1279
        %v1281 = vrot.slane %v1280, 1
        %v1282 = vadd.f32 %v1280, %v1281
        %v1283 = vsel %vm1228, %v1224, 0.0
        %v1284 = vsel %vm1228, %v1225, 0.0
        %v1285 = vadd.f32 %v1283, %v1284
        %v1286 = vrot.slane %v1285, 4
        %v1287 = vadd.f32 %v1285, %v1286
        %v1288 = vrot.slane %v1287, 2
        %v1289 = vadd.f32 %v1287, %v1288
        %v1290 = vrot.slane %v1289, 1
        %v1291 = vadd.f32 %v1289, %v1290
        %v1292 = vsel %vm1228, %v1226, 0.0
        %v1293 = vsel %vm1228, %v1227, 0.0
        %v1294 = vadd.f32 %v1292, %v1293
        %v1295 = vrot.slane %v1294, 4
        %v1296 = vadd.f32 %v1294, %v1295
        %v1297 = vrot.slane %v1296, 2
        %v1298 = vadd.f32 %v1296, %v1297
        %v1299 = vrot.slane %v1298, 1
        %v1300 = vadd.f32 %v1298, %v1299
        %1302 = vset.pattern.permute.xlu0 0
        %1303 = vperm.xlu0 %1302, %v874
        %v1304 = vpop.permute.xlu0 %1303
        %1307 = vset.pattern.permute.xlu0 0
        %1308 = vperm.xlu0 %1307, %v875
        %v1309 = vpop.permute.xlu0 %1308
        %1312 = vset.pattern.permute.xlu0 0
        %1313 = vperm.xlu0 %1312, %v876
        %v1314 = vpop.permute.xlu0 %1313
        %1317 = vset.pattern.permute.xlu0 0
        %1318 = vperm.xlu0 %1317, %v877
        %v1319 = vpop.permute.xlu0 %1318
        %1322 = vset.pattern.permute.xlu0 0
        %1323 = vperm.xlu0 %1322, %v878
        %v1324 = vpop.permute.xlu0 %1323
        %1327 = vset.pattern.permute.xlu0 0
        %1328 = vperm.xlu0 %1327, %v879
        %v1329 = vpop.permute.xlu0 %1328
        %1332 = vset.pattern.permute.xlu0 0
        %1333 = vperm.xlu0 %1332, %v880
        %v1334 = vpop.permute.xlu0 %1333
        %1337 = vset.pattern.permute.xlu0 0
        %1338 = vperm.xlu0 %1337, %v881
        %v1339 = vpop.permute.xlu0 %1338
        %v1341 = vmul.f32 %v1237, %v1304
        %v1342 = vmul.f32 %v1246, %v1309
        %v1343 = vmul.f32 %v1255, %v1314
        %v1344 = vmul.f32 %v1264, %v1319
        %v1345 = vmul.f32 %v1273, %v1324
        %v1346 = vmul.f32 %v1282, %v1329
        %v1347 = vmul.f32 %v1291, %v1334
        %v1348 = vmul.f32 %v1300, %v1339
        %v1349 = vld [vmem:[%s4] sm:$0xff]
        %v1350 = vld [vmem:[%s4 + $0x8] sm:$0xff]
        %1352 = vset.pattern.permute.xlu0 0
        %1353 = vperm.xlu0 %1352, %v987
        %v1354 = vpop.permute.xlu0 %1353
        %1357 = vset.pattern.permute.xlu0 0
        %1358 = vperm.xlu0 %1357, %v989
        %v1359 = vpop.permute.xlu0 %1358
        %1362 = vset.pattern.permute.xlu0 0
        %1363 = vperm.xlu0 %1362, %v991
        %v1364 = vpop.permute.xlu0 %1363
        %1367 = vset.pattern.permute.xlu0 0
        %1368 = vperm.xlu0 %1367, %v993
        %v1369 = vpop.permute.xlu0 %1368
        %1372 = vset.pattern.permute.xlu0 0
        %1373 = vperm.xlu0 %1372, %v995
        %v1374 = vpop.permute.xlu0 %1373
        %1377 = vset.pattern.permute.xlu0 0
        %1378 = vperm.xlu0 %1377, %v997
        %v1379 = vpop.permute.xlu0 %1378
        %1382 = vset.pattern.permute.xlu0 0
        %1383 = vperm.xlu0 %1382, %v999
        %v1384 = vpop.permute.xlu0 %1383
        %1387 = vset.pattern.permute.xlu0 0
        %1388 = vperm.xlu0 %1387, %v1001
        %v1389 = vpop.permute.xlu0 %1388
        %1392 = vset.pattern.permute.xlu0 0
        %1393 = vperm.xlu0 %1392, %v1003
        %v1394 = vpop.permute.xlu0 %1393
        %1397 = vset.pattern.permute.xlu0 0
        %1398 = vperm.xlu0 %1397, %v1005
        %v1399 = vpop.permute.xlu0 %1398
        %1402 = vset.pattern.permute.xlu0 0
        %1403 = vperm.xlu0 %1402, %v1007
        %v1404 = vpop.permute.xlu0 %1403
        %1407 = vset.pattern.permute.xlu0 0
        %1408 = vperm.xlu0 %1407, %v1009
        %v1409 = vpop.permute.xlu0 %1408
        %1412 = vset.pattern.permute.xlu0 0
        %1413 = vperm.xlu0 %1412, %v1011
        %v1414 = vpop.permute.xlu0 %1413
        %1417 = vset.pattern.permute.xlu0 0
        %1418 = vperm.xlu0 %1417, %v1013
        %v1419 = vpop.permute.xlu0 %1418
        %1422 = vset.pattern.permute.xlu0 0
        %1423 = vperm.xlu0 %1422, %v1015
        %v1424 = vpop.permute.xlu0 %1423
        %1427 = vset.pattern.permute.xlu0 0
        %1428 = vperm.xlu0 %1427, %v1017
        %v1429 = vpop.permute.xlu0 %1428
        %v1431 = vmul.f32 %v1354, %v1349
        %v1432 = vmul.f32 %v1359, %v1350
        %v1433 = vmul.f32 %v1364, %v1349
        %v1434 = vmul.f32 %v1369, %v1350
        %v1435 = vmul.f32 %v1374, %v1349
        %v1436 = vmul.f32 %v1379, %v1350
        %v1437 = vmul.f32 %v1384, %v1349
        %v1438 = vmul.f32 %v1389, %v1350
        %v1439 = vmul.f32 %v1394, %v1349
        %v1440 = vmul.f32 %v1399, %v1350
        %v1441 = vmul.f32 %v1404, %v1349
        %v1442 = vmul.f32 %v1409, %v1350
        %v1443 = vmul.f32 %v1414, %v1349
        %v1444 = vmul.f32 %v1419, %v1350
        %v1445 = vmul.f32 %v1424, %v1349
        %v1446 = vmul.f32 %v1429, %v1350
        %vm1447 = vcmask 261120
        %v1448 = vsel %vm1447, %v1431, 0.0
        %v1449 = vsel %vm1447, %v1432, 0.0
        %v1450 = vadd.f32 %v1448, %v1449
        %v1451 = vrot.slane %v1450, 4
        %v1452 = vadd.f32 %v1450, %v1451
        %v1453 = vrot.slane %v1452, 2
        %v1454 = vadd.f32 %v1452, %v1453
        %v1455 = vrot.slane %v1454, 1
        %v1456 = vadd.f32 %v1454, %v1455
        %v1457 = vsel %vm1447, %v1433, 0.0
        %v1458 = vsel %vm1447, %v1434, 0.0
        %v1459 = vadd.f32 %v1457, %v1458
        %v1460 = vrot.slane %v1459, 4
        %v1461 = vadd.f32 %v1459, %v1460
        %v1462 = vrot.slane %v1461, 2
        %v1463 = vadd.f32 %v1461, %v1462
        %v1464 = vrot.slane %v1463, 1
        %v1465 = vadd.f32 %v1463, %v1464
        %v1466 = vsel %vm1447, %v1435, 0.0
        %v1467 = vsel %vm1447, %v1436, 0.0
        %v1468 = vadd.f32 %v1466, %v1467
        %v1469 = vrot.slane %v1468, 4
        %v1470 = vadd.f32 %v1468, %v1469
        %v1471 = vrot.slane %v1470, 2
        %v1472 = vadd.f32 %v1470, %v1471
        %v1473 = vrot.slane %v1472, 1
        %v1474 = vadd.f32 %v1472, %v1473
        %v1475 = vsel %vm1447, %v1437, 0.0
        %v1476 = vsel %vm1447, %v1438, 0.0
        %v1477 = vadd.f32 %v1475, %v1476
        %v1478 = vrot.slane %v1477, 4
        %v1479 = vadd.f32 %v1477, %v1478
        %v1480 = vrot.slane %v1479, 2
        %v1481 = vadd.f32 %v1479, %v1480
        %v1482 = vrot.slane %v1481, 1
        %v1483 = vadd.f32 %v1481, %v1482
        %v1484 = vsel %vm1447, %v1439, 0.0
        %v1485 = vsel %vm1447, %v1440, 0.0
        %v1486 = vadd.f32 %v1484, %v1485
        %v1487 = vrot.slane %v1486, 4
        %v1488 = vadd.f32 %v1486, %v1487
        %v1489 = vrot.slane %v1488, 2
        %v1490 = vadd.f32 %v1488, %v1489
        %v1491 = vrot.slane %v1490, 1
        %v1492 = vadd.f32 %v1490, %v1491
        %v1493 = vsel %vm1447, %v1441, 0.0
        %v1494 = vsel %vm1447, %v1442, 0.0
        %v1495 = vadd.f32 %v1493, %v1494
        %v1496 = vrot.slane %v1495, 4
        %v1497 = vadd.f32 %v1495, %v1496
        %v1498 = vrot.slane %v1497, 2
        %v1499 = vadd.f32 %v1497, %v1498
        %v1500 = vrot.slane %v1499, 1
        %v1501 = vadd.f32 %v1499, %v1500
        %v1502 = vsel %vm1447, %v1443, 0.0
        %v1503 = vsel %vm1447, %v1444, 0.0
        %v1504 = vadd.f32 %v1502, %v1503
        %v1505 = vrot.slane %v1504, 4
        %v1506 = vadd.f32 %v1504, %v1505
        %v1507 = vrot.slane %v1506, 2
        %v1508 = vadd.f32 %v1506, %v1507
        %v1509 = vrot.slane %v1508, 1
        %v1510 = vadd.f32 %v1508, %v1509
        %v1511 = vsel %vm1447, %v1445, 0.0
        %v1512 = vsel %vm1447, %v1446, 0.0
        %v1513 = vadd.f32 %v1511, %v1512
        %v1514 = vrot.slane %v1513, 4
        %v1515 = vadd.f32 %v1513, %v1514
        %v1516 = vrot.slane %v1515, 2
        %v1517 = vadd.f32 %v1515, %v1516
        %v1518 = vrot.slane %v1517, 1
        %v1519 = vadd.f32 %v1517, %v1518
        %1521 = vset.pattern.permute.xlu0 0
        %1522 = vperm.xlu0 %1521, %v1090
        %v1523 = vpop.permute.xlu0 %1522
        %1526 = vset.pattern.permute.xlu0 0
        %1527 = vperm.xlu0 %1526, %v1091
        %v1528 = vpop.permute.xlu0 %1527
        %1531 = vset.pattern.permute.xlu0 0
        %1532 = vperm.xlu0 %1531, %v1092
        %v1533 = vpop.permute.xlu0 %1532
        %1536 = vset.pattern.permute.xlu0 0
        %1537 = vperm.xlu0 %1536, %v1093
        %v1538 = vpop.permute.xlu0 %1537
        %1541 = vset.pattern.permute.xlu0 0
        %1542 = vperm.xlu0 %1541, %v1094
        %v1543 = vpop.permute.xlu0 %1542
        %1546 = vset.pattern.permute.xlu0 0
        %1547 = vperm.xlu0 %1546, %v1095
        %v1548 = vpop.permute.xlu0 %1547
        %1551 = vset.pattern.permute.xlu0 0
        %1552 = vperm.xlu0 %1551, %v1096
        %v1553 = vpop.permute.xlu0 %1552
        %1556 = vset.pattern.permute.xlu0 0
        %1557 = vperm.xlu0 %1556, %v1097
        %v1558 = vpop.permute.xlu0 %1557
        %v1560 = vmul.f32 %v1456, %v1523
        %v1561 = vmul.f32 %v1465, %v1528
        %v1562 = vmul.f32 %v1474, %v1533
        %v1563 = vmul.f32 %v1483, %v1538
        %v1564 = vmul.f32 %v1492, %v1543
        %v1565 = vmul.f32 %v1501, %v1548
        %v1566 = vmul.f32 %v1510, %v1553
        %v1567 = vmul.f32 %v1519, %v1558
        %v1568 = vld [vmem:[%s660] sm:$0xff]
        %v1569 = vld [vmem:[%s7] sm:$0xff]
        %v1570 = vld [vmem:[%s7 + $0x8] sm:$0xff]
        %v1571 = vld [vmem:[%s7 + $0x10] sm:$0xff]
        %v1572 = vld [vmem:[%s7 + $0x18] sm:$0xff]
        %v1573 = vld [vmem:[%s7 + $0x20] sm:$0xff]
        %v1574 = vld [vmem:[%s7 + $0x28] sm:$0xff]
        %v1575 = vld [vmem:[%s7 + $0x30] sm:$0xff]
        %v1576 = vld [vmem:[%s7 + $0x38] sm:$0xff]
        %v1577 = vld [vmem:[%s8] sm:$0xff]
        %v1578 = vld [vmem:[%s8 + $0x8] sm:$0xff]
        %v1579 = vld [vmem:[%s8 + $0x10] sm:$0xff]
        %v1580 = vld [vmem:[%s8 + $0x18] sm:$0xff]
        %v1581 = vld [vmem:[%s8 + $0x20] sm:$0xff]
        %v1582 = vld [vmem:[%s8 + $0x28] sm:$0xff]
        %v1583 = vld [vmem:[%s8 + $0x30] sm:$0xff]
        %v1584 = vld [vmem:[%s8 + $0x38] sm:$0xff]
        %vm1593 = vcmask 1041409
        %v1594 = vsel %vm1593, %v1342, %v1341
        %vm1595 = vcmask 1042434
        %v1596 = vsel %vm1595, %v1343, %v1594
        %vm1597 = vcmask 1043459
        %v1598 = vsel %vm1597, %v1344, %v1596
        %vm1599 = vcmask 1044484
        %v1600 = vsel %vm1599, %v1345, %v1598
        %vm1601 = vcmask 1045509
        %v1602 = vsel %vm1601, %v1346, %v1600
        %vm1603 = vcmask 1046534
        %v1604 = vsel %vm1603, %v1347, %v1602
        %vm1605 = vcmask 1047559
        %v1606 = vsel %vm1605, %v1348, %v1604
        %v1607 = vsel %vm1228, %v1606, 0
        %1609 = vmatprep.subr.mxu0 0.0
        %1610 = vmatpush1.msra.mxu0 %v1577
        %1611 = vmatprep.subr.mxu0 0.0
        %1612 = vmatpush1.msra.mxu0 %v1578
        %1613 = vmatprep.subr.mxu0 0.0
        %1614 = vmatpush1.msra.mxu0 %v1579
        %1615 = vmatprep.subr.mxu0 0.0
        %1616 = vmatpush1.msra.mxu0 %v1580
        %1617 = vmatprep.subr.mxu0 0.0
        %1618 = vmatpush1.msra.mxu0 %v1581
        %1619 = vmatprep.subr.mxu0 0.0
        %1620 = vmatpush1.msra.mxu0 %v1582
        %1621 = vmatprep.subr.mxu0 0.0
        %1622 = vmatpush1.msra.mxu0 %v1583
        %1623 = vmatprep.subr.mxu0 0.0
        %1624 = vmatpush1.msra.mxu0 %v1584
        %1625 = vmatprep.subr.mxu0 0.0
        %1626 = vmatpush1.msra.mxu0 0.0
        %1627 = vmatprep.subr.mxu0 0.0
        %1628 = vmatpush1.msra.mxu0 0.0
        %1629 = vmatprep.subr.mxu0 0.0
        %1630 = vmatpush1.msra.mxu0 0.0
        %1631 = vmatprep.subr.mxu0 0.0
        %1632 = vmatpush1.msra.mxu0 0.0
        %1633 = vmatprep.subr.mxu0 0.0
        %1634 = vmatpush1.msra.mxu0 0.0
        %1635 = vmatprep.subr.mxu0 0.0
        %1636 = vmatpush1.msra.mxu0 0.0
        %1637 = vmatprep.subr.mxu0 0.0
        %1638 = vmatpush1.msra.mxu0 0.0
        %1639 = vmatprep.subr.mxu0 0.0
        %1640 = vmatpush1.msra.mxu0 0.0
        %1641 = vmatprep.subr.mxu0 0.0
        %1642 = vmatpush1.msra.mxu0 0.0
        %1643 = vmatprep.subr.mxu0 0.0
        %1644 = vmatpush1.msra.mxu0 0.0
        %1645 = vmatprep.subr.mxu0 0.0
        %1646 = vmatpush1.msra.mxu0 0.0
        %1647 = vmatprep.subr.mxu0 0.0
        %1648 = vmatpush1.msra.mxu0 0.0
        %1649 = vmatprep.subr.mxu0 0.0
        %1650 = vmatpush1.msra.mxu0 0.0
        %1651 = vmatprep.subr.mxu0 0.0
        %1652 = vmatpush1.msra.mxu0 0.0
        %1653 = vmatprep.subr.mxu0 0.0
        %1654 = vmatpush1.msra.mxu0 0.0
        %1655 = vmatprep.subr.mxu0 0.0
        %1656 = vmatpush1.msra.mxu0 0.0
        %1657 = vmatprep.subr.mxu0 0.0
        %1658 = vmatpush1.msra.mxu0 0.0
        %1659 = vmatprep.subr.mxu0 0.0
        %1660 = vmatpush1.msra.mxu0 0.0
        %1661 = vmatprep.subr.mxu0 0.0
        %1662 = vmatpush1.msra.mxu0 0.0
        %1663 = vmatprep.subr.mxu0 0.0
        %1664 = vmatpush1.msra.mxu0 0.0
        %1665 = vmatprep.subr.mxu0 0.0
        %1666 = vmatpush1.msra.mxu0 0.0
        %1667 = vmatprep.subr.mxu0 0.0
        %1668 = vmatpush1.msra.mxu0 0.0
        %1669 = vmatprep.subr.mxu0 0.0
        %1670 = vmatpush1.msra.mxu0 0.0
        %1671 = vmatprep.subr.mxu0 0.0
        %1672 = vmatpush1.msra.mxu0 0.0
        %1673 = vmatprep.mubr.f32.mxu0 0.0
        %1674 = vmatmul.mubr.f32.gmra.mrb[0].mxu0 %v1607
        %v1675 = vpop.f32.mrb[0].mxu0
        %v1676 = vadd.f32 0.0, %v1675
        %v1677 = vpop.f32.mrb[0].mxu0
        %1678 = vdwg.mxu0
        %v1680 = vsel %vm1228, %v1568, 0
        %1682 = vmatprep.subr.mxu0 0.0
        %1683 = vmatpush1.msra.mxu0 %v1569
        %1684 = vmatprep.subr.mxu0 0.0
        %1685 = vmatpush1.msra.mxu0 %v1570
        %1686 = vmatprep.subr.mxu0 0.0
        %1687 = vmatpush1.msra.mxu0 %v1571
        %1688 = vmatprep.subr.mxu0 0.0
        %1689 = vmatpush1.msra.mxu0 %v1572
        %1690 = vmatprep.subr.mxu0 0.0
        %1691 = vmatpush1.msra.mxu0 %v1573
        %1692 = vmatprep.subr.mxu0 0.0
        %1693 = vmatpush1.msra.mxu0 %v1574
        %1694 = vmatprep.subr.mxu0 0.0
        %1695 = vmatpush1.msra.mxu0 %v1575
        %1696 = vmatprep.subr.mxu0 0.0
        %1697 = vmatpush1.msra.mxu0 %v1576
        %1698 = vmatprep.subr.mxu0 0.0
        %1699 = vmatpush1.msra.mxu0 0.0
        %1700 = vmatprep.subr.mxu0 0.0
        %1701 = vmatpush1.msra.mxu0 0.0
        %1702 = vmatprep.subr.mxu0 0.0
        %1703 = vmatpush1.msra.mxu0 0.0
        %1704 = vmatprep.subr.mxu0 0.0
        %1705 = vmatpush1.msra.mxu0 0.0
        %1706 = vmatprep.subr.mxu0 0.0
        %1707 = vmatpush1.msra.mxu0 0.0
        %1708 = vmatprep.subr.mxu0 0.0
        %1709 = vmatpush1.msra.mxu0 0.0
        %1710 = vmatprep.subr.mxu0 0.0
        %1711 = vmatpush1.msra.mxu0 0.0
        %1712 = vmatprep.subr.mxu0 0.0
        %1713 = vmatpush1.msra.mxu0 0.0
        %1714 = vmatprep.subr.mxu0 0.0
        %1715 = vmatpush1.msra.mxu0 0.0
        %1716 = vmatprep.subr.mxu0 0.0
        %1717 = vmatpush1.msra.mxu0 0.0
        %1718 = vmatprep.subr.mxu0 0.0
        %1719 = vmatpush1.msra.mxu0 0.0
        %1720 = vmatprep.subr.mxu0 0.0
        %1721 = vmatpush1.msra.mxu0 0.0
        %1722 = vmatprep.subr.mxu0 0.0
        %1723 = vmatpush1.msra.mxu0 0.0
        %1724 = vmatprep.subr.mxu0 0.0
        %1725 = vmatpush1.msra.mxu0 0.0
        %1726 = vmatprep.subr.mxu0 0.0
        %1727 = vmatpush1.msra.mxu0 0.0
        %1728 = vmatprep.subr.mxu0 0.0
        %1729 = vmatpush1.msra.mxu0 0.0
        %1730 = vmatprep.subr.mxu0 0.0
        %1731 = vmatpush1.msra.mxu0 0.0
        %1732 = vmatprep.subr.mxu0 0.0
        %1733 = vmatpush1.msra.mxu0 0.0
        %1734 = vmatprep.subr.mxu0 0.0
        %1735 = vmatpush1.msra.mxu0 0.0
        %1736 = vmatprep.subr.mxu0 0.0
        %1737 = vmatpush1.msra.mxu0 0.0
        %1738 = vmatprep.subr.mxu0 0.0
        %1739 = vmatpush1.msra.mxu0 0.0
        %1740 = vmatprep.subr.mxu0 0.0
        %1741 = vmatpush1.msra.mxu0 0.0
        %1742 = vmatprep.subr.mxu0 0.0
        %1743 = vmatpush1.msra.mxu0 0.0
        %1744 = vmatprep.subr.mxu0 0.0
        %1745 = vmatpush1.msra.mxu0 0.0
        %1746 = vmatprep.mubr.f32.mxu0 0.0
        %1747 = vmatmul.mubr.f32.gmra.mrb[0].mxu0 %v1680
        %v1748 = vpop.f32.mrb[0].mxu0
        %v1749 = vadd.f32 %v1676, %v1748
        %v1750 = vpop.f32.mrb[0].mxu0
        %1751 = vdwg.mxu0
        %v1752 = vld [vmem:[%s9] sm:$0x1]
        %v1754 = vlaneseq
        %v1755 = vshrl.u32 %v1754, 7
        %v1756 = vsub.s32 0, %v1755
        %v1757 = vrot.slane %v1752, %v1756
        %v1759 = vadd.f32 %v1749, %v1757
        %v1760 = vmax.f32 %v1759, 0.0
        %v1761 = vld [vmem:[%s10] sm:$0xff]
        %v1762 = vld [vmem:[%s10 + $0x8] sm:$0xff]
        %v1763 = vld [vmem:[%s10 + $0x10] sm:$0xff]
        %v1764 = vld [vmem:[%s10 + $0x18] sm:$0xff]
        %v1765 = vld [vmem:[%s10 + $0x20] sm:$0xff]
        %v1766 = vld [vmem:[%s10 + $0x28] sm:$0xff]
        %v1767 = vld [vmem:[%s10 + $0x30] sm:$0xff]
        %v1768 = vld [vmem:[%s10 + $0x38] sm:$0xff]
        %v1769 = vld [vmem:[%s10 + $0x40] sm:$0xff]
        %v1770 = vld [vmem:[%s10 + $0x48] sm:$0xff]
        %v1771 = vld [vmem:[%s10 + $0x50] sm:$0xff]
        %v1772 = vld [vmem:[%s10 + $0x58] sm:$0xff]
        %v1773 = vld [vmem:[%s10 + $0x60] sm:$0xff]
        %v1774 = vld [vmem:[%s10 + $0x68] sm:$0xff]
        %v1775 = vld [vmem:[%s10 + $0x70] sm:$0xff]
        %v1776 = vld [vmem:[%s10 + $0x78] sm:$0xff]
        %v1777 = vld [vmem:[%s11] sm:$0x1]
        %v1779 = vlaneseq
        %v1780 = vshrl.u32 %v1779, 7
        %v1781 = vsub.s32 0, %v1780
        %v1782 = vrot.slane %v1777, %v1781
        %1784 = vmatprep.subr.mxu0 0.0
        %1785 = vmatpush1.msra.mxu0 %v1761
        %1786 = vmatprep.subr.mxu0 0.0
        %1787 = vmatpush1.msra.mxu0 %v1762
        %1788 = vmatprep.subr.mxu0 0.0
        %1789 = vmatpush1.msra.mxu0 %v1763
        %1790 = vmatprep.subr.mxu0 0.0
        %1791 = vmatpush1.msra.mxu0 %v1764
        %1792 = vmatprep.subr.mxu0 0.0
        %1793 = vmatpush1.msra.mxu0 %v1765
        %1794 = vmatprep.subr.mxu0 0.0
        %1795 = vmatpush1.msra.mxu0 %v1766
        %1796 = vmatprep.subr.mxu0 0.0
        %1797 = vmatpush1.msra.mxu0 %v1767
        %1798 = vmatprep.subr.mxu0 0.0
        %1799 = vmatpush1.msra.mxu0 %v1768
        %1800 = vmatprep.subr.mxu0 0.0
        %1801 = vmatpush1.msra.mxu0 %v1769
        %1802 = vmatprep.subr.mxu0 0.0
        %1803 = vmatpush1.msra.mxu0 %v1770
        %1804 = vmatprep.subr.mxu0 0.0
        %1805 = vmatpush1.msra.mxu0 %v1771
        %1806 = vmatprep.subr.mxu0 0.0
        %1807 = vmatpush1.msra.mxu0 %v1772
        %1808 = vmatprep.subr.mxu0 0.0
        %1809 = vmatpush1.msra.mxu0 %v1773
        %1810 = vmatprep.subr.mxu0 0.0
        %1811 = vmatpush1.msra.mxu0 %v1774
        %1812 = vmatprep.subr.mxu0 0.0
        %1813 = vmatpush1.msra.mxu0 %v1775
        %1814 = vmatprep.subr.mxu0 0.0
        %1815 = vmatpush1.msra.mxu0 %v1776
        %1816 = vmatprep.subr.mxu0 0.0
        %1817 = vmatpush1.msra.mxu0 0.0
        %1818 = vmatprep.subr.mxu0 0.0
        %1819 = vmatpush1.msra.mxu0 0.0
        %1820 = vmatprep.subr.mxu0 0.0
        %1821 = vmatpush1.msra.mxu0 0.0
        %1822 = vmatprep.subr.mxu0 0.0
        %1823 = vmatpush1.msra.mxu0 0.0
        %1824 = vmatprep.subr.mxu0 0.0
        %1825 = vmatpush1.msra.mxu0 0.0
        %1826 = vmatprep.subr.mxu0 0.0
        %1827 = vmatpush1.msra.mxu0 0.0
        %1828 = vmatprep.subr.mxu0 0.0
        %1829 = vmatpush1.msra.mxu0 0.0
        %1830 = vmatprep.subr.mxu0 0.0
        %1831 = vmatpush1.msra.mxu0 0.0
        %1832 = vmatprep.subr.mxu0 0.0
        %1833 = vmatpush1.msra.mxu0 0.0
        %1834 = vmatprep.subr.mxu0 0.0
        %1835 = vmatpush1.msra.mxu0 0.0
        %1836 = vmatprep.subr.mxu0 0.0
        %1837 = vmatpush1.msra.mxu0 0.0
        %1838 = vmatprep.subr.mxu0 0.0
        %1839 = vmatpush1.msra.mxu0 0.0
        %1840 = vmatprep.subr.mxu0 0.0
        %1841 = vmatpush1.msra.mxu0 0.0
        %1842 = vmatprep.subr.mxu0 0.0
        %1843 = vmatpush1.msra.mxu0 0.0
        %1844 = vmatprep.subr.mxu0 0.0
        %1845 = vmatpush1.msra.mxu0 0.0
        %1846 = vmatprep.subr.mxu0 0.0
        %1847 = vmatpush1.msra.mxu0 0.0
        %1848 = vmatprep.mubr.f32.mxu0 0.0
        %1849 = vmatmul.mubr.f32.gmra.mrb[0].mxu0 %v1760
        %v1850 = vpop.f32.mrb[0].mxu0
        %v1851 = vadd.f32 %v1782, %v1850
        %v1852 = vpop.f32.mrb[0].mxu0
        %1853 = vdwg.mxu0
        %1854 = vst.msk [vmem:[%s631] sm:$0xff] %vm1228, %v1851
        %v1855 = vld [vmem:[%s664] sm:$0xff]
        %v1856 = vld [vmem:[%s12] sm:$0xff]
        %v1857 = vld [vmem:[%s12 + $0x8] sm:$0xff]
        %v1858 = vld [vmem:[%s12 + $0x10] sm:$0xff]
        %v1859 = vld [vmem:[%s12 + $0x18] sm:$0xff]
        %v1860 = vld [vmem:[%s13] sm:$0xff]
        %v1861 = vld [vmem:[%s13 + $0x8] sm:$0xff]
        %v1862 = vld [vmem:[%s13 + $0x10] sm:$0xff]
        %v1863 = vld [vmem:[%s13 + $0x18] sm:$0xff]
        %v1872 = vsel %vm1593, %v1561, %v1560
        %v1873 = vsel %vm1595, %v1562, %v1872
        %v1874 = vsel %vm1597, %v1563, %v1873
        %v1875 = vsel %vm1599, %v1564, %v1874
        %v1876 = vsel %vm1601, %v1565, %v1875
        %v1877 = vsel %vm1603, %v1566, %v1876
        %v1878 = vsel %vm1605, %v1567, %v1877
        %v1879 = vsel %vm1447, %v1878, 0
        %1881 = vmatprep.subr.mxu0 0.0
        %1882 = vmatpush1.msra.mxu0 %v1860
        %1883 = vmatprep.subr.mxu0 0.0
        %1884 = vmatpush1.msra.mxu0 %v1861
        %1885 = vmatprep.subr.mxu0 0.0
        %1886 = vmatpush1.msra.mxu0 %v1862
        %1887 = vmatprep.subr.mxu0 0.0
        %1888 = vmatpush1.msra.mxu0 %v1863
        %1889 = vmatprep.subr.mxu0 0.0
        %1890 = vmatpush1.msra.mxu0 0.0
        %1891 = vmatprep.subr.mxu0 0.0
        %1892 = vmatpush1.msra.mxu0 0.0
        %1893 = vmatprep.subr.mxu0 0.0
        %1894 = vmatpush1.msra.mxu0 0.0
        %1895 = vmatprep.subr.mxu0 0.0
        %1896 = vmatpush1.msra.mxu0 0.0
        %1897 = vmatprep.subr.mxu0 0.0
        %1898 = vmatpush1.msra.mxu0 0.0
        %1899 = vmatprep.subr.mxu0 0.0
        %1900 = vmatpush1.msra.mxu0 0.0
        %1901 = vmatprep.subr.mxu0 0.0
        %1902 = vmatpush1.msra.mxu0 0.0
        %1903 = vmatprep.subr.mxu0 0.0
        %1904 = vmatpush1.msra.mxu0 0.0
        %1905 = vmatprep.subr.mxu0 0.0
        %1906 = vmatpush1.msra.mxu0 0.0
        %1907 = vmatprep.subr.mxu0 0.0
        %1908 = vmatpush1.msra.mxu0 0.0
        %1909 = vmatprep.subr.mxu0 0.0
        %1910 = vmatpush1.msra.mxu0 0.0
        %1911 = vmatprep.subr.mxu0 0.0
        %1912 = vmatpush1.msra.mxu0 0.0
        %1913 = vmatprep.subr.mxu0 0.0
        %1914 = vmatpush1.msra.mxu0 0.0
        %1915 = vmatprep.subr.mxu0 0.0
        %1916 = vmatpush1.msra.mxu0 0.0
        %1917 = vmatprep.subr.mxu0 0.0
        %1918 = vmatpush1.msra.mxu0 0.0
        %1919 = vmatprep.subr.mxu0 0.0
        %1920 = vmatpush1.msra.mxu0 0.0
        %1921 = vmatprep.subr.mxu0 0.0
        %1922 = vmatpush1.msra.mxu0 0.0
        %1923 = vmatprep.subr.mxu0 0.0
        %1924 = vmatpush1.msra.mxu0 0.0
        %1925 = vmatprep.subr.mxu0 0.0
        %1926 = vmatpush1.msra.mxu0 0.0
        %1927 = vmatprep.subr.mxu0 0.0
        %1928 = vmatpush1.msra.mxu0 0.0
        %1929 = vmatprep.subr.mxu0 0.0
        %1930 = vmatpush1.msra.mxu0 0.0
        %1931 = vmatprep.subr.mxu0 0.0
        %1932 = vmatpush1.msra.mxu0 0.0
        %1933 = vmatprep.subr.mxu0 0.0
        %1934 = vmatpush1.msra.mxu0 0.0
        %1935 = vmatprep.subr.mxu0 0.0
        %1936 = vmatpush1.msra.mxu0 0.0
        %1937 = vmatprep.subr.mxu0 0.0
        %1938 = vmatpush1.msra.mxu0 0.0
        %1939 = vmatprep.subr.mxu0 0.0
        %1940 = vmatpush1.msra.mxu0 0.0
        %1941 = vmatprep.subr.mxu0 0.0
        %1942 = vmatpush1.msra.mxu0 0.0
        %1943 = vmatprep.subr.mxu0 0.0
        %1944 = vmatpush1.msra.mxu0 0.0
        %1945 = vmatprep.mubr.f32.mxu0 0.0
        %1946 = vmatmul.mubr.f32.gmra.mrb[0].mxu0 %v1879
        %v1947 = vpop.f32.mrb[0].mxu0
        %v1948 = vadd.f32 0.0, %v1947
        %v1949 = vpop.f32.mrb[0].mxu0
        %1950 = vdwg.mxu0
        %v1952 = vsel %vm1447, %v1855, 0
        %1954 = vmatprep.subr.mxu0 0.0
        %1955 = vmatpush1.msra.mxu0 %v1856
        %1956 = vmatprep.subr.mxu0 0.0
        %1957 = vmatpush1.msra.mxu0 %v1857
        %1958 = vmatprep.subr.mxu0 0.0
        %1959 = vmatpush1.msra.mxu0 %v1858
        %1960 = vmatprep.subr.mxu0 0.0
        %1961 = vmatpush1.msra.mxu0 %v1859
        %1962 = vmatprep.subr.mxu0 0.0
        %1963 = vmatpush1.msra.mxu0 0.0
        %1964 = vmatprep.subr.mxu0 0.0
        %1965 = vmatpush1.msra.mxu0 0.0
        %1966 = vmatprep.subr.mxu0 0.0
        %1967 = vmatpush1.msra.mxu0 0.0
        %1968 = vmatprep.subr.mxu0 0.0
        %1969 = vmatpush1.msra.mxu0 0.0
        %1970 = vmatprep.subr.mxu0 0.0
        %1971 = vmatpush1.msra.mxu0 0.0
        %1972 = vmatprep.subr.mxu0 0.0
        %1973 = vmatpush1.msra.mxu0 0.0
        %1974 = vmatprep.subr.mxu0 0.0
        %1975 = vmatpush1.msra.mxu0 0.0
        %1976 = vmatprep.subr.mxu0 0.0
        %1977 = vmatpush1.msra.mxu0 0.0
        %1978 = vmatprep.subr.mxu0 0.0
        %1979 = vmatpush1.msra.mxu0 0.0
        %1980 = vmatprep.subr.mxu0 0.0
        %1981 = vmatpush1.msra.mxu0 0.0
        %1982 = vmatprep.subr.mxu0 0.0
        %1983 = vmatpush1.msra.mxu0 0.0
        %1984 = vmatprep.subr.mxu0 0.0
        %1985 = vmatpush1.msra.mxu0 0.0
        %1986 = vmatprep.subr.mxu0 0.0
        %1987 = vmatpush1.msra.mxu0 0.0
        %1988 = vmatprep.subr.mxu0 0.0
        %1989 = vmatpush1.msra.mxu0 0.0
        %1990 = vmatprep.subr.mxu0 0.0
        %1991 = vmatpush1.msra.mxu0 0.0
        %1992 = vmatprep.subr.mxu0 0.0
        %1993 = vmatpush1.msra.mxu0 0.0
        %1994 = vmatprep.subr.mxu0 0.0
        %1995 = vmatpush1.msra.mxu0 0.0
        %1996 = vmatprep.subr.mxu0 0.0
        %1997 = vmatpush1.msra.mxu0 0.0
        %1998 = vmatprep.subr.mxu0 0.0
        %1999 = vmatpush1.msra.mxu0 0.0
        %2000 = vmatprep.subr.mxu0 0.0
        %2001 = vmatpush1.msra.mxu0 0.0
        %2002 = vmatprep.subr.mxu0 0.0
        %2003 = vmatpush1.msra.mxu0 0.0
        %2004 = vmatprep.subr.mxu0 0.0
        %2005 = vmatpush1.msra.mxu0 0.0
        %2006 = vmatprep.subr.mxu0 0.0
        %2007 = vmatpush1.msra.mxu0 0.0
        %2008 = vmatprep.subr.mxu0 0.0
        %2009 = vmatpush1.msra.mxu0 0.0
        %2010 = vmatprep.subr.mxu0 0.0
        %2011 = vmatpush1.msra.mxu0 0.0
        %2012 = vmatprep.subr.mxu0 0.0
        %2013 = vmatpush1.msra.mxu0 0.0
        %2014 = vmatprep.subr.mxu0 0.0
        %2015 = vmatpush1.msra.mxu0 0.0
        %2016 = vmatprep.subr.mxu0 0.0
        %2017 = vmatpush1.msra.mxu0 0.0
        %2018 = vmatprep.mubr.f32.mxu0 0.0
        %2019 = vmatmul.mubr.f32.gmra.mrb[0].mxu0 %v1952
        %v2020 = vpop.f32.mrb[0].mxu0
        %v2021 = vadd.f32 %v1948, %v2020
        %v2022 = vpop.f32.mrb[0].mxu0
        %2023 = vdwg.mxu0
        %v2024 = vld [vmem:[%s14] sm:$0x1]
        %v2026 = vlaneseq
        %v2027 = vshrl.u32 %v2026, 7
        %v2028 = vsub.s32 0, %v2027
        %v2029 = vrot.slane %v2024, %v2028
        %v2031 = vadd.f32 %v2021, %v2029
        %v2032 = vmax.f32 %v2031, 0.0
        %v2033 = vld [vmem:[%s15] sm:$0xff]
        %v2034 = vld [vmem:[%s15 + $0x8] sm:$0xff]
        %v2035 = vld [vmem:[%s15 + $0x10] sm:$0xff]
        %v2036 = vld [vmem:[%s15 + $0x18] sm:$0xff]
        %v2037 = vld [vmem:[%s15 + $0x20] sm:$0xff]
        %v2038 = vld [vmem:[%s15 + $0x28] sm:$0xff]
        %v2039 = vld [vmem:[%s15 + $0x30] sm:$0xff]
        %v2040 = vld [vmem:[%s15 + $0x38] sm:$0xff]
        %v2041 = vld [vmem:[%s16] sm:$0x1]
        %v2043 = vlaneseq
        %v2044 = vshrl.u32 %v2043, 7
        %v2045 = vsub.s32 0, %v2044
        %v2046 = vrot.slane %v2041, %v2045
        %v2049 = vsel %vm1228, %v2032, 0
        %2051 = vmatprep.subr.mxu0 0.0
        %2052 = vmatpush1.msra.mxu0 %v2033
        %2053 = vmatprep.subr.mxu0 0.0
        %2054 = vmatpush1.msra.mxu0 %v2034
        %2055 = vmatprep.subr.mxu0 0.0
        %2056 = vmatpush1.msra.mxu0 %v2035
        %2057 = vmatprep.subr.mxu0 0.0
        %2058 = vmatpush1.msra.mxu0 %v2036
        %2059 = vmatprep.subr.mxu0 0.0
        %2060 = vmatpush1.msra.mxu0 %v2037
        %2061 = vmatprep.subr.mxu0 0.0
        %2062 = vmatpush1.msra.mxu0 %v2038
        %2063 = vmatprep.subr.mxu0 0.0
        %2064 = vmatpush1.msra.mxu0 %v2039
        %2065 = vmatprep.subr.mxu0 0.0
        %2066 = vmatpush1.msra.mxu0 %v2040
        %2067 = vmatprep.subr.mxu0 0.0
        %2068 = vmatpush1.msra.mxu0 0.0
        %2069 = vmatprep.subr.mxu0 0.0
        %2070 = vmatpush1.msra.mxu0 0.0
        %2071 = vmatprep.subr.mxu0 0.0
        %2072 = vmatpush1.msra.mxu0 0.0
        %2073 = vmatprep.subr.mxu0 0.0
        %2074 = vmatpush1.msra.mxu0 0.0
        %2075 = vmatprep.subr.mxu0 0.0
        %2076 = vmatpush1.msra.mxu0 0.0
        %2077 = vmatprep.subr.mxu0 0.0
        %2078 = vmatpush1.msra.mxu0 0.0
        %2079 = vmatprep.subr.mxu0 0.0
        %2080 = vmatpush1.msra.mxu0 0.0
        %2081 = vmatprep.subr.mxu0 0.0
        %2082 = vmatpush1.msra.mxu0 0.0
        %2083 = vmatprep.subr.mxu0 0.0
        %2084 = vmatpush1.msra.mxu0 0.0
        %2085 = vmatprep.subr.mxu0 0.0
        %2086 = vmatpush1.msra.mxu0 0.0
        %2087 = vmatprep.subr.mxu0 0.0
        %2088 = vmatpush1.msra.mxu0 0.0
        %2089 = vmatprep.subr.mxu0 0.0
        %2090 = vmatpush1.msra.mxu0 0.0
        %2091 = vmatprep.subr.mxu0 0.0
        %2092 = vmatpush1.msra.mxu0 0.0
        %2093 = vmatprep.subr.mxu0 0.0
        %2094 = vmatpush1.msra.mxu0 0.0
        %2095 = vmatprep.subr.mxu0 0.0
        %2096 = vmatpush1.msra.mxu0 0.0
        %2097 = vmatprep.subr.mxu0 0.0
        %2098 = vmatpush1.msra.mxu0 0.0
        %2099 = vmatprep.subr.mxu0 0.0
        %2100 = vmatpush1.msra.mxu0 0.0
        %2101 = vmatprep.subr.mxu0 0.0
        %2102 = vmatpush1.msra.mxu0 0.0
        %2103 = vmatprep.subr.mxu0 0.0
        %2104 = vmatpush1.msra.mxu0 0.0
        %2105 = vmatprep.subr.mxu0 0.0
        %2106 = vmatpush1.msra.mxu0 0.0
        %2107 = vmatprep.subr.mxu0 0.0
        %2108 = vmatpush1.msra.mxu0 0.0
        %2109 = vmatprep.subr.mxu0 0.0
        %2110 = vmatpush1.msra.mxu0 0.0
        %2111 = vmatprep.subr.mxu0 0.0
        %2112 = vmatpush1.msra.mxu0 0.0
        %2113 = vmatprep.subr.mxu0 0.0
        %2114 = vmatpush1.msra.mxu0 0.0
        %2115 = vmatprep.mubr.f32.mxu0 0.0
        %2116 = vmatmul.mubr.f32.gmra.mrb[0].mxu0 %v2049
        %v2117 = vpop.f32.mrb[0].mxu0
        %v2118 = vadd.f32 %v2046, %v2117
        %v2119 = vpop.f32.mrb[0].mxu0
        %2120 = vdwg.mxu0
        %2121 = vst.msk [vmem:[%s638] sm:$0xff] %vm1447, %v2118
        %s2122 = sand.u32 %s426, 1
        %s2123 = scalar_lea.sflag [#allocation3], %s2122
        %s2124 = sand.u32 %s426, 1
        %s2125 = smul.addr %s2124, 8
        %s2126 = scalar_lea.vmem [#allocation2], %s2125
        %s2127 = sand.u32 %s452, 1
        %s2128 = scalar_lea.sflag [#allocation5], %s2127
        %s2129 = sand.u32 %s452, 1
        %s2130 = smul.addr %s2129, 8
        %s2131 = scalar_lea.vmem [#allocation4], %s2130
        // Predicated region
        $region89: #{grnn_forward.3} parent=87 // pred_check
          %p2132 = pneg %p436
        $region90: #{grnn_forward.3} parent=87 // pred_check_branch
          %2134 = sbr.rel (%p2132) target = $region92
        $region91: #{grnn_forward.3} parent=87 // pred_region
          %s2136 = ssub.s32 128, 128
          %2137 = vsyncadd %s2123, %s2136
          %s2138 = smul.addr %s36, 128
          %s2139 = scalar_lea.hbm %s17, %s2138
          %s2141 = sshll.u32 %s2126, 4
          %s2142 = int_to_ptr.vmem [resolvable:$true] %s2141
          %2144 = dma.vmem_to_hbm [thread:$0]  %s2142, 128, %s2139, %s2123
        $region92: #{grnn_forward.3} parent=87 // pred_fallthru
          _
        // Predicated region
        $region93: #{grnn_forward.3} parent=87 // pred_check
          %p2145 = pneg %p462
        $region94: #{grnn_forward.3} parent=87 // pred_check_branch
          %2147 = sbr.rel (%p2145) target = $region96
        $region95: #{grnn_forward.3} parent=87 // pred_region
          %s2149 = ssub.s32 128, 128
          %2150 = vsyncadd %s2128, %s2149
          %s2151 = smul.addr %s36, 128
          %s2152 = scalar_lea.hbm %s18, %s2151
          %s2154 = sshll.u32 %s2131, 4
          %s2155 = int_to_ptr.vmem [resolvable:$true] %s2154
          %2157 = dma.vmem_to_hbm [thread:$0]  %s2155, 128, %s2152, %s2128
        $region96: #{grnn_forward.3} parent=87 // pred_fallthru
          _
      $region88: #{grnn_forward.3} parent=5 // pred_fallthru
        _
      %p2158 = scmp.le.s32.totalorder 2, %s31
      // Predicated region
      $region97: #{grnn_forward.3} parent=5 // pred_check
        %p2159 = pneg %p2158
      $region98: #{grnn_forward.3} parent=5 // pred_check_branch
        %2161 = sbr.rel (%p2159) target = $region100
      $region99: #{grnn_forward.3} parent=5 // pred_region
        %s2162 = ssub.s32 %s31, 2
        // Predicated region
        $region101: #{grnn_forward.3} parent=99 // pred_check
          %p2163 = pneg %p442
        $region102: #{grnn_forward.3} parent=99 // pred_check_branch
          %2165 = sbr.rel (%p2163) target = $region104
        $region103: #{grnn_forward.3} parent=99 // pred_region
          %s2166 = sand.u32 %s427, 1
          %s2167 = scalar_lea.sflag [#allocation3], %s2166
          %s2168 = sand.u32 %s427, 1
          %s2169 = smul.addr %s2168, 8
          %s2170 = scalar_lea.vmem [#allocation2], %s2169
          %2171 = dma.done %s2167, 128
        $region104: #{grnn_forward.3} parent=99 // pred_fallthru
          _
        // Predicated region
        $region105: #{grnn_forward.3} parent=99 // pred_check
          %p2172 = pneg %p468
        $region106: #{grnn_forward.3} parent=99 // pred_check_branch
          %2174 = sbr.rel (%p2172) target = $region108
        $region107: #{grnn_forward.3} parent=99 // pred_region
          %s2175 = sand.u32 %s453, 1
          %s2176 = scalar_lea.sflag [#allocation5], %s2175
          %s2177 = sand.u32 %s453, 1
          %s2178 = smul.addr %s2177, 8
          %s2179 = scalar_lea.vmem [#allocation4], %s2178
          %2180 = dma.done %s2176, 128
        $region108: #{grnn_forward.3} parent=99 // pred_fallthru
          _
      $region100: #{grnn_forward.3} parent=5 // pred_fallthru
        _
    $region6: #{grnn_forward.3} parent=1 // loop_footer
      %s35 = sadd.s32 1, %s31
    $region7: #{grnn_forward.3} parent=1 // loop_footer_branch
      %30 = sbr.rel target = $region3
    $region8: #{grnn_forward.3} parent=1 // loop_exit
      _
    %2181 = vsyncpa [#allocation3], 1
    %s2182 = scalar_lea.sflag [#allocation3], 1
    %2183 = vsyncpa %s2182, 1
    %2184 = vsyncpa [#allocation5], 1
    %s2185 = scalar_lea.sflag [#allocation5], 1
    %2186 = vsyncpa %s2185, 1

// kernel: grnn_forward.2
$region0: #{grnn_forward.2}
  #allocation0 [shape = 'u32[]', space=smem, size = 0x4, offset = 0x4, fixed_abs, tag = 'smem constant byte address 0x4 - core index']
  #allocation1 [shape = 'u32[144,128]{1,0:T(1,128)}', space=vmem, size = 0x12000, scoped, tag = 'internal scratch']
  #allocation2 [shape = 'f32[1,1]{1,0:T(1,128)S(1)}', space=vmem, size = 0x200, scoped, tag = 'scoped memory for grnn_forward.2']
  #allocation3 [shape = 'f32[1,1]{1,0:T(1,128)S(1)}', space=vmem, size = 0x200, scoped, tag = 'scoped memory for grnn_forward.2']
  %s0 = inlined_call_operand.vmem [shape: f32[256,16], index: 0, kind: input, shape index: {}]
  %s1 = inlined_call_operand.vmem [shape: f32[16,128], index: 1, kind: input, shape index: {}]
  %s2 = inlined_call_operand.vmem [shape: f32[16,128], index: 2, kind: input, shape index: {}]
  %s3 = inlined_call_operand.vmem [shape: f32[16,64], index: 3, kind: input, shape index: {}]
  %s4 = inlined_call_operand.vmem [shape: f32[16,64], index: 4, kind: input, shape index: {}]
  %s5 = inlined_call_operand.vmem [shape: f32[16,128], index: 5, kind: input, shape index: {}]
  %s6 = inlined_call_operand.vmem [shape: f32[128,64], index: 6, kind: input, shape index: {}]
  %s7 = inlined_call_operand.vmem [shape: f32[1,64], index: 7, kind: input, shape index: {}]
  %s8 = inlined_call_operand.vmem [shape: f32[64,32], index: 8, kind: input, shape index: {}]
  %s9 = inlined_call_operand.vmem [shape: f32[1,32], index: 9, kind: input, shape index: {}]
  %s10 = inlined_call_operand.vmem [shape: f32[64,32], index: 10, kind: input, shape index: {}]
  %s11 = inlined_call_operand.vmem [shape: f32[1,32], index: 11, kind: input, shape index: {}]
  %s12 = inlined_call_operand.vmem [shape: f32[1,32], index: 12, kind: input, shape index: {}]
  %s13 = inlined_call_operand.<no memory space> [shape: f32[1,1], index: 13, kind: input, shape index: {}]
  %s14 = inlined_call_operand.vmem [shape: f32[32,32], index: 14, kind: input, shape index: {}]
  %s15 = inlined_call_operand.vmem [shape: f32[1,32], index: 15, kind: input, shape index: {}]
  %s16 = inlined_call_operand.vmem [shape: f32[1,32], index: 16, kind: input, shape index: {}]
  %s17 = inlined_call_operand.<no memory space> [shape: f32[1,1], index: 17, kind: input, shape index: {}]
  %s18 = inlined_call_operand.vmem [shape: f32[256,64], index: 18, kind: output, shape index: {0}]
  %s19 = inlined_call_operand.vmem [shape: f32[256,1], index: 19, kind: output, shape index: {1}]
  %s20 = inlined_call_operand.vmem [shape: f32[256,1], index: 20, kind: output, shape index: {2}]
  %21 = xla_tuple %s18, %s19, %s20
  %s22 = sld [smem:[#allocation0]]
  $region121: #{grnn_forward.2} parent=0
    _
  %s24 = ssub.s32 1, %s22
  %s25 = scalar_select 0, %s24, %s22
  %v26 = vstv %s13
  %27 = vst [vmem:[#allocation2] sm:$0x1] %v26
  %v28 = vstv %s17
  %29 = vst [vmem:[#allocation3] sm:$0x1] %v28
  loop: start=0, step=1, limit=4
  $region2: #{grnn_forward.2} parent=0 // loop_pre_header
    _
  $region3: #{grnn_forward.2} parent=0 // loop_header
    %s31 = sphi 0, %s35
    %p32 = scmp.ge.s32.totalorder %s31, 4
    %s41 = sphi 0, %s43
    %s44 = sphi 0, %s41
    %s45 = sphi 0, %s44
    %s61 = sphi 0, %s45
    %s65 = sphi 0, %s65
    %s67 = sphi 0, %s65
    %s68 = sphi 0, %s67
    %s82 = sphi 0, %s68
    %s88 = sphi 0, %s90
    %s91 = sphi 0, %s88
    %s92 = sphi 0, %s91
    %s108 = sphi 0, %s92
    %s112 = sphi 0, %s112
    %s114 = sphi 0, %s112
    %s115 = sphi 0, %s114
    %s129 = sphi 0, %s115
    %s135 = sphi 0, %s137
    %s138 = sphi 0, %s135
    %s139 = sphi 0, %s138
    %s155 = sphi 0, %s139
    %s159 = sphi 0, %s159
    %s161 = sphi 0, %s159
    %s162 = sphi 0, %s161
    %s176 = sphi 0, %s162
    %s180 = sphi 0, %s180
    %s182 = sphi 0, %s180
    %s183 = sphi 0, %s182
    %s197 = sphi 0, %s183
    %s201 = sphi 0, %s201
    %s203 = sphi 0, %s201
    %s204 = sphi 0, %s203
    %s218 = sphi 0, %s204
    %s222 = sphi 0, %s222
    %s224 = sphi 0, %s222
    %s225 = sphi 0, %s224
    %s239 = sphi 0, %s225
    %s243 = sphi 0, %s243
    %s245 = sphi 0, %s243
    %s246 = sphi 0, %s245
    %s260 = sphi 0, %s246
    %s264 = sphi 0, %s264
    %s266 = sphi 0, %s264
    %s267 = sphi 0, %s266
    %s281 = sphi 0, %s267
    %s285 = sphi 0, %s285
    %s287 = sphi 0, %s285
    %s288 = sphi 0, %s287
    %s302 = sphi 0, %s288
    %s306 = sphi 0, %s306
    %s308 = sphi 0, %s306
    %s309 = sphi 0, %s308
    %s323 = sphi 0, %s309
    %s327 = sphi 0, %s327
    %s329 = sphi 0, %s327
    %s330 = sphi 0, %s329
    %s344 = sphi 0, %s330
    %s348 = sphi 0, %s348
    %s350 = sphi 0, %s348
    %s351 = sphi 0, %s350
    %s365 = sphi 0, %s351
    %s369 = sphi 0, %s369
    %s371 = sphi 0, %s369
    %s372 = sphi 0, %s371
    %s386 = sphi 0, %s372
    %s390 = sphi 0, %s390
    %s392 = sphi 0, %s390
    %s393 = sphi 0, %s392
    %s407 = sphi 0, %s393
    %s411 = sphi 0, %s411
    %s413 = sphi 0, %s411
    %s414 = sphi 0, %s413
    %s428 = sphi 0, %s414
    %s434 = sphi 0, %s436
    %s437 = sphi 0, %s434
    %s438 = sphi 0, %s437
    %s454 = sphi 0, %s438
    %s460 = sphi 0, %s462
    %s463 = sphi 0, %s460
    %s464 = sphi 0, %s463
    %s480 = sphi 0, %s464
    %s486 = sphi 0, %s488
    %s489 = sphi 0, %s486
    %s490 = sphi 0, %s489
    %s506 = sphi 0, %s490
  $region4: #{grnn_forward.2} parent=0 // loop_header_branch
    %34 = sbr.rel (%p32) target = $region8
  $region5: #{grnn_forward.2} parent=0 // loop_body
    %s36 = ssub.s32 %s31, 1
    %s37 = ssub.s32 %s31, 2
    %s38 = sadd.s32 %s31, 1
    %s39 = ssub.s32 %s31, %s38
    %p40 = scmp.eq.s32.totalorder %s39, 0
    %s42 = sadd.s32 %s41, 1
    %s43 = scalar_select %p40, %s41, %s42
    %p46 = pneg %p40
    %p47 = scmp.eq.s32.totalorder %s31, 1
    %p48 = por %p46, %p47
    %p49 = scmp.ne.s32.totalorder %s41, %s44
    %p50 = scmp.eq.s32.totalorder %s31, 0
    %p51 = por %p49, %p50
    %p52 = scmp.ne.s32.totalorder %s41, %s44
    %p53 = scmp.eq.s32.totalorder %s36, 1
    %p54 = por %p52, %p53
    %p55 = scmp.ne.s32.totalorder %s44, %s45
    %p56 = scmp.eq.s32.totalorder %s36, 0
    %p57 = por %p55, %p56
    %p58 = scmp.ne.s32.totalorder %s44, %s45
    %p59 = scmp.eq.s32.totalorder %s37, 1
    %p60 = por %p58, %p59
    %p62 = scmp.ne.s32.totalorder %s45, %s61
    %p63 = scmp.eq.s32.totalorder %s37, 0
    %p64 = por %p62, %p63
    %s66 = sadd.s32 %s65, 1
    %p69 = scmp.eq.s32.totalorder %s31, 1
    %p70 = scmp.ne.s32.totalorder %s65, %s67
    %p71 = scmp.eq.s32.totalorder %s31, 0
    %p72 = por %p70, %p71
    %p73 = scmp.ne.s32.totalorder %s65, %s67
    %p74 = scmp.eq.s32.totalorder %s36, 1
    %p75 = por %p73, %p74
    %p76 = scmp.ne.s32.totalorder %s67, %s68
    %p77 = scmp.eq.s32.totalorder %s36, 0
    %p78 = por %p76, %p77
    %p79 = scmp.ne.s32.totalorder %s67, %s68
    %p80 = scmp.eq.s32.totalorder %s37, 1
    %p81 = por %p79, %p80
    %p83 = scmp.ne.s32.totalorder %s68, %s82
    %p84 = scmp.eq.s32.totalorder %s37, 0
    %p85 = por %p83, %p84
    %s86 = ssub.s32 %s31, %s38
    %p87 = scmp.eq.s32.totalorder %s86, 0
    %s89 = sadd.s32 %s88, 1
    %s90 = scalar_select %p87, %s88, %s89
    %p93 = pneg %p87
    %p94 = scmp.eq.s32.totalorder %s31, 1
    %p95 = por %p93, %p94
    %p96 = scmp.ne.s32.totalorder %s88, %s91
    %p97 = scmp.eq.s32.totalorder %s31, 0
    %p98 = por %p96, %p97
    %p99 = scmp.ne.s32.totalorder %s88, %s91
    %p100 = scmp.eq.s32.totalorder %s36, 1
    %p101 = por %p99, %p100
    %p102 = scmp.ne.s32.totalorder %s91, %s92
    %p103 = scmp.eq.s32.totalorder %s36, 0
    %p104 = por %p102, %p103
    %p105 = scmp.ne.s32.totalorder %s91, %s92
    %p106 = scmp.eq.s32.totalorder %s37, 1
    %p107 = por %p105, %p106
    %p109 = scmp.ne.s32.totalorder %s92, %s108
    %p110 = scmp.eq.s32.totalorder %s37, 0
    %p111 = por %p109, %p110
    %s113 = sadd.s32 %s112, 1
    %p116 = scmp.eq.s32.totalorder %s31, 1
    %p117 = scmp.ne.s32.totalorder %s112, %s114
    %p118 = scmp.eq.s32.totalorder %s31, 0
    %p119 = por %p117, %p118
    %p120 = scmp.ne.s32.totalorder %s112, %s114
    %p121 = scmp.eq.s32.totalorder %s36, 1
    %p122 = por %p120, %p121
    %p123 = scmp.ne.s32.totalorder %s114, %s115
    %p124 = scmp.eq.s32.totalorder %s36, 0
    %p125 = por %p123, %p124
    %p126 = scmp.ne.s32.totalorder %s114, %s115
    %p127 = scmp.eq.s32.totalorder %s37, 1
    %p128 = por %p126, %p127
    %p130 = scmp.ne.s32.totalorder %s115, %s129
    %p131 = scmp.eq.s32.totalorder %s37, 0
    %p132 = por %p130, %p131
    %s133 = ssub.s32 %s31, %s38
    %p134 = scmp.eq.s32.totalorder %s133, 0
    %s136 = sadd.s32 %s135, 1
    %s137 = scalar_select %p134, %s135, %s136
    %p140 = pneg %p134
    %p141 = scmp.eq.s32.totalorder %s31, 1
    %p142 = por %p140, %p141
    %p143 = scmp.ne.s32.totalorder %s135, %s138
    %p144 = scmp.eq.s32.totalorder %s31, 0
    %p145 = por %p143, %p144
    %p146 = scmp.ne.s32.totalorder %s135, %s138
    %p147 = scmp.eq.s32.totalorder %s36, 1
    %p148 = por %p146, %p147
    %p149 = scmp.ne.s32.totalorder %s138, %s139
    %p150 = scmp.eq.s32.totalorder %s36, 0
    %p151 = por %p149, %p150
    %p152 = scmp.ne.s32.totalorder %s138, %s139
    %p153 = scmp.eq.s32.totalorder %s37, 1
    %p154 = por %p152, %p153
    %p156 = scmp.ne.s32.totalorder %s139, %s155
    %p157 = scmp.eq.s32.totalorder %s37, 0
    %p158 = por %p156, %p157
    %s160 = sadd.s32 %s159, 1
    %p163 = scmp.eq.s32.totalorder %s31, 1
    %p164 = scmp.ne.s32.totalorder %s159, %s161
    %p165 = scmp.eq.s32.totalorder %s31, 0
    %p166 = por %p164, %p165
    %p167 = scmp.ne.s32.totalorder %s159, %s161
    %p168 = scmp.eq.s32.totalorder %s36, 1
    %p169 = por %p167, %p168
    %p170 = scmp.ne.s32.totalorder %s161, %s162
    %p171 = scmp.eq.s32.totalorder %s36, 0
    %p172 = por %p170, %p171
    %p173 = scmp.ne.s32.totalorder %s161, %s162
    %p174 = scmp.eq.s32.totalorder %s37, 1
    %p175 = por %p173, %p174
    %p177 = scmp.ne.s32.totalorder %s162, %s176
    %p178 = scmp.eq.s32.totalorder %s37, 0
    %p179 = por %p177, %p178
    %s181 = sadd.s32 %s180, 1
    %p184 = scmp.eq.s32.totalorder %s31, 1
    %p185 = scmp.ne.s32.totalorder %s180, %s182
    %p186 = scmp.eq.s32.totalorder %s31, 0
    %p187 = por %p185, %p186
    %p188 = scmp.ne.s32.totalorder %s180, %s182
    %p189 = scmp.eq.s32.totalorder %s36, 1
    %p190 = por %p188, %p189
    %p191 = scmp.ne.s32.totalorder %s182, %s183
    %p192 = scmp.eq.s32.totalorder %s36, 0
    %p193 = por %p191, %p192
    %p194 = scmp.ne.s32.totalorder %s182, %s183
    %p195 = scmp.eq.s32.totalorder %s37, 1
    %p196 = por %p194, %p195
    %p198 = scmp.ne.s32.totalorder %s183, %s197
    %p199 = scmp.eq.s32.totalorder %s37, 0
    %p200 = por %p198, %p199
    %s202 = sadd.s32 %s201, 1
    %p205 = scmp.eq.s32.totalorder %s31, 1
    %p206 = scmp.ne.s32.totalorder %s201, %s203
    %p207 = scmp.eq.s32.totalorder %s31, 0
    %p208 = por %p206, %p207
    %p209 = scmp.ne.s32.totalorder %s201, %s203
    %p210 = scmp.eq.s32.totalorder %s36, 1
    %p211 = por %p209, %p210
    %p212 = scmp.ne.s32.totalorder %s203, %s204
    %p213 = scmp.eq.s32.totalorder %s36, 0
    %p214 = por %p212, %p213
    %p215 = scmp.ne.s32.totalorder %s203, %s204
    %p216 = scmp.eq.s32.totalorder %s37, 1
    %p217 = por %p215, %p216
    %p219 = scmp.ne.s32.totalorder %s204, %s218
    %p220 = scmp.eq.s32.totalorder %s37, 0
    %p221 = por %p219, %p220
    %s223 = sadd.s32 %s222, 1
    %p226 = scmp.eq.s32.totalorder %s31, 1
    %p227 = scmp.ne.s32.totalorder %s222, %s224
    %p228 = scmp.eq.s32.totalorder %s31, 0
    %p229 = por %p227, %p228
    %p230 = scmp.ne.s32.totalorder %s222, %s224
    %p231 = scmp.eq.s32.totalorder %s36, 1
    %p232 = por %p230, %p231
    %p233 = scmp.ne.s32.totalorder %s224, %s225
    %p234 = scmp.eq.s32.totalorder %s36, 0
    %p235 = por %p233, %p234
    %p236 = scmp.ne.s32.totalorder %s224, %s225
    %p237 = scmp.eq.s32.totalorder %s37, 1
    %p238 = por %p236, %p237
    %p240 = scmp.ne.s32.totalorder %s225, %s239
    %p241 = scmp.eq.s32.totalorder %s37, 0
    %p242 = por %p240, %p241
    %s244 = sadd.s32 %s243, 1
    %p247 = scmp.eq.s32.totalorder %s31, 1
    %p248 = scmp.ne.s32.totalorder %s243, %s245
    %p249 = scmp.eq.s32.totalorder %s31, 0
    %p250 = por %p248, %p249
    %p251 = scmp.ne.s32.totalorder %s243, %s245
    %p252 = scmp.eq.s32.totalorder %s36, 1
    %p253 = por %p251, %p252
    %p254 = scmp.ne.s32.totalorder %s245, %s246
    %p255 = scmp.eq.s32.totalorder %s36, 0
    %p256 = por %p254, %p255
    %p257 = scmp.ne.s32.totalorder %s245, %s246
    %p258 = scmp.eq.s32.totalorder %s37, 1
    %p259 = por %p257, %p258
    %p261 = scmp.ne.s32.totalorder %s246, %s260
    %p262 = scmp.eq.s32.totalorder %s37, 0
    %p263 = por %p261, %p262
    %s265 = sadd.s32 %s264, 1
    %p268 = scmp.eq.s32.totalorder %s31, 1
    %p269 = scmp.ne.s32.totalorder %s264, %s266
    %p270 = scmp.eq.s32.totalorder %s31, 0
    %p271 = por %p269, %p270
    %p272 = scmp.ne.s32.totalorder %s264, %s266
    %p273 = scmp.eq.s32.totalorder %s36, 1
    %p274 = por %p272, %p273
    %p275 = scmp.ne.s32.totalorder %s266, %s267
    %p276 = scmp.eq.s32.totalorder %s36, 0
    %p277 = por %p275, %p276
    %p278 = scmp.ne.s32.totalorder %s266, %s267
    %p279 = scmp.eq.s32.totalorder %s37, 1
    %p280 = por %p278, %p279
    %p282 = scmp.ne.s32.totalorder %s267, %s281
    %p283 = scmp.eq.s32.totalorder %s37, 0
    %p284 = por %p282, %p283
    %s286 = sadd.s32 %s285, 1
    %p289 = scmp.eq.s32.totalorder %s31, 1
    %p290 = scmp.ne.s32.totalorder %s285, %s287
    %p291 = scmp.eq.s32.totalorder %s31, 0
    %p292 = por %p290, %p291
    %p293 = scmp.ne.s32.totalorder %s285, %s287
    %p294 = scmp.eq.s32.totalorder %s36, 1
    %p295 = por %p293, %p294
    %p296 = scmp.ne.s32.totalorder %s287, %s288
    %p297 = scmp.eq.s32.totalorder %s36, 0
    %p298 = por %p296, %p297
    %p299 = scmp.ne.s32.totalorder %s287, %s288
    %p300 = scmp.eq.s32.totalorder %s37, 1
    %p301 = por %p299, %p300
    %p303 = scmp.ne.s32.totalorder %s288, %s302
    %p304 = scmp.eq.s32.totalorder %s37, 0
    %p305 = por %p303, %p304
    %s307 = sadd.s32 %s306, 1
    %p310 = scmp.eq.s32.totalorder %s31, 1
    %p311 = scmp.ne.s32.totalorder %s306, %s308
    %p312 = scmp.eq.s32.totalorder %s31, 0
    %p313 = por %p311, %p312
    %p314 = scmp.ne.s32.totalorder %s306, %s308
    %p315 = scmp.eq.s32.totalorder %s36, 1
    %p316 = por %p314, %p315
    %p317 = scmp.ne.s32.totalorder %s308, %s309
    %p318 = scmp.eq.s32.totalorder %s36, 0
    %p319 = por %p317, %p318
    %p320 = scmp.ne.s32.totalorder %s308, %s309
    %p321 = scmp.eq.s32.totalorder %s37, 1
    %p322 = por %p320, %p321
    %p324 = scmp.ne.s32.totalorder %s309, %s323
    %p325 = scmp.eq.s32.totalorder %s37, 0
    %p326 = por %p324, %p325
    %s328 = sadd.s32 %s327, 1
    %p331 = scmp.eq.s32.totalorder %s31, 1
    %p332 = scmp.ne.s32.totalorder %s327, %s329
    %p333 = scmp.eq.s32.totalorder %s31, 0
    %p334 = por %p332, %p333
    %p335 = scmp.ne.s32.totalorder %s327, %s329
    %p336 = scmp.eq.s32.totalorder %s36, 1
    %p337 = por %p335, %p336
    %p338 = scmp.ne.s32.totalorder %s329, %s330
    %p339 = scmp.eq.s32.totalorder %s36, 0
    %p340 = por %p338, %p339
    %p341 = scmp.ne.s32.totalorder %s329, %s330
    %p342 = scmp.eq.s32.totalorder %s37, 1
    %p343 = por %p341, %p342
    %p345 = scmp.ne.s32.totalorder %s330, %s344
    %p346 = scmp.eq.s32.totalorder %s37, 0
    %p347 = por %p345, %p346
    %s349 = sadd.s32 %s348, 1
    %p352 = scmp.eq.s32.totalorder %s31, 1
    %p353 = scmp.ne.s32.totalorder %s348, %s350
    %p354 = scmp.eq.s32.totalorder %s31, 0
    %p355 = por %p353, %p354
    %p356 = scmp.ne.s32.totalorder %s348, %s350
    %p357 = scmp.eq.s32.totalorder %s36, 1
    %p358 = por %p356, %p357
    %p359 = scmp.ne.s32.totalorder %s350, %s351
    %p360 = scmp.eq.s32.totalorder %s36, 0
    %p361 = por %p359, %p360
    %p362 = scmp.ne.s32.totalorder %s350, %s351
    %p363 = scmp.eq.s32.totalorder %s37, 1
    %p364 = por %p362, %p363
    %p366 = scmp.ne.s32.totalorder %s351, %s365
    %p367 = scmp.eq.s32.totalorder %s37, 0
    %p368 = por %p366, %p367
    %s370 = sadd.s32 %s369, 1
    %p373 = scmp.eq.s32.totalorder %s31, 1
    %p374 = scmp.ne.s32.totalorder %s369, %s371
    %p375 = scmp.eq.s32.totalorder %s31, 0
    %p376 = por %p374, %p375
    %p377 = scmp.ne.s32.totalorder %s369, %s371
    %p378 = scmp.eq.s32.totalorder %s36, 1
    %p379 = por %p377, %p378
    %p380 = scmp.ne.s32.totalorder %s371, %s372
    %p381 = scmp.eq.s32.totalorder %s36, 0
    %p382 = por %p380, %p381
    %p383 = scmp.ne.s32.totalorder %s371, %s372
    %p384 = scmp.eq.s32.totalorder %s37, 1
    %p385 = por %p383, %p384
    %p387 = scmp.ne.s32.totalorder %s372, %s386
    %p388 = scmp.eq.s32.totalorder %s37, 0
    %p389 = por %p387, %p388
    %s391 = sadd.s32 %s390, 1
    %p394 = scmp.eq.s32.totalorder %s31, 1
    %p395 = scmp.ne.s32.totalorder %s390, %s392
    %p396 = scmp.eq.s32.totalorder %s31, 0
    %p397 = por %p395, %p396
    %p398 = scmp.ne.s32.totalorder %s390, %s392
    %p399 = scmp.eq.s32.totalorder %s36, 1
    %p400 = por %p398, %p399
    %p401 = scmp.ne.s32.totalorder %s392, %s393
    %p402 = scmp.eq.s32.totalorder %s36, 0
    %p403 = por %p401, %p402
    %p404 = scmp.ne.s32.totalorder %s392, %s393
    %p405 = scmp.eq.s32.totalorder %s37, 1
    %p406 = por %p404, %p405
    %p408 = scmp.ne.s32.totalorder %s393, %s407
    %p409 = scmp.eq.s32.totalorder %s37, 0
    %p410 = por %p408, %p409
    %s412 = sadd.s32 %s411, 1
    %p415 = scmp.eq.s32.totalorder %s31, 1
    %p416 = scmp.ne.s32.totalorder %s411, %s413
    %p417 = scmp.eq.s32.totalorder %s31, 0
    %p418 = por %p416, %p417
    %p419 = scmp.ne.s32.totalorder %s411, %s413
    %p420 = scmp.eq.s32.totalorder %s36, 1
    %p421 = por %p419, %p420
    %p422 = scmp.ne.s32.totalorder %s413, %s414
    %p423 = scmp.eq.s32.totalorder %s36, 0
    %p424 = por %p422, %p423
    %p425 = scmp.ne.s32.totalorder %s413, %s414
    %p426 = scmp.eq.s32.totalorder %s37, 1
    %p427 = por %p425, %p426
    %p429 = scmp.ne.s32.totalorder %s414, %s428
    %p430 = scmp.eq.s32.totalorder %s37, 0
    %p431 = por %p429, %p430
    %s432 = ssub.s32 %s31, %s38
    %p433 = scmp.eq.s32.totalorder %s432, 0
    %s435 = sadd.s32 %s434, 1
    %s436 = scalar_select %p433, %s434, %s435
    %p439 = pneg %p433
    %p440 = scmp.eq.s32.totalorder %s31, 1
    %p441 = por %p439, %p440
    %p442 = scmp.ne.s32.totalorder %s434, %s437
    %p443 = scmp.eq.s32.totalorder %s31, 0
    %p444 = por %p442, %p443
    %p445 = scmp.ne.s32.totalorder %s434, %s437
    %p446 = scmp.eq.s32.totalorder %s36, 1
    %p447 = por %p445, %p446
    %p448 = scmp.ne.s32.totalorder %s437, %s438
    %p449 = scmp.eq.s32.totalorder %s36, 0
    %p450 = por %p448, %p449
    %p451 = scmp.ne.s32.totalorder %s437, %s438
    %p452 = scmp.eq.s32.totalorder %s37, 1
    %p453 = por %p451, %p452
    %p455 = scmp.ne.s32.totalorder %s438, %s454
    %p456 = scmp.eq.s32.totalorder %s37, 0
    %p457 = por %p455, %p456
    %s458 = ssub.s32 %s31, %s38
    %p459 = scmp.eq.s32.totalorder %s458, 0
    %s461 = sadd.s32 %s460, 1
    %s462 = scalar_select %p459, %s460, %s461
    %p465 = pneg %p459
    %p466 = scmp.eq.s32.totalorder %s31, 1
    %p467 = por %p465, %p466
    %p468 = scmp.ne.s32.totalorder %s460, %s463
    %p469 = scmp.eq.s32.totalorder %s31, 0
    %p470 = por %p468, %p469
    %p471 = scmp.ne.s32.totalorder %s460, %s463
    %p472 = scmp.eq.s32.totalorder %s36, 1
    %p473 = por %p471, %p472
    %p474 = scmp.ne.s32.totalorder %s463, %s464
    %p475 = scmp.eq.s32.totalorder %s36, 0
    %p476 = por %p474, %p475
    %p477 = scmp.ne.s32.totalorder %s463, %s464
    %p478 = scmp.eq.s32.totalorder %s37, 1
    %p479 = por %p477, %p478
    %p481 = scmp.ne.s32.totalorder %s464, %s480
    %p482 = scmp.eq.s32.totalorder %s37, 0
    %p483 = por %p481, %p482
    %s484 = ssub.s32 %s31, %s38
    %p485 = scmp.eq.s32.totalorder %s484, 0
    %s487 = sadd.s32 %s486, 1
    %s488 = scalar_select %p485, %s486, %s487
    %p491 = pneg %p485
    %p492 = scmp.eq.s32.totalorder %s31, 1
    %p493 = por %p491, %p492
    %p494 = scmp.ne.s32.totalorder %s486, %s489
    %p495 = scmp.eq.s32.totalorder %s31, 0
    %p496 = por %p494, %p495
    %p497 = scmp.ne.s32.totalorder %s486, %s489
    %p498 = scmp.eq.s32.totalorder %s36, 1
    %p499 = por %p497, %p498
    %p500 = scmp.ne.s32.totalorder %s489, %s490
    %p501 = scmp.eq.s32.totalorder %s36, 0
    %p502 = por %p500, %p501
    %p503 = scmp.ne.s32.totalorder %s489, %s490
    %p504 = scmp.eq.s32.totalorder %s37, 1
    %p505 = por %p503, %p504
    %p507 = scmp.ne.s32.totalorder %s490, %s506
    %p508 = scmp.eq.s32.totalorder %s37, 0
    %p509 = por %p507, %p508
    %p510 = scmp.le.s32.totalorder 1, %s31
    %p511 = scmp.lt.s32.totalorder %s31, 3
    %p512 = pnand %p510, %p511
    %p513 = pneg %p512
    // Predicated region
    $region9: #{grnn_forward.2} parent=5 // pred_check
      _
    $region10: #{grnn_forward.2} parent=5 // pred_check_branch
      %515 = sbr.rel (%p512) target = $region12
    $region11: #{grnn_forward.2} parent=5 // pred_region
      %s516 = ssub.s32 %s31, 1
      // Predicated region
      $region13: #{grnn_forward.2} parent=11 // pred_check
        %p517 = pneg %p78
      $region14: #{grnn_forward.2} parent=11 // pred_check_branch
        %519 = sbr.rel (%p517) target = $region16
      $region15: #{grnn_forward.2} parent=11 // pred_region
        _
      $region16: #{grnn_forward.2} parent=11 // pred_fallthru
        _
      // Predicated region
      $region17: #{grnn_forward.2} parent=11 // pred_check
        %p520 = pneg %p125
      $region18: #{grnn_forward.2} parent=11 // pred_check_branch
        %522 = sbr.rel (%p520) target = $region20
      $region19: #{grnn_forward.2} parent=11 // pred_region
        _
      $region20: #{grnn_forward.2} parent=11 // pred_fallthru
        _
      // Predicated region
      $region21: #{grnn_forward.2} parent=11 // pred_check
        %p523 = pneg %p172
      $region22: #{grnn_forward.2} parent=11 // pred_check_branch
        %525 = sbr.rel (%p523) target = $region24
      $region23: #{grnn_forward.2} parent=11 // pred_region
        _
      $region24: #{grnn_forward.2} parent=11 // pred_fallthru
        _
      // Predicated region
      $region25: #{grnn_forward.2} parent=11 // pred_check
        %p526 = pneg %p193
      $region26: #{grnn_forward.2} parent=11 // pred_check_branch
        %528 = sbr.rel (%p526) target = $region28
      $region27: #{grnn_forward.2} parent=11 // pred_region
        _
      $region28: #{grnn_forward.2} parent=11 // pred_fallthru
        _
      // Predicated region
      $region29: #{grnn_forward.2} parent=11 // pred_check
        %p529 = pneg %p214
      $region30: #{grnn_forward.2} parent=11 // pred_check_branch
        %531 = sbr.rel (%p529) target = $region32
      $region31: #{grnn_forward.2} parent=11 // pred_region
        _
      $region32: #{grnn_forward.2} parent=11 // pred_fallthru
        _
      // Predicated region
      $region33: #{grnn_forward.2} parent=11 // pred_check
        %p532 = pneg %p235
      $region34: #{grnn_forward.2} parent=11 // pred_check_branch
        %534 = sbr.rel (%p532) target = $region36
      $region35: #{grnn_forward.2} parent=11 // pred_region
        _
      $region36: #{grnn_forward.2} parent=11 // pred_fallthru
        _
      // Predicated region
      $region37: #{grnn_forward.2} parent=11 // pred_check
        %p535 = pneg %p256
      $region38: #{grnn_forward.2} parent=11 // pred_check_branch
        %537 = sbr.rel (%p535) target = $region40
      $region39: #{grnn_forward.2} parent=11 // pred_region
        _
      $region40: #{grnn_forward.2} parent=11 // pred_fallthru
        _
      // Predicated region
      $region41: #{grnn_forward.2} parent=11 // pred_check
        %p538 = pneg %p277
      $region42: #{grnn_forward.2} parent=11 // pred_check_branch
        %540 = sbr.rel (%p538) target = $region44
      $region43: #{grnn_forward.2} parent=11 // pred_region
        _
      $region44: #{grnn_forward.2} parent=11 // pred_fallthru
        _
      // Predicated region
      $region45: #{grnn_forward.2} parent=11 // pred_check
        %p541 = pneg %p298
      $region46: #{grnn_forward.2} parent=11 // pred_check_branch
        %543 = sbr.rel (%p541) target = $region48
      $region47: #{grnn_forward.2} parent=11 // pred_region
        _
      $region48: #{grnn_forward.2} parent=11 // pred_fallthru
        _
      // Predicated region
      $region49: #{grnn_forward.2} parent=11 // pred_check
        %p544 = pneg %p319
      $region50: #{grnn_forward.2} parent=11 // pred_check_branch
        %546 = sbr.rel (%p544) target = $region52
      $region51: #{grnn_forward.2} parent=11 // pred_region
        _
      $region52: #{grnn_forward.2} parent=11 // pred_fallthru
        _
      // Predicated region
      $region53: #{grnn_forward.2} parent=11 // pred_check
        %p547 = pneg %p340
      $region54: #{grnn_forward.2} parent=11 // pred_check_branch
        %549 = sbr.rel (%p547) target = $region56
      $region55: #{grnn_forward.2} parent=11 // pred_region
        _
      $region56: #{grnn_forward.2} parent=11 // pred_fallthru
        _
      // Predicated region
      $region57: #{grnn_forward.2} parent=11 // pred_check
        %p550 = pneg %p361
      $region58: #{grnn_forward.2} parent=11 // pred_check_branch
        %552 = sbr.rel (%p550) target = $region60
      $region59: #{grnn_forward.2} parent=11 // pred_region
        _
      $region60: #{grnn_forward.2} parent=11 // pred_fallthru
        _
      // Predicated region
      $region61: #{grnn_forward.2} parent=11 // pred_check
        %p553 = pneg %p382
      $region62: #{grnn_forward.2} parent=11 // pred_check_branch
        %555 = sbr.rel (%p553) target = $region64
      $region63: #{grnn_forward.2} parent=11 // pred_region
        _
      $region64: #{grnn_forward.2} parent=11 // pred_fallthru
        _
      // Predicated region
      $region65: #{grnn_forward.2} parent=11 // pred_check
        %p556 = pneg %p403
      $region66: #{grnn_forward.2} parent=11 // pred_check_branch
        %558 = sbr.rel (%p556) target = $region68
      $region67: #{grnn_forward.2} parent=11 // pred_region
        _
      $region68: #{grnn_forward.2} parent=11 // pred_fallthru
        _
      // Predicated region
      $region69: #{grnn_forward.2} parent=11 // pred_check
        %p559 = pneg %p424
      $region70: #{grnn_forward.2} parent=11 // pred_check_branch
        %561 = sbr.rel (%p559) target = $region72
      $region71: #{grnn_forward.2} parent=11 // pred_region
        _
      $region72: #{grnn_forward.2} parent=11 // pred_fallthru
        _
    $region12: #{grnn_forward.2} parent=5 // pred_fallthru
      _
    %p562 = scmp.lt.s32.totalorder %s31, 2
    // Predicated region
    $region73: #{grnn_forward.2} parent=5 // pred_check
      %p563 = pneg %p562
    $region74: #{grnn_forward.2} parent=5 // pred_check_branch
      %565 = sbr.rel (%p563) target = $region76
    $region75: #{grnn_forward.2} parent=5 // pred_region
      // Predicated region
      $region77: #{grnn_forward.2} parent=75 // pred_check
        %p566 = pneg %p51
      $region78: #{grnn_forward.2} parent=75 // pred_check_branch
        %568 = sbr.rel (%p566) target = $region80
      $region79: #{grnn_forward.2} parent=75 // pred_region
        %s569 = smul.u32 16, %s31
        %p570 = scmp.lt.s32.totalorder %s569, 31
        %s571 = scalar_select %p570, %s569, 31
        %s572 = smul.addr %s571, 8
        %s573 = scalar_lea.vmem %s0, %s572
        %s574 = smul.u32 16, %s31
      $region80: #{grnn_forward.2} parent=75 // pred_fallthru
        _
      // Predicated region
      $region81: #{grnn_forward.2} parent=75 // pred_check
        %p575 = pneg %p98
      $region82: #{grnn_forward.2} parent=75 // pred_check_branch
        %577 = sbr.rel (%p575) target = $region84
      $region83: #{grnn_forward.2} parent=75 // pred_region
        %p578 = scmp.lt.s32.totalorder %s31, 1
        %s579 = scalar_select %p578, %s31, 1
        %s580 = smul.addr %s579, 8
        %s581 = scalar_lea.vmem %s2, %s580
      $region84: #{grnn_forward.2} parent=75 // pred_fallthru
        _
      // Predicated region
      $region85: #{grnn_forward.2} parent=75 // pred_check
        %p582 = pneg %p145
      $region86: #{grnn_forward.2} parent=75 // pred_check_branch
        %584 = sbr.rel (%p582) target = $region88
      $region87: #{grnn_forward.2} parent=75 // pred_region
        %p585 = scmp.lt.s32.totalorder %s31, 1
        %s586 = scalar_select %p585, %s31, 1
        %s587 = smul.addr %s586, 8
        %s588 = scalar_lea.vmem %s4, %s587
      $region88: #{grnn_forward.2} parent=75 // pred_fallthru
        _
    $region76: #{grnn_forward.2} parent=5 // pred_fallthru
      _
    %p589 = scmp.le.s32.totalorder 1, %s31
    %p590 = scmp.lt.s32.totalorder %s31, 3
    %p591 = pnand %p589, %p590
    %p592 = pneg %p591
    // Predicated region
    $region89: #{grnn_forward.2} parent=5 // pred_check
      _
    $region90: #{grnn_forward.2} parent=5 // pred_check_branch
      %594 = sbr.rel (%p591) target = $region92
    $region91: #{grnn_forward.2} parent=5 // pred_region
      %s595 = ssub.s32 %s31, 1
      %s596 = smul.u32 16, %s36
      %p597 = scmp.lt.s32.totalorder %s596, 31
      %s598 = scalar_select %p597, %s596, 31
      %s599 = smul.addr %s598, 8
      %s600 = scalar_lea.vmem %s0, %s599
      %p601 = pneg %p57
      %p602 = pneg %p54
      %p603 = pneg %p78
      %p604 = pneg %p75
      %p605 = scmp.lt.s32.totalorder %s36, 1
      %s606 = scalar_select %p605, %s36, 1
      %s607 = smul.addr %s606, 8
      %s608 = scalar_lea.vmem %s2, %s607
      %p609 = pneg %p104
      %p610 = pneg %p101
      %p611 = pneg %p125
      %p612 = pneg %p122
      %p613 = scmp.lt.s32.totalorder %s36, 1
      %s614 = scalar_select %p613, %s36, 1
      %s615 = smul.addr %s614, 8
      %s616 = scalar_lea.vmem %s4, %s615
      %p617 = pneg %p151
      %p618 = pneg %p148
      %p619 = pneg %p172
      %p620 = pneg %p169
      %p621 = pneg %p193
      %p622 = pneg %p190
      %p623 = pneg %p214
      %p624 = pneg %p211
      %p625 = pneg %p235
      %p626 = pneg %p232
      %p627 = pneg %p256
      %p628 = pneg %p253
      %p629 = pneg %p277
      %p630 = pneg %p274
      %p631 = pneg %p298
      %p632 = pneg %p295
      %p633 = pneg %p319
      %p634 = pneg %p316
      %p635 = pneg %p340
      %p636 = pneg %p337
      %p637 = pneg %p361
      %p638 = pneg %p358
      %p639 = pneg %p382
      %p640 = pneg %p379
      %p641 = pneg %p403
      %p642 = pneg %p400
      %p643 = pneg %p424
      %p644 = pneg %p421
      %p645 = pneg %p450
      %p646 = pneg %p447
      %s647 = smul.u32 16, %s36
      %p648 = scmp.lt.s32.totalorder %s647, 31
      %s649 = scalar_select %p648, %s647, 31
      %s650 = smul.addr %s649, 8
      %s651 = scalar_lea.vmem %s18, %s650
      %p652 = pneg %p476
      %p653 = pneg %p473
      %s654 = smul.u32 16, %s36
      %p655 = scmp.lt.s32.totalorder %s654, 31
      %s656 = scalar_select %p655, %s654, 31
      %s657 = smul.addr %s656, 8
      %s658 = scalar_lea.vmem %s19, %s657
      %p659 = pneg %p502
      %p660 = pneg %p499
      %s661 = smul.u32 16, %s36
      %p662 = scmp.lt.s32.totalorder %s661, 31
      %s663 = scalar_select %p662, %s661, 31
      %s664 = smul.addr %s663, 8
      %s665 = scalar_lea.vmem %s20, %s664
      %s666 = smul.u32 16, %s36
      %p667 = scmp.lt.s32.totalorder %s666, 31
      %s668 = scalar_select %p667, %s666, 31
      %s669 = smul.addr %s668, 8
      %s670 = scalar_lea.vmem %s0, %s669
      %s671 = smul.u32 16, %s36
      %p672 = scmp.lt.s32.totalorder %s36, 1
      %s673 = scalar_select %p672, %s36, 1
      %s674 = smul.addr %s673, 8
      %s675 = scalar_lea.vmem %s2, %s674
      %p676 = scmp.lt.s32.totalorder %s36, 1
      %s677 = scalar_select %p676, %s36, 1
      %s678 = smul.addr %s677, 8
      %s679 = scalar_lea.vmem %s4, %s678
      %s680 = smul.u32 16, %s36
      %p681 = scmp.lt.s32.totalorder %s680, 31
      %s682 = scalar_select %p681, %s680, 31
      %s683 = smul.addr %s682, 8
      %s684 = scalar_lea.vmem %s18, %s683
      %s685 = smul.u32 16, %s36
      %s686 = smul.u32 16, %s36
      %p687 = scmp.lt.s32.totalorder %s686, 31
      %s688 = scalar_select %p687, %s686, 31
      %s689 = smul.addr %s688, 8
      %s690 = scalar_lea.vmem %s19, %s689
      %s691 = smul.u32 16, %s36
      %s692 = smul.u32 16, %s36
      %p693 = scmp.lt.s32.totalorder %s692, 31
      %s694 = scalar_select %p693, %s692, 31
      %s695 = smul.addr %s694, 8
      %s696 = scalar_lea.vmem %s20, %s695
      %s697 = smul.u32 16, %s36
      %v698 = vld [vmem:[%s670] sm:$0xff]
      %v699 = vld [vmem:[%s670 + $0x8] sm:$0xff]
      %v700 = vld [vmem:[%s670 + $0x10] sm:$0xff]
      %v701 = vld [vmem:[%s670 + $0x18] sm:$0xff]
      %v702 = vld [vmem:[%s670 + $0x20] sm:$0xff]
      %v703 = vld [vmem:[%s670 + $0x28] sm:$0xff]
      %v704 = vld [vmem:[%s670 + $0x30] sm:$0xff]
      %v705 = vld [vmem:[%s670 + $0x38] sm:$0xff]
      %v706 = vld [vmem:[%s670 + $0x40] sm:$0xff]
      %v707 = vld [vmem:[%s670 + $0x48] sm:$0xff]
      %v708 = vld [vmem:[%s670 + $0x50] sm:$0xff]
      %v709 = vld [vmem:[%s670 + $0x58] sm:$0xff]
      %v710 = vld [vmem:[%s670 + $0x60] sm:$0xff]
      %v711 = vld [vmem:[%s670 + $0x68] sm:$0xff]
      %v712 = vld [vmem:[%s670 + $0x70] sm:$0xff]
      %v713 = vld [vmem:[%s670 + $0x78] sm:$0xff]
      %v714 = vld [vmem:[%s5] sm:$0xff]
      %v715 = vld [vmem:[%s5 + $0x8] sm:$0xff]
      %vm716 = vcmask 130048
      %v718 = vsel %vm716, %v698, 0
      %v721 = vsel %vm716, %v699, 0
      %v724 = vsel %vm716, %v700, 0
      %v727 = vsel %vm716, %v701, 0
      %v730 = vsel %vm716, %v702, 0
      %v733 = vsel %vm716, %v703, 0
      %v736 = vsel %vm716, %v704, 0
      %v739 = vsel %vm716, %v705, 0
      %v742 = vsel %vm716, %v706, 0
      %v745 = vsel %vm716, %v707, 0
      %v748 = vsel %vm716, %v708, 0
      %v751 = vsel %vm716, %v709, 0
      %v754 = vsel %vm716, %v710, 0
      %v757 = vsel %vm716, %v711, 0
      %v760 = vsel %vm716, %v712, 0
      %v763 = vsel %vm716, %v713, 0
      %765 = vmatprep.subr.mxu0 0.0
      %766 = vmatpush1.msra.mxu0 %v714
      %767 = vmatprep.subr.mxu0 0.0
      %768 = vmatpush1.msra.mxu0 %v715
      %769 = vmatprep.subr.mxu0 0.0
      %770 = vmatpush1.msra.mxu0 0.0
      %771 = vmatprep.subr.mxu0 0.0
      %772 = vmatpush1.msra.mxu0 0.0
      %773 = vmatprep.subr.mxu0 0.0
      %774 = vmatpush1.msra.mxu0 0.0
      %775 = vmatprep.subr.mxu0 0.0
      %776 = vmatpush1.msra.mxu0 0.0
      %777 = vmatprep.subr.mxu0 0.0
      %778 = vmatpush1.msra.mxu0 0.0
      %779 = vmatprep.subr.mxu0 0.0
      %780 = vmatpush1.msra.mxu0 0.0
      %781 = vmatprep.subr.mxu0 0.0
      %782 = vmatpush1.msra.mxu0 0.0
      %783 = vmatprep.subr.mxu0 0.0
      %784 = vmatpush1.msra.mxu0 0.0
      %785 = vmatprep.subr.mxu0 0.0
      %786 = vmatpush1.msra.mxu0 0.0
      %787 = vmatprep.subr.mxu0 0.0
      %788 = vmatpush1.msra.mxu0 0.0
      %789 = vmatprep.subr.mxu0 0.0
      %790 = vmatpush1.msra.mxu0 0.0
      %791 = vmatprep.subr.mxu0 0.0
      %792 = vmatpush1.msra.mxu0 0.0
      %793 = vmatprep.subr.mxu0 0.0
      %794 = vmatpush1.msra.mxu0 0.0
      %795 = vmatprep.subr.mxu0 0.0
      %796 = vmatpush1.msra.mxu0 0.0
      %797 = vmatprep.subr.mxu0 0.0
      %798 = vmatpush1.msra.mxu0 0.0
      %799 = vmatprep.subr.mxu0 0.0
      %800 = vmatpush1.msra.mxu0 0.0
      %801 = vmatprep.subr.mxu0 0.0
      %802 = vmatpush1.msra.mxu0 0.0
      %803 = vmatprep.subr.mxu0 0.0
      %804 = vmatpush1.msra.mxu0 0.0
      %805 = vmatprep.subr.mxu0 0.0
      %806 = vmatpush1.msra.mxu0 0.0
      %807 = vmatprep.subr.mxu0 0.0
      %808 = vmatpush1.msra.mxu0 0.0
      %809 = vmatprep.subr.mxu0 0.0
      %810 = vmatpush1.msra.mxu0 0.0
      %811 = vmatprep.subr.mxu0 0.0
      %812 = vmatpush1.msra.mxu0 0.0
      %813 = vmatprep.subr.mxu0 0.0
      %814 = vmatpush1.msra.mxu0 0.0
      %815 = vmatprep.subr.mxu0 0.0
      %816 = vmatpush1.msra.mxu0 0.0
      %817 = vmatprep.subr.mxu0 0.0
      %818 = vmatpush1.msra.mxu0 0.0
      %819 = vmatprep.subr.mxu0 0.0
      %820 = vmatpush1.msra.mxu0 0.0
      %821 = vmatprep.subr.mxu0 0.0
      %822 = vmatpush1.msra.mxu0 0.0
      %823 = vmatprep.subr.mxu0 0.0
      %824 = vmatpush1.msra.mxu0 0.0
      %825 = vmatprep.subr.mxu0 0.0
      %826 = vmatpush1.msra.mxu0 0.0
      %827 = vmatprep.subr.mxu0 0.0
      %828 = vmatpush1.msra.mxu0 0.0
      %829 = vmatprep.mubr.f32.mxu0 0.0
      %830 = vmatmul.mubr.f32.gmra.mrb[0].mxu0 %v718
      %v831 = vpop.f32.mrb[0].mxu0
      %v832 = vadd.f32 0.0, %v831
      %v833 = vpop.f32.mrb[0].mxu0
      %834 = vmatprep.mubr.f32.mxu0 0.0
      %835 = vmatmul.mubr.f32.gmra.mrb[0].mxu0 %v721
      %v836 = vpop.f32.mrb[0].mxu0
      %v837 = vadd.f32 0.0, %v836
      %v838 = vpop.f32.mrb[0].mxu0
      %839 = vmatprep.mubr.f32.mxu0 0.0
      %840 = vmatmul.mubr.f32.gmra.mrb[0].mxu0 %v724
      %v841 = vpop.f32.mrb[0].mxu0
      %v842 = vadd.f32 0.0, %v841
      %v843 = vpop.f32.mrb[0].mxu0
      %844 = vmatprep.mubr.f32.mxu0 0.0
      %845 = vmatmul.mubr.f32.gmra.mrb[0].mxu0 %v727
      %v846 = vpop.f32.mrb[0].mxu0
      %v847 = vadd.f32 0.0, %v846
      %v848 = vpop.f32.mrb[0].mxu0
      %849 = vmatprep.mubr.f32.mxu0 0.0
      %850 = vmatmul.mubr.f32.gmra.mrb[0].mxu0 %v730
      %v851 = vpop.f32.mrb[0].mxu0
      %v852 = vadd.f32 0.0, %v851
      %v853 = vpop.f32.mrb[0].mxu0
      %854 = vmatprep.mubr.f32.mxu0 0.0
      %855 = vmatmul.mubr.f32.gmra.mrb[0].mxu0 %v733
      %v856 = vpop.f32.mrb[0].mxu0
      %v857 = vadd.f32 0.0, %v856
      %v858 = vpop.f32.mrb[0].mxu0
      %859 = vmatprep.mubr.f32.mxu0 0.0
      %860 = vmatmul.mubr.f32.gmra.mrb[0].mxu0 %v736
      %v861 = vpop.f32.mrb[0].mxu0
      %v862 = vadd.f32 0.0, %v861
      %v863 = vpop.f32.mrb[0].mxu0
      %864 = vmatprep.mubr.f32.mxu0 0.0
      %865 = vmatmul.mubr.f32.gmra.mrb[0].mxu0 %v739
      %v866 = vpop.f32.mrb[0].mxu0
      %v867 = vadd.f32 0.0, %v866
      %v868 = vpop.f32.mrb[0].mxu0
      %869 = vmatprep.mubr.f32.mxu0 0.0
      %870 = vmatmul.mubr.f32.gmra.mrb[0].mxu0 %v742
      %v871 = vpop.f32.mrb[0].mxu0
      %v872 = vadd.f32 0.0, %v871
      %v873 = vpop.f32.mrb[0].mxu0
      %874 = vmatprep.mubr.f32.mxu0 0.0
      %875 = vmatmul.mubr.f32.gmra.mrb[0].mxu0 %v745
      %v876 = vpop.f32.mrb[0].mxu0
      %v877 = vadd.f32 0.0, %v876
      %v878 = vpop.f32.mrb[0].mxu0
      %879 = vmatprep.mubr.f32.mxu0 0.0
      %880 = vmatmul.mubr.f32.gmra.mrb[0].mxu0 %v748
      %v881 = vpop.f32.mrb[0].mxu0
      %v882 = vadd.f32 0.0, %v881
      %v883 = vpop.f32.mrb[0].mxu0
      %884 = vmatprep.mubr.f32.mxu0 0.0
      %885 = vmatmul.mubr.f32.gmra.mrb[0].mxu0 %v751
      %v886 = vpop.f32.mrb[0].mxu0
      %v887 = vadd.f32 0.0, %v886
      %v888 = vpop.f32.mrb[0].mxu0
      %889 = vmatprep.mubr.f32.mxu0 0.0
      %890 = vmatmul.mubr.f32.gmra.mrb[0].mxu0 %v754
      %v891 = vpop.f32.mrb[0].mxu0
      %v892 = vadd.f32 0.0, %v891
      %v893 = vpop.f32.mrb[0].mxu0
      %894 = vmatprep.mubr.f32.mxu0 0.0
      %895 = vmatmul.mubr.f32.gmra.mrb[0].mxu0 %v757
      %v896 = vpop.f32.mrb[0].mxu0
      %v897 = vadd.f32 0.0, %v896
      %v898 = vpop.f32.mrb[0].mxu0
      %899 = vmatprep.mubr.f32.mxu0 0.0
      %900 = vmatmul.mubr.f32.gmra.mrb[0].mxu0 %v760
      %v901 = vpop.f32.mrb[0].mxu0
      %v902 = vadd.f32 0.0, %v901
      %v903 = vpop.f32.mrb[0].mxu0
      %904 = vmatprep.mubr.f32.mxu0 0.0
      %905 = vmatmul.mubr.f32.gmra.mrb[0].mxu0 %v763
      %v906 = vpop.f32.mrb[0].mxu0
      %v907 = vadd.f32 0.0, %v906
      %v908 = vpop.f32.mrb[0].mxu0
      %909 = vdwg.mxu0
      %v910 = vld [vmem:[%s1] sm:$0xff]
      %v911 = vld [vmem:[%s1 + $0x8] sm:$0xff]
      %v912 = vadd.f32 %v832, %v910
      %v913 = vadd.f32 %v837, %v911
      %v914 = vadd.f32 %v842, %v910
      %v915 = vadd.f32 %v847, %v911
      %v916 = vadd.f32 %v852, %v910
      %v917 = vadd.f32 %v857, %v911
      %v918 = vadd.f32 %v862, %v910
      %v919 = vadd.f32 %v867, %v911
      %v920 = vadd.f32 %v872, %v910
      %v921 = vadd.f32 %v877, %v911
      %v922 = vadd.f32 %v882, %v910
      %v923 = vadd.f32 %v887, %v911
      %v924 = vadd.f32 %v892, %v910
      %v925 = vadd.f32 %v897, %v911
      %v926 = vadd.f32 %v902, %v910
      %v927 = vadd.f32 %v907, %v911
      %v928 = vld [vmem:[%s675] sm:$0xff]
      %v930 = vcombine.high %v928, %v928
      %v932 = vunpack.c.l.s4 1966171168
      %v933 = vunpack.c.0.s8 %v932
      %v934 = vlaneseq
      %v935 = vshrl.u32 %v934, 7
      %v936 = vsub.s32 %v933, %v935
      %v937 = vrot.slane %v928, %v936
      %v939 = vunpack.c.l.s4 1966171168
      %v940 = vunpack.c.0.s8 %v939
      %v941 = vlaneseq
      %v942 = vshrl.u32 %v941, 7
      %v943 = vsub.s32 %v940, %v942
      %v944 = vrot.slane %v930, %v943
      %v945 = vcombine.high %v937, %v937
      %v946 = vcombine.high %v944, %v944
      %v948 = vunpack.c.l.s4 1966171168
      %v949 = vunpack.c.0.s8 %v948
      %v950 = vlaneseq
      %v951 = vshrl.u32 %v950, 7
      %v952 = vsub.s32 %v949, %v951
      %v953 = vrot.slane %v937, %v952
      %v955 = vunpack.c.l.s4 1966171168
      %v956 = vunpack.c.0.s8 %v955
      %v957 = vlaneseq
      %v958 = vshrl.u32 %v957, 7
      %v959 = vsub.s32 %v956, %v958
      %v960 = vrot.slane %v944, %v959
      %v962 = vunpack.c.l.s4 1966171168
      %v963 = vunpack.c.0.s8 %v962
      %v964 = vlaneseq
      %v965 = vshrl.u32 %v964, 7
      %v966 = vsub.s32 %v963, %v965
      %v967 = vrot.slane %v945, %v966
      %v969 = vunpack.c.l.s4 1966171168
      %v970 = vunpack.c.0.s8 %v969
      %v971 = vlaneseq
      %v972 = vshrl.u32 %v971, 7
      %v973 = vsub.s32 %v970, %v972
      %v974 = vrot.slane %v946, %v973
      %v975 = vcombine.high %v953, %v953
      %v976 = vcombine.high %v960, %v960
      %v977 = vcombine.high %v967, %v967
      %v978 = vcombine.high %v974, %v974
      %v979 = vlaneseq
      %v980 = vshrl.u32 %v979, 7
      %v981 = vsub.s32 0, %v980
      %v982 = vrot.slane %v953, %v981
      %v983 = vlaneseq
      %v984 = vshrl.u32 %v983, 7
      %v985 = vsub.s32 0, %v984
      %v986 = vrot.slane %v967, %v985
      %v987 = vlaneseq
      %v988 = vshrl.u32 %v987, 7
      %v989 = vsub.s32 0, %v988
      %v990 = vrot.slane %v975, %v989
      %v991 = vlaneseq
      %v992 = vshrl.u32 %v991, 7
      %v993 = vsub.s32 0, %v992
      %v994 = vrot.slane %v977, %v993
      %v995 = vlaneseq
      %v996 = vshrl.u32 %v995, 7
      %v997 = vsub.s32 0, %v996
      %v998 = vrot.slane %v960, %v997
      %v999 = vlaneseq
      %v1000 = vshrl.u32 %v999, 7
      %v1001 = vsub.s32 0, %v1000
      %v1002 = vrot.slane %v974, %v1001
      %v1003 = vlaneseq
      %v1004 = vshrl.u32 %v1003, 7
      %v1005 = vsub.s32 0, %v1004
      %v1006 = vrot.slane %v976, %v1005
      %v1007 = vlaneseq
      %v1008 = vshrl.u32 %v1007, 7
      %v1009 = vsub.s32 0, %v1008
      %v1010 = vrot.slane %v978, %v1009
      %v1019 = vadd.f32 %v912, %v982
      %v1020 = vadd.f32 %v913, %v982
      %v1021 = vadd.f32 %v914, %v986
      %v1022 = vadd.f32 %v915, %v986
      %v1023 = vadd.f32 %v916, %v990
      %v1024 = vadd.f32 %v917, %v990
      %v1025 = vadd.f32 %v918, %v994
      %v1026 = vadd.f32 %v919, %v994
      %v1027 = vadd.f32 %v920, %v998
      %v1028 = vadd.f32 %v921, %v998
      %v1029 = vadd.f32 %v922, %v1002
      %v1030 = vadd.f32 %v923, %v1002
      %v1031 = vadd.f32 %v924, %v1006
      %v1032 = vadd.f32 %v925, %v1006
      %v1033 = vadd.f32 %v926, %v1010
      %v1034 = vadd.f32 %v927, %v1010
      %v1035 = vmax.f32 %v1019, 0.0
      %v1036 = vmax.f32 %v1020, 0.0
      %v1037 = vmax.f32 %v1021, 0.0
      %v1038 = vmax.f32 %v1022, 0.0
      %v1039 = vmax.f32 %v1023, 0.0
      %v1040 = vmax.f32 %v1024, 0.0
      %v1041 = vmax.f32 %v1025, 0.0
      %v1042 = vmax.f32 %v1026, 0.0
      %v1043 = vmax.f32 %v1027, 0.0
      %v1044 = vmax.f32 %v1028, 0.0
      %v1045 = vmax.f32 %v1029, 0.0
      %v1046 = vmax.f32 %v1030, 0.0
      %v1047 = vmax.f32 %v1031, 0.0
      %v1048 = vmax.f32 %v1032, 0.0
      %v1049 = vmax.f32 %v1033, 0.0
      %v1050 = vmax.f32 %v1034, 0.0
      %v1051 = vld [vmem:[%s6] sm:$0xff]
      %v1052 = vld [vmem:[%s6 + $0x8] sm:$0xff]
      %v1053 = vld [vmem:[%s6 + $0x10] sm:$0xff]
      %v1054 = vld [vmem:[%s6 + $0x18] sm:$0xff]
      %v1055 = vld [vmem:[%s6 + $0x20] sm:$0xff]
      %v1056 = vld [vmem:[%s6 + $0x28] sm:$0xff]
      %v1057 = vld [vmem:[%s6 + $0x30] sm:$0xff]
      %v1058 = vld [vmem:[%s6 + $0x38] sm:$0xff]
      %v1059 = vld [vmem:[%s6 + $0x40] sm:$0xff]
      %v1060 = vld [vmem:[%s6 + $0x48] sm:$0xff]
      %v1061 = vld [vmem:[%s6 + $0x50] sm:$0xff]
      %v1062 = vld [vmem:[%s6 + $0x58] sm:$0xff]
      %v1063 = vld [vmem:[%s6 + $0x60] sm:$0xff]
      %v1064 = vld [vmem:[%s6 + $0x68] sm:$0xff]
      %v1065 = vld [vmem:[%s6 + $0x70] sm:$0xff]
      %v1066 = vld [vmem:[%s6 + $0x78] sm:$0xff]
      %v1067 = vld [vmem:[%s7] sm:$0x1]
      %v1069 = vlaneseq
      %v1070 = vshrl.u32 %v1069, 7
      %v1071 = vsub.s32 0, %v1070
      %v1072 = vrot.slane %v1067, %v1071
      %1074 = vmatprep.subr.mxu0 0.0
      %1075 = vmatpush1.msra.mxu0 %v1051
      %1076 = vmatprep.subr.mxu0 0.0
      %1077 = vmatpush1.msra.mxu0 %v1052
      %1078 = vmatprep.subr.mxu0 0.0
      %1079 = vmatpush1.msra.mxu0 %v1053
      %1080 = vmatprep.subr.mxu0 0.0
      %1081 = vmatpush1.msra.mxu0 %v1054
      %1082 = vmatprep.subr.mxu0 0.0
      %1083 = vmatpush1.msra.mxu0 %v1055
      %1084 = vmatprep.subr.mxu0 0.0
      %1085 = vmatpush1.msra.mxu0 %v1056
      %1086 = vmatprep.subr.mxu0 0.0
      %1087 = vmatpush1.msra.mxu0 %v1057
      %1088 = vmatprep.subr.mxu0 0.0
      %1089 = vmatpush1.msra.mxu0 %v1058
      %1090 = vmatprep.subr.mxu0 0.0
      %1091 = vmatpush1.msra.mxu0 %v1059
      %1092 = vmatprep.subr.mxu0 0.0
      %1093 = vmatpush1.msra.mxu0 %v1060
      %1094 = vmatprep.subr.mxu0 0.0
      %1095 = vmatpush1.msra.mxu0 %v1061
      %1096 = vmatprep.subr.mxu0 0.0
      %1097 = vmatpush1.msra.mxu0 %v1062
      %1098 = vmatprep.subr.mxu0 0.0
      %1099 = vmatpush1.msra.mxu0 %v1063
      %1100 = vmatprep.subr.mxu0 0.0
      %1101 = vmatpush1.msra.mxu0 %v1064
      %1102 = vmatprep.subr.mxu0 0.0
      %1103 = vmatpush1.msra.mxu0 %v1065
      %1104 = vmatprep.subr.mxu0 0.0
      %1105 = vmatpush1.msra.mxu0 %v1066
      %1106 = vmatprep.subr.mxu0 0.0
      %1107 = vmatpush1.msra.mxu0 0.0
      %1108 = vmatprep.subr.mxu0 0.0
      %1109 = vmatpush1.msra.mxu0 0.0
      %1110 = vmatprep.subr.mxu0 0.0
      %1111 = vmatpush1.msra.mxu0 0.0
      %1112 = vmatprep.subr.mxu0 0.0
      %1113 = vmatpush1.msra.mxu0 0.0
      %1114 = vmatprep.subr.mxu0 0.0
      %1115 = vmatpush1.msra.mxu0 0.0
      %1116 = vmatprep.subr.mxu0 0.0
      %1117 = vmatpush1.msra.mxu0 0.0
      %1118 = vmatprep.subr.mxu0 0.0
      %1119 = vmatpush1.msra.mxu0 0.0
      %1120 = vmatprep.subr.mxu0 0.0
      %1121 = vmatpush1.msra.mxu0 0.0
      %1122 = vmatprep.subr.mxu0 0.0
      %1123 = vmatpush1.msra.mxu0 0.0
      %1124 = vmatprep.subr.mxu0 0.0
      %1125 = vmatpush1.msra.mxu0 0.0
      %1126 = vmatprep.subr.mxu0 0.0
      %1127 = vmatpush1.msra.mxu0 0.0
      %1128 = vmatprep.subr.mxu0 0.0
      %1129 = vmatpush1.msra.mxu0 0.0
      %1130 = vmatprep.subr.mxu0 0.0
      %1131 = vmatpush1.msra.mxu0 0.0
      %1132 = vmatprep.subr.mxu0 0.0
      %1133 = vmatpush1.msra.mxu0 0.0
      %1134 = vmatprep.subr.mxu0 0.0
      %1135 = vmatpush1.msra.mxu0 0.0
      %1136 = vmatprep.subr.mxu0 0.0
      %1137 = vmatpush1.msra.mxu0 0.0
      %1138 = vmatprep.mubr.f32.mxu0 0.0
      %1139 = vmatmul.mubr.f32.gmra.mrb[0].mxu0 %v1035
      %v1140 = vpop.f32.mrb[0].mxu0
      %v1141 = vadd.f32 %v1072, %v1140
      %v1142 = vpop.f32.mrb[0].mxu0
      %1143 = vmatprep.mubr.f32.mxu0 0.0
      %1144 = vmatmul.mubr.f32.gmra.mrb[0].mxu0 %v1036
      %v1145 = vpop.f32.mrb[0].mxu0
      %v1146 = vadd.f32 %v1072, %v1145
      %v1147 = vpop.f32.mrb[0].mxu0
      %1148 = vmatprep.mubr.f32.mxu0 0.0
      %1149 = vmatmul.mubr.f32.gmra.mrb[0].mxu0 %v1037
      %v1150 = vpop.f32.mrb[0].mxu0
      %v1151 = vadd.f32 %v1072, %v1150
      %v1152 = vpop.f32.mrb[0].mxu0
      %1153 = vmatprep.mubr.f32.mxu0 0.0
      %1154 = vmatmul.mubr.f32.gmra.mrb[0].mxu0 %v1038
      %v1155 = vpop.f32.mrb[0].mxu0
      %v1156 = vadd.f32 %v1072, %v1155
      %v1157 = vpop.f32.mrb[0].mxu0
      %1158 = vmatprep.mubr.f32.mxu0 0.0
      %1159 = vmatmul.mubr.f32.gmra.mrb[0].mxu0 %v1039
      %v1160 = vpop.f32.mrb[0].mxu0
      %v1161 = vadd.f32 %v1072, %v1160
      %v1162 = vpop.f32.mrb[0].mxu0
      %1163 = vmatprep.mubr.f32.mxu0 0.0
      %1164 = vmatmul.mubr.f32.gmra.mrb[0].mxu0 %v1040
      %v1165 = vpop.f32.mrb[0].mxu0
      %v1166 = vadd.f32 %v1072, %v1165
      %v1167 = vpop.f32.mrb[0].mxu0
      %1168 = vmatprep.mubr.f32.mxu0 0.0
      %1169 = vmatmul.mubr.f32.gmra.mrb[0].mxu0 %v1041
      %v1170 = vpop.f32.mrb[0].mxu0
      %v1171 = vadd.f32 %v1072, %v1170
      %v1172 = vpop.f32.mrb[0].mxu0
      %1173 = vmatprep.mubr.f32.mxu0 0.0
      %1174 = vmatmul.mubr.f32.gmra.mrb[0].mxu0 %v1042
      %v1175 = vpop.f32.mrb[0].mxu0
      %v1176 = vadd.f32 %v1072, %v1175
      %v1177 = vpop.f32.mrb[0].mxu0
      %1178 = vmatprep.mubr.f32.mxu0 0.0
      %1179 = vmatmul.mubr.f32.gmra.mrb[0].mxu0 %v1043
      %v1180 = vpop.f32.mrb[0].mxu0
      %v1181 = vadd.f32 %v1072, %v1180
      %v1182 = vpop.f32.mrb[0].mxu0
      %1183 = vmatprep.mubr.f32.mxu0 0.0
      %1184 = vmatmul.mubr.f32.gmra.mrb[0].mxu0 %v1044
      %v1185 = vpop.f32.mrb[0].mxu0
      %v1186 = vadd.f32 %v1072, %v1185
      %v1187 = vpop.f32.mrb[0].mxu0
      %1188 = vmatprep.mubr.f32.mxu0 0.0
      %1189 = vmatmul.mubr.f32.gmra.mrb[0].mxu0 %v1045
      %v1190 = vpop.f32.mrb[0].mxu0
      %v1191 = vadd.f32 %v1072, %v1190
      %v1192 = vpop.f32.mrb[0].mxu0
      %1193 = vmatprep.mubr.f32.mxu0 0.0
      %1194 = vmatmul.mubr.f32.gmra.mrb[0].mxu0 %v1046
      %v1195 = vpop.f32.mrb[0].mxu0
      %v1196 = vadd.f32 %v1072, %v1195
      %v1197 = vpop.f32.mrb[0].mxu0
      %1198 = vmatprep.mubr.f32.mxu0 0.0
      %1199 = vmatmul.mubr.f32.gmra.mrb[0].mxu0 %v1047
      %v1200 = vpop.f32.mrb[0].mxu0
      %v1201 = vadd.f32 %v1072, %v1200
      %v1202 = vpop.f32.mrb[0].mxu0
      %1203 = vmatprep.mubr.f32.mxu0 0.0
      %1204 = vmatmul.mubr.f32.gmra.mrb[0].mxu0 %v1048
      %v1205 = vpop.f32.mrb[0].mxu0
      %v1206 = vadd.f32 %v1072, %v1205
      %v1207 = vpop.f32.mrb[0].mxu0
      %1208 = vmatprep.mubr.f32.mxu0 0.0
      %1209 = vmatmul.mubr.f32.gmra.mrb[0].mxu0 %v1049
      %v1210 = vpop.f32.mrb[0].mxu0
      %v1211 = vadd.f32 %v1072, %v1210
      %v1212 = vpop.f32.mrb[0].mxu0
      %1213 = vmatprep.mubr.f32.mxu0 0.0
      %1214 = vmatmul.mubr.f32.gmra.mrb[0].mxu0 %v1050
      %v1215 = vpop.f32.mrb[0].mxu0
      %v1216 = vadd.f32 %v1072, %v1215
      %v1217 = vpop.f32.mrb[0].mxu0
      %1218 = vdwg.mxu0
      %vm1219 = vcmask 523264
      %1220 = vst.msk [vmem:[%s684] sm:$0xff] %vm1219, %v1141
      %1221 = vst.msk [vmem:[%s684 + $0x8] sm:$0xff] %vm1219, %v1146
      %1222 = vst.msk [vmem:[%s684 + $0x10] sm:$0xff] %vm1219, %v1151
      %1223 = vst.msk [vmem:[%s684 + $0x18] sm:$0xff] %vm1219, %v1156
      %1224 = vst.msk [vmem:[%s684 + $0x20] sm:$0xff] %vm1219, %v1161
      %1225 = vst.msk [vmem:[%s684 + $0x28] sm:$0xff] %vm1219, %v1166
      %1226 = vst.msk [vmem:[%s684 + $0x30] sm:$0xff] %vm1219, %v1171
      %1227 = vst.msk [vmem:[%s684 + $0x38] sm:$0xff] %vm1219, %v1176
      %1228 = vst.msk [vmem:[%s684 + $0x40] sm:$0xff] %vm1219, %v1181
      %1229 = vst.msk [vmem:[%s684 + $0x48] sm:$0xff] %vm1219, %v1186
      %1230 = vst.msk [vmem:[%s684 + $0x50] sm:$0xff] %vm1219, %v1191
      %1231 = vst.msk [vmem:[%s684 + $0x58] sm:$0xff] %vm1219, %v1196
      %1232 = vst.msk [vmem:[%s684 + $0x60] sm:$0xff] %vm1219, %v1201
      %1233 = vst.msk [vmem:[%s684 + $0x68] sm:$0xff] %vm1219, %v1206
      %1234 = vst.msk [vmem:[%s684 + $0x70] sm:$0xff] %vm1219, %v1211
      %1235 = vst.msk [vmem:[%s684 + $0x78] sm:$0xff] %vm1219, %v1216
      %v1236 = vld [vmem:[%s10] sm:$0xff]
      %v1237 = vld [vmem:[%s10 + $0x8] sm:$0xff]
      %v1238 = vld [vmem:[%s10 + $0x10] sm:$0xff]
      %v1239 = vld [vmem:[%s10 + $0x18] sm:$0xff]
      %v1240 = vld [vmem:[%s10 + $0x20] sm:$0xff]
      %v1241 = vld [vmem:[%s10 + $0x28] sm:$0xff]
      %v1242 = vld [vmem:[%s10 + $0x30] sm:$0xff]
      %v1243 = vld [vmem:[%s10 + $0x38] sm:$0xff]
      %v1244 = vld [vmem:[%s11] sm:$0x1]
      %v1246 = vlaneseq
      %v1247 = vshrl.u32 %v1246, 7
      %v1248 = vsub.s32 0, %v1247
      %v1249 = vrot.slane %v1244, %v1248
      %v1252 = vsel %vm1219, %v1141, 0
      %v1255 = vsel %vm1219, %v1146, 0
      %v1258 = vsel %vm1219, %v1151, 0
      %v1261 = vsel %vm1219, %v1156, 0
      %v1264 = vsel %vm1219, %v1161, 0
      %v1267 = vsel %vm1219, %v1166, 0
      %v1270 = vsel %vm1219, %v1171, 0
      %v1273 = vsel %vm1219, %v1176, 0
      %v1276 = vsel %vm1219, %v1181, 0
      %v1279 = vsel %vm1219, %v1186, 0
      %v1282 = vsel %vm1219, %v1191, 0
      %v1285 = vsel %vm1219, %v1196, 0
      %v1288 = vsel %vm1219, %v1201, 0
      %v1291 = vsel %vm1219, %v1206, 0
      %v1294 = vsel %vm1219, %v1211, 0
      %v1297 = vsel %vm1219, %v1216, 0
      %1299 = vmatprep.subr.mxu0 0.0
      %1300 = vmatpush1.msra.mxu0 %v1236
      %1301 = vmatprep.subr.mxu0 0.0
      %1302 = vmatpush1.msra.mxu0 %v1237
      %1303 = vmatprep.subr.mxu0 0.0
      %1304 = vmatpush1.msra.mxu0 %v1238
      %1305 = vmatprep.subr.mxu0 0.0
      %1306 = vmatpush1.msra.mxu0 %v1239
      %1307 = vmatprep.subr.mxu0 0.0
      %1308 = vmatpush1.msra.mxu0 %v1240
      %1309 = vmatprep.subr.mxu0 0.0
      %1310 = vmatpush1.msra.mxu0 %v1241
      %1311 = vmatprep.subr.mxu0 0.0
      %1312 = vmatpush1.msra.mxu0 %v1242
      %1313 = vmatprep.subr.mxu0 0.0
      %1314 = vmatpush1.msra.mxu0 %v1243
      %1315 = vmatprep.subr.mxu0 0.0
      %1316 = vmatpush1.msra.mxu0 0.0
      %1317 = vmatprep.subr.mxu0 0.0
      %1318 = vmatpush1.msra.mxu0 0.0
      %1319 = vmatprep.subr.mxu0 0.0
      %1320 = vmatpush1.msra.mxu0 0.0
      %1321 = vmatprep.subr.mxu0 0.0
      %1322 = vmatpush1.msra.mxu0 0.0
      %1323 = vmatprep.subr.mxu0 0.0
      %1324 = vmatpush1.msra.mxu0 0.0
      %1325 = vmatprep.subr.mxu0 0.0
      %1326 = vmatpush1.msra.mxu0 0.0
      %1327 = vmatprep.subr.mxu0 0.0
      %1328 = vmatpush1.msra.mxu0 0.0
      %1329 = vmatprep.subr.mxu0 0.0
      %1330 = vmatpush1.msra.mxu0 0.0
      %1331 = vmatprep.subr.mxu0 0.0
      %1332 = vmatpush1.msra.mxu0 0.0
      %1333 = vmatprep.subr.mxu0 0.0
      %1334 = vmatpush1.msra.mxu0 0.0
      %1335 = vmatprep.subr.mxu0 0.0
      %1336 = vmatpush1.msra.mxu0 0.0
      %1337 = vmatprep.subr.mxu0 0.0
      %1338 = vmatpush1.msra.mxu0 0.0
      %1339 = vmatprep.subr.mxu0 0.0
      %1340 = vmatpush1.msra.mxu0 0.0
      %1341 = vmatprep.subr.mxu0 0.0
      %1342 = vmatpush1.msra.mxu0 0.0
      %1343 = vmatprep.subr.mxu0 0.0
      %1344 = vmatpush1.msra.mxu0 0.0
      %1345 = vmatprep.subr.mxu0 0.0
      %1346 = vmatpush1.msra.mxu0 0.0
      %1347 = vmatprep.subr.mxu0 0.0
      %1348 = vmatpush1.msra.mxu0 0.0
      %1349 = vmatprep.subr.mxu0 0.0
      %1350 = vmatpush1.msra.mxu0 0.0
      %1351 = vmatprep.subr.mxu0 0.0
      %1352 = vmatpush1.msra.mxu0 0.0
      %1353 = vmatprep.subr.mxu0 0.0
      %1354 = vmatpush1.msra.mxu0 0.0
      %1355 = vmatprep.subr.mxu0 0.0
      %1356 = vmatpush1.msra.mxu0 0.0
      %1357 = vmatprep.subr.mxu0 0.0
      %1358 = vmatpush1.msra.mxu0 0.0
      %1359 = vmatprep.subr.mxu0 0.0
      %1360 = vmatpush1.msra.mxu0 0.0
      %1361 = vmatprep.subr.mxu0 0.0
      %1362 = vmatpush1.msra.mxu0 0.0
      %1363 = vmatprep.mubr.f32.mxu0 0.0
      %1364 = vmatmul.mubr.f32.gmra.mrb[0].mxu0 %v1252
      %v1365 = vpop.f32.mrb[0].mxu0
      %v1366 = vadd.f32 %v1249, %v1365
      %v1367 = vpop.f32.mrb[0].mxu0
      %1368 = vmatprep.mubr.f32.mxu0 0.0
      %1369 = vmatmul.mubr.f32.gmra.mrb[0].mxu0 %v1255
      %v1370 = vpop.f32.mrb[0].mxu0
      %v1371 = vadd.f32 %v1249, %v1370
      %v1372 = vpop.f32.mrb[0].mxu0
      %1373 = vmatprep.mubr.f32.mxu0 0.0
      %1374 = vmatmul.mubr.f32.gmra.mrb[0].mxu0 %v1258
      %v1375 = vpop.f32.mrb[0].mxu0
      %v1376 = vadd.f32 %v1249, %v1375
      %v1377 = vpop.f32.mrb[0].mxu0
      %1378 = vmatprep.mubr.f32.mxu0 0.0
      %1379 = vmatmul.mubr.f32.gmra.mrb[0].mxu0 %v1261
      %v1380 = vpop.f32.mrb[0].mxu0
      %v1381 = vadd.f32 %v1249, %v1380
      %v1382 = vpop.f32.mrb[0].mxu0
      %1383 = vmatprep.mubr.f32.mxu0 0.0
      %1384 = vmatmul.mubr.f32.gmra.mrb[0].mxu0 %v1264
      %v1385 = vpop.f32.mrb[0].mxu0
      %v1386 = vadd.f32 %v1249, %v1385
      %v1387 = vpop.f32.mrb[0].mxu0
      %1388 = vmatprep.mubr.f32.mxu0 0.0
      %1389 = vmatmul.mubr.f32.gmra.mrb[0].mxu0 %v1267
      %v1390 = vpop.f32.mrb[0].mxu0
      %v1391 = vadd.f32 %v1249, %v1390
      %v1392 = vpop.f32.mrb[0].mxu0
      %1393 = vmatprep.mubr.f32.mxu0 0.0
      %1394 = vmatmul.mubr.f32.gmra.mrb[0].mxu0 %v1270
      %v1395 = vpop.f32.mrb[0].mxu0
      %v1396 = vadd.f32 %v1249, %v1395
      %v1397 = vpop.f32.mrb[0].mxu0
      %1398 = vmatprep.mubr.f32.mxu0 0.0
      %1399 = vmatmul.mubr.f32.gmra.mrb[0].mxu0 %v1273
      %v1400 = vpop.f32.mrb[0].mxu0
      %v1401 = vadd.f32 %v1249, %v1400
      %v1402 = vpop.f32.mrb[0].mxu0
      %1403 = vmatprep.mubr.f32.mxu0 0.0
      %1404 = vmatmul.mubr.f32.gmra.mrb[0].mxu0 %v1276
      %v1405 = vpop.f32.mrb[0].mxu0
      %v1406 = vadd.f32 %v1249, %v1405
      %v1407 = vpop.f32.mrb[0].mxu0
      %1408 = vmatprep.mubr.f32.mxu0 0.0
      %1409 = vmatmul.mubr.f32.gmra.mrb[0].mxu0 %v1279
      %v1410 = vpop.f32.mrb[0].mxu0
      %v1411 = vadd.f32 %v1249, %v1410
      %v1412 = vpop.f32.mrb[0].mxu0
      %1413 = vmatprep.mubr.f32.mxu0 0.0
      %1414 = vmatmul.mubr.f32.gmra.mrb[0].mxu0 %v1282
      %v1415 = vpop.f32.mrb[0].mxu0
      %v1416 = vadd.f32 %v1249, %v1415
      %v1417 = vpop.f32.mrb[0].mxu0
      %1418 = vmatprep.mubr.f32.mxu0 0.0
      %1419 = vmatmul.mubr.f32.gmra.mrb[0].mxu0 %v1285
      %v1420 = vpop.f32.mrb[0].mxu0
      %v1421 = vadd.f32 %v1249, %v1420
      %v1422 = vpop.f32.mrb[0].mxu0
      %1423 = vmatprep.mubr.f32.mxu0 0.0
      %1424 = vmatmul.mubr.f32.gmra.mrb[0].mxu0 %v1288
      %v1425 = vpop.f32.mrb[0].mxu0
      %v1426 = vadd.f32 %v1249, %v1425
      %v1427 = vpop.f32.mrb[0].mxu0
      %1428 = vmatprep.mubr.f32.mxu0 0.0
      %1429 = vmatmul.mubr.f32.gmra.mrb[0].mxu0 %v1291
      %v1430 = vpop.f32.mrb[0].mxu0
      %v1431 = vadd.f32 %v1249, %v1430
      %v1432 = vpop.f32.mrb[0].mxu0
      %1433 = vmatprep.mubr.f32.mxu0 0.0
      %1434 = vmatmul.mubr.f32.gmra.mrb[0].mxu0 %v1294
      %v1435 = vpop.f32.mrb[0].mxu0
      %v1436 = vadd.f32 %v1249, %v1435
      %v1437 = vpop.f32.mrb[0].mxu0
      %1438 = vmatprep.mubr.f32.mxu0 0.0
      %1439 = vmatmul.mubr.f32.gmra.mrb[0].mxu0 %v1297
      %v1440 = vpop.f32.mrb[0].mxu0
      %v1441 = vadd.f32 %v1249, %v1440
      %v1442 = vpop.f32.mrb[0].mxu0
      %1443 = vdwg.mxu0
      %v1444 = vmax.f32 %v1366, 0.0
      %v1445 = vmax.f32 %v1371, 0.0
      %v1446 = vmax.f32 %v1376, 0.0
      %v1447 = vmax.f32 %v1381, 0.0
      %v1448 = vmax.f32 %v1386, 0.0
      %v1449 = vmax.f32 %v1391, 0.0
      %v1450 = vmax.f32 %v1396, 0.0
      %v1451 = vmax.f32 %v1401, 0.0
      %v1452 = vmax.f32 %v1406, 0.0
      %v1453 = vmax.f32 %v1411, 0.0
      %v1454 = vmax.f32 %v1416, 0.0
      %v1455 = vmax.f32 %v1421, 0.0
      %v1456 = vmax.f32 %v1426, 0.0
      %v1457 = vmax.f32 %v1431, 0.0
      %v1458 = vmax.f32 %v1436, 0.0
      %v1459 = vmax.f32 %v1441, 0.0
      %v1460 = vld [vmem:[%s12] sm:$0x1]
      %v1462 = vlaneseq
      %v1463 = vshrl.u32 %v1462, 7
      %v1464 = vsub.s32 0, %v1463
      %v1465 = vrot.slane %v1460, %v1464
      %v1467 = vmul.f32 %v1444, %v1465
      %v1468 = vmul.f32 %v1445, %v1465
      %v1469 = vmul.f32 %v1446, %v1465
      %v1470 = vmul.f32 %v1447, %v1465
      %v1471 = vmul.f32 %v1448, %v1465
      %v1472 = vmul.f32 %v1449, %v1465
      %v1473 = vmul.f32 %v1450, %v1465
      %v1474 = vmul.f32 %v1451, %v1465
      %v1475 = vmul.f32 %v1452, %v1465
      %v1476 = vmul.f32 %v1453, %v1465
      %v1477 = vmul.f32 %v1454, %v1465
      %v1478 = vmul.f32 %v1455, %v1465
      %v1479 = vmul.f32 %v1456, %v1465
      %v1480 = vmul.f32 %v1457, %v1465
      %v1481 = vmul.f32 %v1458, %v1465
      %v1482 = vmul.f32 %v1459, %v1465
      %vm1483 = vcmask 261120
      %v1484 = vsel %vm1483, %v1467, 0.0
      %1485 = vadd.xlane.f32.xlu0 %v1484
      %v1486 = vpop.xlane.xlu0 %1485
      %v1487 = vsel %vm1483, %v1468, 0.0
      %1488 = vadd.xlane.f32.xlu0 %v1487
      %v1489 = vpop.xlane.xlu0 %1488
      %v1490 = vsel %vm1483, %v1469, 0.0
      %1491 = vadd.xlane.f32.xlu0 %v1490
      %v1492 = vpop.xlane.xlu0 %1491
      %v1493 = vsel %vm1483, %v1470, 0.0
      %1494 = vadd.xlane.f32.xlu0 %v1493
      %v1495 = vpop.xlane.xlu0 %1494
      %v1496 = vsel %vm1483, %v1471, 0.0
      %1497 = vadd.xlane.f32.xlu0 %v1496
      %v1498 = vpop.xlane.xlu0 %1497
      %v1499 = vsel %vm1483, %v1472, 0.0
      %1500 = vadd.xlane.f32.xlu0 %v1499
      %v1501 = vpop.xlane.xlu0 %1500
      %v1502 = vsel %vm1483, %v1473, 0.0
      %1503 = vadd.xlane.f32.xlu0 %v1502
      %v1504 = vpop.xlane.xlu0 %1503
      %v1505 = vsel %vm1483, %v1474, 0.0
      %1506 = vadd.xlane.f32.xlu0 %v1505
      %v1507 = vpop.xlane.xlu0 %1506
      %v1508 = vsel %vm1483, %v1475, 0.0
      %1509 = vadd.xlane.f32.xlu0 %v1508
      %v1510 = vpop.xlane.xlu0 %1509
      %v1511 = vsel %vm1483, %v1476, 0.0
      %1512 = vadd.xlane.f32.xlu0 %v1511
      %v1513 = vpop.xlane.xlu0 %1512
      %v1514 = vsel %vm1483, %v1477, 0.0
      %1515 = vadd.xlane.f32.xlu0 %v1514
      %v1516 = vpop.xlane.xlu0 %1515
      %v1517 = vsel %vm1483, %v1478, 0.0
      %1518 = vadd.xlane.f32.xlu0 %v1517
      %v1519 = vpop.xlane.xlu0 %1518
      %v1520 = vsel %vm1483, %v1479, 0.0
      %1521 = vadd.xlane.f32.xlu0 %v1520
      %v1522 = vpop.xlane.xlu0 %1521
      %v1523 = vsel %vm1483, %v1480, 0.0
      %1524 = vadd.xlane.f32.xlu0 %v1523
      %v1525 = vpop.xlane.xlu0 %1524
      %v1526 = vsel %vm1483, %v1481, 0.0
      %1527 = vadd.xlane.f32.xlu0 %v1526
      %v1528 = vpop.xlane.xlu0 %1527
      %v1529 = vsel %vm1483, %v1482, 0.0
      %1530 = vadd.xlane.f32.xlu0 %v1529
      %v1531 = vpop.xlane.xlu0 %1530
      %v1532 = vld [vmem:[#allocation2] sm:$0x1]
      %v1534 = vlaneseq
      %v1535 = vshrl.u32 %v1534, 7
      %v1536 = vsub.s32 0, %v1535
      %v1537 = vrot.slane %v1532, %v1536
      %v1539 = vadd.f32 %v1486, %v1537
      %v1540 = vadd.f32 %v1489, %v1537
      %v1541 = vadd.f32 %v1492, %v1537
      %v1542 = vadd.f32 %v1495, %v1537
      %v1543 = vadd.f32 %v1498, %v1537
      %v1544 = vadd.f32 %v1501, %v1537
      %v1545 = vadd.f32 %v1504, %v1537
      %v1546 = vadd.f32 %v1507, %v1537
      %v1547 = vadd.f32 %v1510, %v1537
      %v1548 = vadd.f32 %v1513, %v1537
      %v1549 = vadd.f32 %v1516, %v1537
      %v1550 = vadd.f32 %v1519, %v1537
      %v1551 = vadd.f32 %v1522, %v1537
      %v1552 = vadd.f32 %v1525, %v1537
      %v1553 = vadd.f32 %v1528, %v1537
      %v1554 = vadd.f32 %v1531, %v1537
      %vm1555 = vcmask 7168
      %1556 = vst.msk [vmem:[%s690] sm:$0xff] %vm1555, %v1539
      %1557 = vst.msk [vmem:[%s690 + $0x8] sm:$0xff] %vm1555, %v1540
      %1558 = vst.msk [vmem:[%s690 + $0x10] sm:$0xff] %vm1555, %v1541
      %1559 = vst.msk [vmem:[%s690 + $0x18] sm:$0xff] %vm1555, %v1542
      %1560 = vst.msk [vmem:[%s690 + $0x20] sm:$0xff] %vm1555, %v1543
      %1561 = vst.msk [vmem:[%s690 + $0x28] sm:$0xff] %vm1555, %v1544
      %1562 = vst.msk [vmem:[%s690 + $0x30] sm:$0xff] %vm1555, %v1545
      %1563 = vst.msk [vmem:[%s690 + $0x38] sm:$0xff] %vm1555, %v1546
      %1564 = vst.msk [vmem:[%s690 + $0x40] sm:$0xff] %vm1555, %v1547
      %1565 = vst.msk [vmem:[%s690 + $0x48] sm:$0xff] %vm1555, %v1548
      %1566 = vst.msk [vmem:[%s690 + $0x50] sm:$0xff] %vm1555, %v1549
      %1567 = vst.msk [vmem:[%s690 + $0x58] sm:$0xff] %vm1555, %v1550
      %1568 = vst.msk [vmem:[%s690 + $0x60] sm:$0xff] %vm1555, %v1551
      %1569 = vst.msk [vmem:[%s690 + $0x68] sm:$0xff] %vm1555, %v1552
      %1570 = vst.msk [vmem:[%s690 + $0x70] sm:$0xff] %vm1555, %v1553
      %1571 = vst.msk [vmem:[%s690 + $0x78] sm:$0xff] %vm1555, %v1554
      %v1572 = vld [vmem:[%s3] sm:$0xff]
      %v1573 = vld [vmem:[%s3 + $0x8] sm:$0xff]
      %v1574 = vld [vmem:[%s679] sm:$0xff]
      %v1576 = vcombine.high %v1574, %v1574
      %v1578 = vunpack.c.l.s4 1966171168
      %v1579 = vunpack.c.0.s8 %v1578
      %v1580 = vlaneseq
      %v1581 = vshrl.u32 %v1580, 7
      %v1582 = vsub.s32 %v1579, %v1581
      %v1583 = vrot.slane %v1574, %v1582
      %v1585 = vunpack.c.l.s4 1966171168
      %v1586 = vunpack.c.0.s8 %v1585
      %v1587 = vlaneseq
      %v1588 = vshrl.u32 %v1587, 7
      %v1589 = vsub.s32 %v1586, %v1588
      %v1590 = vrot.slane %v1576, %v1589
      %v1591 = vcombine.high %v1583, %v1583
      %v1592 = vcombine.high %v1590, %v1590
      %v1594 = vunpack.c.l.s4 1966171168
      %v1595 = vunpack.c.0.s8 %v1594
      %v1596 = vlaneseq
      %v1597 = vshrl.u32 %v1596, 7
      %v1598 = vsub.s32 %v1595, %v1597
      %v1599 = vrot.slane %v1583, %v1598
      %v1601 = vunpack.c.l.s4 1966171168
      %v1602 = vunpack.c.0.s8 %v1601
      %v1603 = vlaneseq
      %v1604 = vshrl.u32 %v1603, 7
      %v1605 = vsub.s32 %v1602, %v1604
      %v1606 = vrot.slane %v1590, %v1605
      %v1608 = vunpack.c.l.s4 1966171168
      %v1609 = vunpack.c.0.s8 %v1608
      %v1610 = vlaneseq
      %v1611 = vshrl.u32 %v1610, 7
      %v1612 = vsub.s32 %v1609, %v1611
      %v1613 = vrot.slane %v1591, %v1612
      %v1615 = vunpack.c.l.s4 1966171168
      %v1616 = vunpack.c.0.s8 %v1615
      %v1617 = vlaneseq
      %v1618 = vshrl.u32 %v1617, 7
      %v1619 = vsub.s32 %v1616, %v1618
      %v1620 = vrot.slane %v1592, %v1619
      %v1621 = vcombine.high %v1599, %v1599
      %v1622 = vcombine.high %v1606, %v1606
      %v1623 = vcombine.high %v1613, %v1613
      %v1624 = vcombine.high %v1620, %v1620
      %v1625 = vlaneseq
      %v1626 = vshrl.u32 %v1625, 7
      %v1627 = vsub.s32 0, %v1626
      %v1628 = vrot.slane %v1599, %v1627
      %v1629 = vlaneseq
      %v1630 = vshrl.u32 %v1629, 7
      %v1631 = vsub.s32 0, %v1630
      %v1632 = vrot.slane %v1613, %v1631
      %v1633 = vlaneseq
      %v1634 = vshrl.u32 %v1633, 7
      %v1635 = vsub.s32 0, %v1634
      %v1636 = vrot.slane %v1621, %v1635
      %v1637 = vlaneseq
      %v1638 = vshrl.u32 %v1637, 7
      %v1639 = vsub.s32 0, %v1638
      %v1640 = vrot.slane %v1623, %v1639
      %v1641 = vlaneseq
      %v1642 = vshrl.u32 %v1641, 7
      %v1643 = vsub.s32 0, %v1642
      %v1644 = vrot.slane %v1606, %v1643
      %v1645 = vlaneseq
      %v1646 = vshrl.u32 %v1645, 7
      %v1647 = vsub.s32 0, %v1646
      %v1648 = vrot.slane %v1620, %v1647
      %v1649 = vlaneseq
      %v1650 = vshrl.u32 %v1649, 7
      %v1651 = vsub.s32 0, %v1650
      %v1652 = vrot.slane %v1622, %v1651
      %v1653 = vlaneseq
      %v1654 = vshrl.u32 %v1653, 7
      %v1655 = vsub.s32 0, %v1654
      %v1656 = vrot.slane %v1624, %v1655
      %v1665 = vadd.f32 %v1572, %v1628
      %v1666 = vadd.f32 %v1573, %v1628
      %v1667 = vadd.f32 %v1572, %v1632
      %v1668 = vadd.f32 %v1573, %v1632
      %v1669 = vadd.f32 %v1572, %v1636
      %v1670 = vadd.f32 %v1573, %v1636
      %v1671 = vadd.f32 %v1572, %v1640
      %v1672 = vadd.f32 %v1573, %v1640
      %v1673 = vadd.f32 %v1572, %v1644
      %v1674 = vadd.f32 %v1573, %v1644
      %v1675 = vadd.f32 %v1572, %v1648
      %v1676 = vadd.f32 %v1573, %v1648
      %v1677 = vadd.f32 %v1572, %v1652
      %v1678 = vadd.f32 %v1573, %v1652
      %v1679 = vadd.f32 %v1572, %v1656
      %v1680 = vadd.f32 %v1573, %v1656
      %v1681 = vmax.f32 %v1665, 0.0
      %v1682 = vmax.f32 %v1666, 0.0
      %v1683 = vmax.f32 %v1667, 0.0
      %v1684 = vmax.f32 %v1668, 0.0
      %v1685 = vmax.f32 %v1669, 0.0
      %v1686 = vmax.f32 %v1670, 0.0
      %v1687 = vmax.f32 %v1671, 0.0
      %v1688 = vmax.f32 %v1672, 0.0
      %v1689 = vmax.f32 %v1673, 0.0
      %v1690 = vmax.f32 %v1674, 0.0
      %v1691 = vmax.f32 %v1675, 0.0
      %v1692 = vmax.f32 %v1676, 0.0
      %v1693 = vmax.f32 %v1677, 0.0
      %v1694 = vmax.f32 %v1678, 0.0
      %v1695 = vmax.f32 %v1679, 0.0
      %v1696 = vmax.f32 %v1680, 0.0
      %v1697 = vld [vmem:[%s8] sm:$0xff]
      %v1698 = vld [vmem:[%s8 + $0x8] sm:$0xff]
      %v1699 = vld [vmem:[%s8 + $0x10] sm:$0xff]
      %v1700 = vld [vmem:[%s8 + $0x18] sm:$0xff]
      %v1701 = vld [vmem:[%s8 + $0x20] sm:$0xff]
      %v1702 = vld [vmem:[%s8 + $0x28] sm:$0xff]
      %v1703 = vld [vmem:[%s8 + $0x30] sm:$0xff]
      %v1704 = vld [vmem:[%s8 + $0x38] sm:$0xff]
      %v1705 = vld [vmem:[%s9] sm:$0x1]
      %v1707 = vlaneseq
      %v1708 = vshrl.u32 %v1707, 7
      %v1709 = vsub.s32 0, %v1708
      %v1710 = vrot.slane %v1705, %v1709
      %v1713 = vsel %vm1219, %v1681, 0
      %v1716 = vsel %vm1219, %v1682, 0
      %v1719 = vsel %vm1219, %v1683, 0
      %v1722 = vsel %vm1219, %v1684, 0
      %v1725 = vsel %vm1219, %v1685, 0
      %v1728 = vsel %vm1219, %v1686, 0
      %v1731 = vsel %vm1219, %v1687, 0
      %v1734 = vsel %vm1219, %v1688, 0
      %v1737 = vsel %vm1219, %v1689, 0
      %v1740 = vsel %vm1219, %v1690, 0
      %v1743 = vsel %vm1219, %v1691, 0
      %v1746 = vsel %vm1219, %v1692, 0
      %v1749 = vsel %vm1219, %v1693, 0
      %v1752 = vsel %vm1219, %v1694, 0
      %v1755 = vsel %vm1219, %v1695, 0
      %v1758 = vsel %vm1219, %v1696, 0
      %1760 = vmatprep.subr.mxu0 0.0
      %1761 = vmatpush1.msra.mxu0 %v1697
      %1762 = vmatprep.subr.mxu0 0.0
      %1763 = vmatpush1.msra.mxu0 %v1698
      %1764 = vmatprep.subr.mxu0 0.0
      %1765 = vmatpush1.msra.mxu0 %v1699
      %1766 = vmatprep.subr.mxu0 0.0
      %1767 = vmatpush1.msra.mxu0 %v1700
      %1768 = vmatprep.subr.mxu0 0.0
      %1769 = vmatpush1.msra.mxu0 %v1701
      %1770 = vmatprep.subr.mxu0 0.0
      %1771 = vmatpush1.msra.mxu0 %v1702
      %1772 = vmatprep.subr.mxu0 0.0
      %1773 = vmatpush1.msra.mxu0 %v1703
      %1774 = vmatprep.subr.mxu0 0.0
      %1775 = vmatpush1.msra.mxu0 %v1704
      %1776 = vmatprep.subr.mxu0 0.0
      %1777 = vmatpush1.msra.mxu0 0.0
      %1778 = vmatprep.subr.mxu0 0.0
      %1779 = vmatpush1.msra.mxu0 0.0
      %1780 = vmatprep.subr.mxu0 0.0
      %1781 = vmatpush1.msra.mxu0 0.0
      %1782 = vmatprep.subr.mxu0 0.0
      %1783 = vmatpush1.msra.mxu0 0.0
      %1784 = vmatprep.subr.mxu0 0.0
      %1785 = vmatpush1.msra.mxu0 0.0
      %1786 = vmatprep.subr.mxu0 0.0
      %1787 = vmatpush1.msra.mxu0 0.0
      %1788 = vmatprep.subr.mxu0 0.0
      %1789 = vmatpush1.msra.mxu0 0.0
      %1790 = vmatprep.subr.mxu0 0.0
      %1791 = vmatpush1.msra.mxu0 0.0
      %1792 = vmatprep.subr.mxu0 0.0
      %1793 = vmatpush1.msra.mxu0 0.0
      %1794 = vmatprep.subr.mxu0 0.0
      %1795 = vmatpush1.msra.mxu0 0.0
      %1796 = vmatprep.subr.mxu0 0.0
      %1797 = vmatpush1.msra.mxu0 0.0
      %1798 = vmatprep.subr.mxu0 0.0
      %1799 = vmatpush1.msra.mxu0 0.0
      %1800 = vmatprep.subr.mxu0 0.0
      %1801 = vmatpush1.msra.mxu0 0.0
      %1802 = vmatprep.subr.mxu0 0.0
      %1803 = vmatpush1.msra.mxu0 0.0
      %1804 = vmatprep.subr.mxu0 0.0
      %1805 = vmatpush1.msra.mxu0 0.0
      %1806 = vmatprep.subr.mxu0 0.0
      %1807 = vmatpush1.msra.mxu0 0.0
      %1808 = vmatprep.subr.mxu0 0.0
      %1809 = vmatpush1.msra.mxu0 0.0
      %1810 = vmatprep.subr.mxu0 0.0
      %1811 = vmatpush1.msra.mxu0 0.0
      %1812 = vmatprep.subr.mxu0 0.0
      %1813 = vmatpush1.msra.mxu0 0.0
      %1814 = vmatprep.subr.mxu0 0.0
      %1815 = vmatpush1.msra.mxu0 0.0
      %1816 = vmatprep.subr.mxu0 0.0
      %1817 = vmatpush1.msra.mxu0 0.0
      %1818 = vmatprep.subr.mxu0 0.0
      %1819 = vmatpush1.msra.mxu0 0.0
      %1820 = vmatprep.subr.mxu0 0.0
      %1821 = vmatpush1.msra.mxu0 0.0
      %1822 = vmatprep.subr.mxu0 0.0
      %1823 = vmatpush1.msra.mxu0 0.0
      %1824 = vmatprep.mubr.f32.mxu0 0.0
      %1825 = vmatmul.mubr.f32.gmra.mrb[0].mxu0 %v1713
      %v1826 = vpop.f32.mrb[0].mxu0
      %v1827 = vadd.f32 %v1710, %v1826
      %v1828 = vpop.f32.mrb[0].mxu0
      %1829 = vmatprep.mubr.f32.mxu0 0.0
      %1830 = vmatmul.mubr.f32.gmra.mrb[0].mxu0 %v1716
      %v1831 = vpop.f32.mrb[0].mxu0
      %v1832 = vadd.f32 %v1710, %v1831
      %v1833 = vpop.f32.mrb[0].mxu0
      %1834 = vmatprep.mubr.f32.mxu0 0.0
      %1835 = vmatmul.mubr.f32.gmra.mrb[0].mxu0 %v1719
      %v1836 = vpop.f32.mrb[0].mxu0
      %v1837 = vadd.f32 %v1710, %v1836
      %v1838 = vpop.f32.mrb[0].mxu0
      %1839 = vmatprep.mubr.f32.mxu0 0.0
      %1840 = vmatmul.mubr.f32.gmra.mrb[0].mxu0 %v1722
      %v1841 = vpop.f32.mrb[0].mxu0
      %v1842 = vadd.f32 %v1710, %v1841
      %v1843 = vpop.f32.mrb[0].mxu0
      %1844 = vmatprep.mubr.f32.mxu0 0.0
      %1845 = vmatmul.mubr.f32.gmra.mrb[0].mxu0 %v1725
      %v1846 = vpop.f32.mrb[0].mxu0
      %v1847 = vadd.f32 %v1710, %v1846
      %v1848 = vpop.f32.mrb[0].mxu0
      %1849 = vmatprep.mubr.f32.mxu0 0.0
      %1850 = vmatmul.mubr.f32.gmra.mrb[0].mxu0 %v1728
      %v1851 = vpop.f32.mrb[0].mxu0
      %v1852 = vadd.f32 %v1710, %v1851
      %v1853 = vpop.f32.mrb[0].mxu0
      %1854 = vmatprep.mubr.f32.mxu0 0.0
      %1855 = vmatmul.mubr.f32.gmra.mrb[0].mxu0 %v1731
      %v1856 = vpop.f32.mrb[0].mxu0
      %v1857 = vadd.f32 %v1710, %v1856
      %v1858 = vpop.f32.mrb[0].mxu0
      %1859 = vmatprep.mubr.f32.mxu0 0.0
      %1860 = vmatmul.mubr.f32.gmra.mrb[0].mxu0 %v1734
      %v1861 = vpop.f32.mrb[0].mxu0
      %v1862 = vadd.f32 %v1710, %v1861
      %v1863 = vpop.f32.mrb[0].mxu0
      %1864 = vmatprep.mubr.f32.mxu0 0.0
      %1865 = vmatmul.mubr.f32.gmra.mrb[0].mxu0 %v1737
      %v1866 = vpop.f32.mrb[0].mxu0
      %v1867 = vadd.f32 %v1710, %v1866
      %v1868 = vpop.f32.mrb[0].mxu0
      %1869 = vmatprep.mubr.f32.mxu0 0.0
      %1870 = vmatmul.mubr.f32.gmra.mrb[0].mxu0 %v1740
      %v1871 = vpop.f32.mrb[0].mxu0
      %v1872 = vadd.f32 %v1710, %v1871
      %v1873 = vpop.f32.mrb[0].mxu0
      %1874 = vmatprep.mubr.f32.mxu0 0.0
      %1875 = vmatmul.mubr.f32.gmra.mrb[0].mxu0 %v1743
      %v1876 = vpop.f32.mrb[0].mxu0
      %v1877 = vadd.f32 %v1710, %v1876
      %v1878 = vpop.f32.mrb[0].mxu0
      %1879 = vmatprep.mubr.f32.mxu0 0.0
      %1880 = vmatmul.mubr.f32.gmra.mrb[0].mxu0 %v1746
      %v1881 = vpop.f32.mrb[0].mxu0
      %v1882 = vadd.f32 %v1710, %v1881
      %v1883 = vpop.f32.mrb[0].mxu0
      %1884 = vmatprep.mubr.f32.mxu0 0.0
      %1885 = vmatmul.mubr.f32.gmra.mrb[0].mxu0 %v1749
      %v1886 = vpop.f32.mrb[0].mxu0
      %v1887 = vadd.f32 %v1710, %v1886
      %v1888 = vpop.f32.mrb[0].mxu0
      %1889 = vmatprep.mubr.f32.mxu0 0.0
      %1890 = vmatmul.mubr.f32.gmra.mrb[0].mxu0 %v1752
      %v1891 = vpop.f32.mrb[0].mxu0
      %v1892 = vadd.f32 %v1710, %v1891
      %v1893 = vpop.f32.mrb[0].mxu0
      %1894 = vmatprep.mubr.f32.mxu0 0.0
      %1895 = vmatmul.mubr.f32.gmra.mrb[0].mxu0 %v1755
      %v1896 = vpop.f32.mrb[0].mxu0
      %v1897 = vadd.f32 %v1710, %v1896
      %v1898 = vpop.f32.mrb[0].mxu0
      %1899 = vmatprep.mubr.f32.mxu0 0.0
      %1900 = vmatmul.mubr.f32.gmra.mrb[0].mxu0 %v1758
      %v1901 = vpop.f32.mrb[0].mxu0
      %v1902 = vadd.f32 %v1710, %v1901
      %v1903 = vpop.f32.mrb[0].mxu0
      %1904 = vdwg.mxu0
      %v1905 = vld [vmem:[%s14] sm:$0xff]
      %v1906 = vld [vmem:[%s14 + $0x8] sm:$0xff]
      %v1907 = vld [vmem:[%s14 + $0x10] sm:$0xff]
      %v1908 = vld [vmem:[%s14 + $0x18] sm:$0xff]
      %v1909 = vld [vmem:[%s15] sm:$0x1]
      %v1911 = vlaneseq
      %v1912 = vshrl.u32 %v1911, 7
      %v1913 = vsub.s32 0, %v1912
      %v1914 = vrot.slane %v1909, %v1913
      %v1917 = vsel %vm1483, %v1827, 0
      %v1920 = vsel %vm1483, %v1832, 0
      %v1923 = vsel %vm1483, %v1837, 0
      %v1926 = vsel %vm1483, %v1842, 0
      %v1929 = vsel %vm1483, %v1847, 0
      %v1932 = vsel %vm1483, %v1852, 0
      %v1935 = vsel %vm1483, %v1857, 0
      %v1938 = vsel %vm1483, %v1862, 0
      %v1941 = vsel %vm1483, %v1867, 0
      %v1944 = vsel %vm1483, %v1872, 0
      %v1947 = vsel %vm1483, %v1877, 0
      %v1950 = vsel %vm1483, %v1882, 0
      %v1953 = vsel %vm1483, %v1887, 0
      %v1956 = vsel %vm1483, %v1892, 0
      %v1959 = vsel %vm1483, %v1897, 0
      %v1962 = vsel %vm1483, %v1902, 0
      %1964 = vmatprep.subr.mxu0 0.0
      %1965 = vmatpush1.msra.mxu0 %v1905
      %1966 = vmatprep.subr.mxu0 0.0
      %1967 = vmatpush1.msra.mxu0 %v1906
      %1968 = vmatprep.subr.mxu0 0.0
      %1969 = vmatpush1.msra.mxu0 %v1907
      %1970 = vmatprep.subr.mxu0 0.0
      %1971 = vmatpush1.msra.mxu0 %v1908
      %1972 = vmatprep.subr.mxu0 0.0
      %1973 = vmatpush1.msra.mxu0 0.0
      %1974 = vmatprep.subr.mxu0 0.0
      %1975 = vmatpush1.msra.mxu0 0.0
      %1976 = vmatprep.subr.mxu0 0.0
      %1977 = vmatpush1.msra.mxu0 0.0
      %1978 = vmatprep.subr.mxu0 0.0
      %1979 = vmatpush1.msra.mxu0 0.0
      %1980 = vmatprep.subr.mxu0 0.0
      %1981 = vmatpush1.msra.mxu0 0.0
      %1982 = vmatprep.subr.mxu0 0.0
      %1983 = vmatpush1.msra.mxu0 0.0
      %1984 = vmatprep.subr.mxu0 0.0
      %1985 = vmatpush1.msra.mxu0 0.0
      %1986 = vmatprep.subr.mxu0 0.0
      %1987 = vmatpush1.msra.mxu0 0.0
      %1988 = vmatprep.subr.mxu0 0.0
      %1989 = vmatpush1.msra.mxu0 0.0
      %1990 = vmatprep.subr.mxu0 0.0
      %1991 = vmatpush1.msra.mxu0 0.0
      %1992 = vmatprep.subr.mxu0 0.0
      %1993 = vmatpush1.msra.mxu0 0.0
      %1994 = vmatprep.subr.mxu0 0.0
      %1995 = vmatpush1.msra.mxu0 0.0
      %1996 = vmatprep.subr.mxu0 0.0
      %1997 = vmatpush1.msra.mxu0 0.0
      %1998 = vmatprep.subr.mxu0 0.0
      %1999 = vmatpush1.msra.mxu0 0.0
      %2000 = vmatprep.subr.mxu0 0.0
      %2001 = vmatpush1.msra.mxu0 0.0
      %2002 = vmatprep.subr.mxu0 0.0
      %2003 = vmatpush1.msra.mxu0 0.0
      %2004 = vmatprep.subr.mxu0 0.0
      %2005 = vmatpush1.msra.mxu0 0.0
      %2006 = vmatprep.subr.mxu0 0.0
      %2007 = vmatpush1.msra.mxu0 0.0
      %2008 = vmatprep.subr.mxu0 0.0
      %2009 = vmatpush1.msra.mxu0 0.0
      %2010 = vmatprep.subr.mxu0 0.0
      %2011 = vmatpush1.msra.mxu0 0.0
      %2012 = vmatprep.subr.mxu0 0.0
      %2013 = vmatpush1.msra.mxu0 0.0
      %2014 = vmatprep.subr.mxu0 0.0
      %2015 = vmatpush1.msra.mxu0 0.0
      %2016 = vmatprep.subr.mxu0 0.0
      %2017 = vmatpush1.msra.mxu0 0.0
      %2018 = vmatprep.subr.mxu0 0.0
      %2019 = vmatpush1.msra.mxu0 0.0
      %2020 = vmatprep.subr.mxu0 0.0
      %2021 = vmatpush1.msra.mxu0 0.0
      %2022 = vmatprep.subr.mxu0 0.0
      %2023 = vmatpush1.msra.mxu0 0.0
      %2024 = vmatprep.subr.mxu0 0.0
      %2025 = vmatpush1.msra.mxu0 0.0
      %2026 = vmatprep.subr.mxu0 0.0
      %2027 = vmatpush1.msra.mxu0 0.0
      %2028 = vmatprep.mubr.f32.mxu0 0.0
      %2029 = vmatmul.mubr.f32.gmra.mrb[0].mxu0 %v1917
      %v2030 = vpop.f32.mrb[0].mxu0
      %v2031 = vadd.f32 %v1914, %v2030
      %v2032 = vpop.f32.mrb[0].mxu0
      %2033 = vmatprep.mubr.f32.mxu0 0.0
      %2034 = vmatmul.mubr.f32.gmra.mrb[0].mxu0 %v1920
      %v2035 = vpop.f32.mrb[0].mxu0
      %v2036 = vadd.f32 %v1914, %v2035
      %v2037 = vpop.f32.mrb[0].mxu0
      %2038 = vmatprep.mubr.f32.mxu0 0.0
      %2039 = vmatmul.mubr.f32.gmra.mrb[0].mxu0 %v1923
      %v2040 = vpop.f32.mrb[0].mxu0
      %v2041 = vadd.f32 %v1914, %v2040
      %v2042 = vpop.f32.mrb[0].mxu0
      %2043 = vmatprep.mubr.f32.mxu0 0.0
      %2044 = vmatmul.mubr.f32.gmra.mrb[0].mxu0 %v1926
      %v2045 = vpop.f32.mrb[0].mxu0
      %v2046 = vadd.f32 %v1914, %v2045
      %v2047 = vpop.f32.mrb[0].mxu0
      %2048 = vmatprep.mubr.f32.mxu0 0.0
      %2049 = vmatmul.mubr.f32.gmra.mrb[0].mxu0 %v1929
      %v2050 = vpop.f32.mrb[0].mxu0
      %v2051 = vadd.f32 %v1914, %v2050
      %v2052 = vpop.f32.mrb[0].mxu0
      %2053 = vmatprep.mubr.f32.mxu0 0.0
      %2054 = vmatmul.mubr.f32.gmra.mrb[0].mxu0 %v1932
      %v2055 = vpop.f32.mrb[0].mxu0
      %v2056 = vadd.f32 %v1914, %v2055
      %v2057 = vpop.f32.mrb[0].mxu0
      %2058 = vmatprep.mubr.f32.mxu0 0.0
      %2059 = vmatmul.mubr.f32.gmra.mrb[0].mxu0 %v1935
      %v2060 = vpop.f32.mrb[0].mxu0
      %v2061 = vadd.f32 %v1914, %v2060
      %v2062 = vpop.f32.mrb[0].mxu0
      %2063 = vmatprep.mubr.f32.mxu0 0.0
      %2064 = vmatmul.mubr.f32.gmra.mrb[0].mxu0 %v1938
      %v2065 = vpop.f32.mrb[0].mxu0
      %v2066 = vadd.f32 %v1914, %v2065
      %v2067 = vpop.f32.mrb[0].mxu0
      %2068 = vmatprep.mubr.f32.mxu0 0.0
      %2069 = vmatmul.mubr.f32.gmra.mrb[0].mxu0 %v1941
      %v2070 = vpop.f32.mrb[0].mxu0
      %v2071 = vadd.f32 %v1914, %v2070
      %v2072 = vpop.f32.mrb[0].mxu0
      %2073 = vmatprep.mubr.f32.mxu0 0.0
      %2074 = vmatmul.mubr.f32.gmra.mrb[0].mxu0 %v1944
      %v2075 = vpop.f32.mrb[0].mxu0
      %v2076 = vadd.f32 %v1914, %v2075
      %v2077 = vpop.f32.mrb[0].mxu0
      %2078 = vmatprep.mubr.f32.mxu0 0.0
      %2079 = vmatmul.mubr.f32.gmra.mrb[0].mxu0 %v1947
      %v2080 = vpop.f32.mrb[0].mxu0
      %v2081 = vadd.f32 %v1914, %v2080
      %v2082 = vpop.f32.mrb[0].mxu0
      %2083 = vmatprep.mubr.f32.mxu0 0.0
      %2084 = vmatmul.mubr.f32.gmra.mrb[0].mxu0 %v1950
      %v2085 = vpop.f32.mrb[0].mxu0
      %v2086 = vadd.f32 %v1914, %v2085
      %v2087 = vpop.f32.mrb[0].mxu0
      %2088 = vmatprep.mubr.f32.mxu0 0.0
      %2089 = vmatmul.mubr.f32.gmra.mrb[0].mxu0 %v1953
      %v2090 = vpop.f32.mrb[0].mxu0
      %v2091 = vadd.f32 %v1914, %v2090
      %v2092 = vpop.f32.mrb[0].mxu0
      %2093 = vmatprep.mubr.f32.mxu0 0.0
      %2094 = vmatmul.mubr.f32.gmra.mrb[0].mxu0 %v1956
      %v2095 = vpop.f32.mrb[0].mxu0
      %v2096 = vadd.f32 %v1914, %v2095
      %v2097 = vpop.f32.mrb[0].mxu0
      %2098 = vmatprep.mubr.f32.mxu0 0.0
      %2099 = vmatmul.mubr.f32.gmra.mrb[0].mxu0 %v1959
      %v2100 = vpop.f32.mrb[0].mxu0
      %v2101 = vadd.f32 %v1914, %v2100
      %v2102 = vpop.f32.mrb[0].mxu0
      %2103 = vmatprep.mubr.f32.mxu0 0.0
      %2104 = vmatmul.mubr.f32.gmra.mrb[0].mxu0 %v1962
      %v2105 = vpop.f32.mrb[0].mxu0
      %v2106 = vadd.f32 %v1914, %v2105
      %v2107 = vpop.f32.mrb[0].mxu0
      %2108 = vdwg.mxu0
      %v2109 = vmax.f32 %v2031, 0.0
      %v2110 = vmax.f32 %v2036, 0.0
      %v2111 = vmax.f32 %v2041, 0.0
      %v2112 = vmax.f32 %v2046, 0.0
      %v2113 = vmax.f32 %v2051, 0.0
      %v2114 = vmax.f32 %v2056, 0.0
      %v2115 = vmax.f32 %v2061, 0.0
      %v2116 = vmax.f32 %v2066, 0.0
      %v2117 = vmax.f32 %v2071, 0.0
      %v2118 = vmax.f32 %v2076, 0.0
      %v2119 = vmax.f32 %v2081, 0.0
      %v2120 = vmax.f32 %v2086, 0.0
      %v2121 = vmax.f32 %v2091, 0.0
      %v2122 = vmax.f32 %v2096, 0.0
      %v2123 = vmax.f32 %v2101, 0.0
      %v2124 = vmax.f32 %v2106, 0.0
      %v2125 = vld [vmem:[%s16] sm:$0x1]
      %v2127 = vlaneseq
      %v2128 = vshrl.u32 %v2127, 7
      %v2129 = vsub.s32 0, %v2128
      %v2130 = vrot.slane %v2125, %v2129
      %v2132 = vmul.f32 %v2109, %v2130
      %v2133 = vmul.f32 %v2110, %v2130
      %v2134 = vmul.f32 %v2111, %v2130
      %v2135 = vmul.f32 %v2112, %v2130
      %v2136 = vmul.f32 %v2113, %v2130
      %v2137 = vmul.f32 %v2114, %v2130
      %v2138 = vmul.f32 %v2115, %v2130
      %v2139 = vmul.f32 %v2116, %v2130
      %v2140 = vmul.f32 %v2117, %v2130
      %v2141 = vmul.f32 %v2118, %v2130
      %v2142 = vmul.f32 %v2119, %v2130
      %v2143 = vmul.f32 %v2120, %v2130
      %v2144 = vmul.f32 %v2121, %v2130
      %v2145 = vmul.f32 %v2122, %v2130
      %v2146 = vmul.f32 %v2123, %v2130
      %v2147 = vmul.f32 %v2124, %v2130
      %v2148 = vsel %vm1483, %v2132, 0.0
      %2149 = vadd.xlane.f32.xlu0 %v2148
      %v2150 = vpop.xlane.xlu0 %2149
      %v2151 = vsel %vm1483, %v2133, 0.0
      %2152 = vadd.xlane.f32.xlu0 %v2151
      %v2153 = vpop.xlane.xlu0 %2152
      %v2154 = vsel %vm1483, %v2134, 0.0
      %2155 = vadd.xlane.f32.xlu0 %v2154
      %v2156 = vpop.xlane.xlu0 %2155
      %v2157 = vsel %vm1483, %v2135, 0.0
      %2158 = vadd.xlane.f32.xlu0 %v2157
      %v2159 = vpop.xlane.xlu0 %2158
      %v2160 = vsel %vm1483, %v2136, 0.0
      %2161 = vadd.xlane.f32.xlu0 %v2160
      %v2162 = vpop.xlane.xlu0 %2161
      %v2163 = vsel %vm1483, %v2137, 0.0
      %2164 = vadd.xlane.f32.xlu0 %v2163
      %v2165 = vpop.xlane.xlu0 %2164
      %v2166 = vsel %vm1483, %v2138, 0.0
      %2167 = vadd.xlane.f32.xlu0 %v2166
      %v2168 = vpop.xlane.xlu0 %2167
      %v2169 = vsel %vm1483, %v2139, 0.0
      %2170 = vadd.xlane.f32.xlu0 %v2169
      %v2171 = vpop.xlane.xlu0 %2170
      %v2172 = vsel %vm1483, %v2140, 0.0
      %2173 = vadd.xlane.f32.xlu0 %v2172
      %v2174 = vpop.xlane.xlu0 %2173
      %v2175 = vsel %vm1483, %v2141, 0.0
      %2176 = vadd.xlane.f32.xlu0 %v2175
      %v2177 = vpop.xlane.xlu0 %2176
      %v2178 = vsel %vm1483, %v2142, 0.0
      %2179 = vadd.xlane.f32.xlu0 %v2178
      %v2180 = vpop.xlane.xlu0 %2179
      %v2181 = vsel %vm1483, %v2143, 0.0
      %2182 = vadd.xlane.f32.xlu0 %v2181
      %v2183 = vpop.xlane.xlu0 %2182
      %v2184 = vsel %vm1483, %v2144, 0.0
      %2185 = vadd.xlane.f32.xlu0 %v2184
      %v2186 = vpop.xlane.xlu0 %2185
      %v2187 = vsel %vm1483, %v2145, 0.0
      %2188 = vadd.xlane.f32.xlu0 %v2187
      %v2189 = vpop.xlane.xlu0 %2188
      %v2190 = vsel %vm1483, %v2146, 0.0
      %2191 = vadd.xlane.f32.xlu0 %v2190
      %v2192 = vpop.xlane.xlu0 %2191
      %v2193 = vsel %vm1483, %v2147, 0.0
      %2194 = vadd.xlane.f32.xlu0 %v2193
      %v2195 = vpop.xlane.xlu0 %2194
      %v2196 = vld [vmem:[#allocation3] sm:$0x1]
      %v2198 = vlaneseq
      %v2199 = vshrl.u32 %v2198, 7
      %v2200 = vsub.s32 0, %v2199
      %v2201 = vrot.slane %v2196, %v2200
      %v2203 = vadd.f32 %v2150, %v2201
      %v2204 = vadd.f32 %v2153, %v2201
      %v2205 = vadd.f32 %v2156, %v2201
      %v2206 = vadd.f32 %v2159, %v2201
      %v2207 = vadd.f32 %v2162, %v2201
      %v2208 = vadd.f32 %v2165, %v2201
      %v2209 = vadd.f32 %v2168, %v2201
      %v2210 = vadd.f32 %v2171, %v2201
      %v2211 = vadd.f32 %v2174, %v2201
      %v2212 = vadd.f32 %v2177, %v2201
      %v2213 = vadd.f32 %v2180, %v2201
      %v2214 = vadd.f32 %v2183, %v2201
      %v2215 = vadd.f32 %v2186, %v2201
      %v2216 = vadd.f32 %v2189, %v2201
      %v2217 = vadd.f32 %v2192, %v2201
      %v2218 = vadd.f32 %v2195, %v2201
      %2219 = vst.msk [vmem:[%s696] sm:$0xff] %vm1555, %v2203
      %2220 = vst.msk [vmem:[%s696 + $0x8] sm:$0xff] %vm1555, %v2204
      %2221 = vst.msk [vmem:[%s696 + $0x10] sm:$0xff] %vm1555, %v2205
      %2222 = vst.msk [vmem:[%s696 + $0x18] sm:$0xff] %vm1555, %v2206
      %2223 = vst.msk [vmem:[%s696 + $0x20] sm:$0xff] %vm1555, %v2207
      %2224 = vst.msk [vmem:[%s696 + $0x28] sm:$0xff] %vm1555, %v2208
      %2225 = vst.msk [vmem:[%s696 + $0x30] sm:$0xff] %vm1555, %v2209
      %2226 = vst.msk [vmem:[%s696 + $0x38] sm:$0xff] %vm1555, %v2210
      %2227 = vst.msk [vmem:[%s696 + $0x40] sm:$0xff] %vm1555, %v2211
      %2228 = vst.msk [vmem:[%s696 + $0x48] sm:$0xff] %vm1555, %v2212
      %2229 = vst.msk [vmem:[%s696 + $0x50] sm:$0xff] %vm1555, %v2213
      %2230 = vst.msk [vmem:[%s696 + $0x58] sm:$0xff] %vm1555, %v2214
      %2231 = vst.msk [vmem:[%s696 + $0x60] sm:$0xff] %vm1555, %v2215
      %2232 = vst.msk [vmem:[%s696 + $0x68] sm:$0xff] %vm1555, %v2216
      %2233 = vst.msk [vmem:[%s696 + $0x70] sm:$0xff] %vm1555, %v2217
      %2234 = vst.msk [vmem:[%s696 + $0x78] sm:$0xff] %vm1555, %v2218
      %s2235 = smul.u32 16, %s36
      %p2236 = scmp.lt.s32.totalorder %s2235, 31
      %s2237 = scalar_select %p2236, %s2235, 31
      %s2238 = smul.addr %s2237, 8
      %s2239 = scalar_lea.vmem %s18, %s2238
      %s2240 = smul.u32 16, %s36
      %p2241 = scmp.lt.s32.totalorder %s2240, 31
      %s2242 = scalar_select %p2241, %s2240, 31
      %s2243 = smul.addr %s2242, 8
      %s2244 = scalar_lea.vmem %s19, %s2243
      %s2245 = smul.u32 16, %s36
      %p2246 = scmp.lt.s32.totalorder %s2245, 31
      %s2247 = scalar_select %p2246, %s2245, 31
      %s2248 = smul.addr %s2247, 8
      %s2249 = scalar_lea.vmem %s20, %s2248
      // Predicated region
      $region93: #{grnn_forward.2} parent=91 // pred_check
        %p2250 = pneg %p447
      $region94: #{grnn_forward.2} parent=91 // pred_check_branch
        %2252 = sbr.rel (%p2250) target = $region96
      $region95: #{grnn_forward.2} parent=91 // pred_region
        %s2253 = smul.u32 16, %s36
      $region96: #{grnn_forward.2} parent=91 // pred_fallthru
        _
      // Predicated region
      $region97: #{grnn_forward.2} parent=91 // pred_check
        %p2254 = pneg %p473
      $region98: #{grnn_forward.2} parent=91 // pred_check_branch
        %2256 = sbr.rel (%p2254) target = $region100
      $region99: #{grnn_forward.2} parent=91 // pred_region
        %s2257 = smul.u32 16, %s36
      $region100: #{grnn_forward.2} parent=91 // pred_fallthru
        _
      // Predicated region
      $region101: #{grnn_forward.2} parent=91 // pred_check
        %p2258 = pneg %p499
      $region102: #{grnn_forward.2} parent=91 // pred_check_branch
        %2260 = sbr.rel (%p2258) target = $region104
      $region103: #{grnn_forward.2} parent=91 // pred_region
        %s2261 = smul.u32 16, %s36
      $region104: #{grnn_forward.2} parent=91 // pred_fallthru
        _
    $region92: #{grnn_forward.2} parent=5 // pred_fallthru
      _
    %p2262 = scmp.le.s32.totalorder 2, %s31
    // Predicated region
    $region105: #{grnn_forward.2} parent=5 // pred_check
      %p2263 = pneg %p2262
    $region106: #{grnn_forward.2} parent=5 // pred_check_branch
      %2265 = sbr.rel (%p2263) target = $region108
    $region107: #{grnn_forward.2} parent=5 // pred_region
      %s2266 = ssub.s32 %s31, 2
      // Predicated region
      $region109: #{grnn_forward.2} parent=107 // pred_check
        %p2267 = pneg %p453
      $region110: #{grnn_forward.2} parent=107 // pred_check_branch
        %2269 = sbr.rel (%p2267) target = $region112
      $region111: #{grnn_forward.2} parent=107 // pred_region
        %s2270 = smul.u32 16, %s37
        %p2271 = scmp.lt.s32.totalorder %s2270, 31
        %s2272 = scalar_select %p2271, %s2270, 31
        %s2273 = smul.addr %s2272, 8
        %s2274 = scalar_lea.vmem %s18, %s2273
      $region112: #{grnn_forward.2} parent=107 // pred_fallthru
        _
      // Predicated region
      $region113: #{grnn_forward.2} parent=107 // pred_check
        %p2275 = pneg %p479
      $region114: #{grnn_forward.2} parent=107 // pred_check_branch
        %2277 = sbr.rel (%p2275) target = $region116
      $region115: #{grnn_forward.2} parent=107 // pred_region
        %s2278 = smul.u32 16, %s37
        %p2279 = scmp.lt.s32.totalorder %s2278, 31
        %s2280 = scalar_select %p2279, %s2278, 31
        %s2281 = smul.addr %s2280, 8
        %s2282 = scalar_lea.vmem %s19, %s2281
      $region116: #{grnn_forward.2} parent=107 // pred_fallthru
        _
      // Predicated region
      $region117: #{grnn_forward.2} parent=107 // pred_check
        %p2283 = pneg %p505
      $region118: #{grnn_forward.2} parent=107 // pred_check_branch
        %2285 = sbr.rel (%p2283) target = $region120
      $region119: #{grnn_forward.2} parent=107 // pred_region
        %s2286 = smul.u32 16, %s37
        %p2287 = scmp.lt.s32.totalorder %s2286, 31
        %s2288 = scalar_select %p2287, %s2286, 31
        %s2289 = smul.addr %s2288, 8
        %s2290 = scalar_lea.vmem %s20, %s2289
      $region120: #{grnn_forward.2} parent=107 // pred_fallthru
        _
    $region108: #{grnn_forward.2} parent=5 // pred_fallthru
      _
  $region6: #{grnn_forward.2} parent=0 // loop_footer
    %s35 = sadd.s32 1, %s31
  $region7: #{grnn_forward.2} parent=0 // loop_footer_branch
    %30 = sbr.rel target = $region3
  $region8: #{grnn_forward.2} parent=0 // loop_exit
    _

</llo_original>
